<compile_context>
chip_gen: v5e
topology: v5e:2x2
jax: 0.10.0
libtpu: 0.0.40
codegen_flags: <defaults>
</compile_context>

<pallas_src>
import numpy as np
import jax
import jax.numpy as jnp
from jax import lax
from jax.experimental import pallas as pl
from jax.experimental.pallas import tpu as pltpu


# -----------------------------------------------------------------------------
# Static config helpers
# -----------------------------------------------------------------------------
def _grid_dims(grid_config):
    X = int(round((grid_config['x'][1] - grid_config['x'][0]) / grid_config['x'][2]))
    Y = int(round((grid_config['y'][1] - grid_config['y'][0]) / grid_config['y'][2]))
    Z = int(round((grid_config['z'][1] - grid_config['z'][0]) / grid_config['z'][2]))
    num_bins = int((grid_config['depth'][1] - grid_config['depth'][0])
                   // grid_config['depth'][2])
    depth_min = float(grid_config['depth'][0])
    bin_size = (float(grid_config['depth'][1]) - depth_min) / num_bins
    return X, Y, Z, num_bins, depth_min, bin_size


def _round_up(a, m):
    return ((a + m - 1) // m) * m


def _is_v7():
    try:
        return "v7" in jax.devices()[0].device_kind.lower()
    except Exception:
        return False


def _pick_voxel_tile(NV, DH):
    # Lane-aligned (multiple of 256 for MXU-friendly N).  Capped both by a
    # per-generation ceiling and by the (D*H, NVT) f32 matmul intermediate.
    v7 = _is_v7()
    cap = 1024 if v7 else 2048
    inter_budget = (8 << 20) if v7 else (16 << 20)
    by_inter = (inter_budget // max(4 * _round_up(DH, 8), 1)) // 256 * 256
    nvt = min(cap, max(by_inter, 256), _round_up(max(int(NV), 1), 256))
    return max(256, (nvt // 256) * 256)


def _vmem_limit_bytes(D, H, W, NVT, T, feat_itemsize):
    # explicit footprint estimate (+ headroom) instead of blindly asking for max
    def rup(a, m):
        return ((a + m - 1) // m) * m
    DH, f32 = D * H, 4
    feat_blk = 2 * rup(DH, 8) * rup(W, 128) * feat_itemsize   # double-buffered input
    vox_blk = 2 * 8 * NVT * f32
    out_blk = 2 * 8 * NVT * f32
    scratch = 2 * rup(T, 8) * NVT * f32                       # acc + cnt (2-D, no 8x pad)
    temps = (rup(DH, 8) + rup(D, 8) + rup(H, 8) + rup(W, 8) + 64) * NVT * f32
    est = feat_blk + vox_blk + out_blk + scratch + temps
    budget = (48 << 20) if _is_v7() else (100 << 20)
    return int(min(budget, max(2 * est + (8 << 20), 32 << 20)))


# -----------------------------------------------------------------------------
# Plain-JAX glue: fold grid->lidar, bda, lidar->cam, cam->img into one 3x4
# matrix per (batch, camera) plus folded normalisation constants.
# Params layout per (b, n):  [P00..P23 (12), cu, cv, koff, pad] -> 16 floats.
#   ix = (P0 . vox) * scale * cu - 0.5
#   iy = (P1 . vox) * scale * cv - 0.5
#   iz = (P2 . vox) * cz - koff          (cz is a static Python constant)
# -----------------------------------------------------------------------------
def _precompute_params(trans_lidar_to_cam, trans_cam_to_img, image_shape,
                       bda_4x4, pc_range, grid_size_xyz, feat_dhw,
                       num_bins, depth_min, bin_size):
    B, N = trans_lidar_to_cam.shape[:2]
    D, H, W = feat_dhw
    pc = jnp.asarray(pc_range, jnp.float32)
    gsz = jnp.asarray(grid_size_xyz, jnp.float32)
    voxel_size = (pc[3:] - pc[:3]) / gsz
    g2l = jnp.diag(jnp.concatenate([voxel_size, jnp.ones((1,), jnp.float32)]))
    g2l = g2l.at[:3, 3].set(pc[:3])                                   # (4, 4)

    # TODO(synk): the plugin's exact bda_4x4 convention inside FrustumGridGenerator
    # is not shown; we assume augmented-voxel points map back to the lidar frame
    # through inverse(bda) before lidar_to_cam.
    bda_inv = jnp.linalg.inv(bda_4x4.astype(jnp.float32))             # (B, 4, 4)
    trans = (trans_lidar_to_cam.astype(jnp.float32)
             @ bda_inv[:, None] @ g2l)                                # (B, N, 4, 4)
    P = trans_cam_to_img.astype(jnp.float32) @ trans                  # (B, N, 3, 4)
    c23 = trans_cam_to_img[..., 2, 3].astype(jnp.float32)             # (B, N)

    img_hw = jnp.max(image_shape, axis=0).astype(jnp.float32)         # (2,) [H, W]
    cu = jnp.broadcast_to(W / (img_hw[1] - 1.0), (B, N)).astype(jnp.float32)
    cv = jnp.broadcast_to(H / (img_hw[0] - 1.0), (B, N)).astype(jnp.float32)
    cz = D / ((num_bins - 1.0) * bin_size)                            # static
    koff = (c23 + depth_min) * cz + 0.5                               # (B, N)
    pad = jnp.zeros((B, N), jnp.float32)
    params = jnp.concatenate([P.reshape(B, N, 12), cu[..., None], cv[..., None],
                              koff[..., None], pad[..., None]], axis=-1)
    return params.reshape(-1)                                         # (B*N*16,)


def _voxel_centers(X, Y, Z, n_total):
    # flattened x-major (lin = x*(Y*Z) + y*Z + z); columns >= X*Y*Z are padding
    lin = jnp.arange(n_total, dtype=jnp.int32)
    xi = lin // (Y * Z)
    rem = lin - xi * (Y * Z)
    yi = rem // Z
    zi = rem - yi * Z
    return jnp.stack([xi, yi, zi], axis=0).astype(jnp.float32) + 0.5  # (3, n_total)


# -----------------------------------------------------------------------------
# Pallas kernel
# -----------------------------------------------------------------------------
def _make_kernel(D, H, W, NVT, N_cams, cz, base_val):
    EPS = 1e-8

    def kernel(params_ref, vox_ref, feat_ref, out_ref, acc_ref, cnt_ref):
        b = pl.program_id(0)
        n = pl.program_id(1)
        t = pl.program_id(2)

        # new batch / first camera -> reset this tile's accumulators
        @pl.when(n == 0)
        def _init():
            acc_ref[pl.ds(t, 1), :] = jnp.zeros((1, NVT), jnp.float32)
            cnt_ref[pl.ds(t, 1), :] = jnp.zeros((1, NVT), jnp.float32)

        # ---- per-(b, n) scalar parameters from flat SMEM vector --------------
        base = (b * N_cams + n) * 16
        (p00, p01, p02, p03,
         p10, p11, p12, p13,
         p20, p21, p22, p23,
         cu, cv, koff) = [params_ref[base + k] for k in range(15)]

        # ---- precomputed voxel centers for this tile --------------------------
        vox = vox_ref[...]                       # (3, NVT)
        vx = vox[0:1, :]
        vy = vox[1:2, :]
        vz = vox[2:3, :]

        # ---- voxel -> image-plane / depth-bin grid coordinates ----------------
        t0 = p00 * vx + p01 * vy + p02 * vz + p03
        t1 = p10 * vx + p11 * vy + p12 * vz + p13
        t2 = p20 * vx + p21 * vy + p22 * vz + p23
        scale = jnp.where(jnp.abs(t2) > EPS, 1.0 / (t2 + EPS), jnp.ones_like(t2))

        ix = t0 * scale * cu - 0.5               # folded multiplies (no divides)
        iy = t1 * scale * cv - 0.5
        iz = t2 * cz - koff
        ix = jnp.where(jnp.isfinite(ix), ix, -2.0 * W)
        iy = jnp.where(jnp.isfinite(iy), iy, -2.0 * H)
        iz = jnp.where(jnp.isfinite(iz), iz, -2.0 * D)

        # ---- factorised "tent" interpolation weights (small iotas) ------------
        # weight(k) = max(0, 1 - |k - coord|): 1-f at floor, f at floor+1,
        # 0 elsewhere -> out-of-bounds corners contribute nothing (zeros padding).
        xk = lax.broadcasted_iota(jnp.int32, (W, NVT), 0).astype(jnp.float32)
        wx = jnp.maximum(1.0 - jnp.abs(xk - ix), 0.0)                  # (W, NVT)
        yk = lax.broadcasted_iota(jnp.int32, (H, NVT), 0).astype(jnp.float32)
        wy = jnp.maximum(1.0 - jnp.abs(yk - iy), 0.0)                  # (H, NVT)
        zk = lax.broadcasted_iota(jnp.int32, (D, NVT), 0).astype(jnp.float32)
        wz = jnp.maximum(1.0 - jnp.abs(zk - iz), 0.0)                  # (D, NVT)

        # ---- two-stage trilinear contraction -----------------------------------
        feat = feat_ref[0, 0]                                          # (D*H, W)
        s1 = jnp.dot(feat, wx.astype(feat_ref.dtype),
                     preferred_element_type=jnp.float32)               # (D*H, NVT)
        s2 = jnp.sum(s1.reshape(D, H, NVT) * wy[None, :, :], axis=1)   # (D, NVT)
        sample = jnp.sum(s2 * wz, axis=0, keepdims=True)               # (1, NVT)

        # ---- accumulate over cameras (per-tile scratch) ------------------------
        a = acc_ref[pl.ds(t, 1), :] + sample
        c = cnt_ref[pl.ds(t, 1), :] + (sample != 0.0).astype(jnp.float32)
        acc_ref[pl.ds(t, 1), :] = a
        cnt_ref[pl.ds(t, 1), :] = c

        last = n == (N_cams - 1)

        # Non-final cameras: write the partial sum (the block is rewritten by
        # the last camera; only that write survives in HBM).  The write itself
        # cannot be skipped: the output buffer is written back every step.
        @pl.when(jnp.logical_not(last))
        def _partial():
            out_ref[...] = a[None]

        # Final camera: mean-of-nonzero score (base value where count == 0).
        @pl.when(last)
        def _final():
            score = jnp.where(c > 0.0, a / jnp.maximum(c, 1.0), base_val)
            out_ref[...] = jnp.nan_to_num(score)[None]

    return kernel


# -----------------------------------------------------------------------------
# Wrapper (the FrustumToVoxel.forward equivalent)
# -----------------------------------------------------------------------------
def frustum_to_voxel(trans_lidar_to_cam, trans_cam_to_img, image_shape,
                     bda_4x4, frustum_features, frustum_depth_attr, *,
                     grid_config, pc_range, mode='bilinear',
                     padding_mode='zeros', depth_mode='UD', voxel_tile=None):
    # TODO(synk): only the module defaults (trilinear sampling, zeros padding,
    # UD depth discretization) are implemented.
    assert mode == 'bilinear' and padding_mode == 'zeros' and depth_mode == 'UD'

    B, N, D, H, W = frustum_features.shape
    X, Y, Z, num_bins, depth_min, bin_size = _grid_dims(grid_config)
    NV = X * Y * Z
    NVT = int(voxel_tile) if voxel_tile else _pick_voxel_tile(NV, D * H)
    NV_pad = _round_up(NV, NVT)
    T = NV_pad // NVT
    cz = D / ((num_bins - 1.0) * bin_size)
    base_val = 1.0 if frustum_depth_attr else 0.0

    params = _precompute_params(trans_lidar_to_cam, trans_cam_to_img, image_shape,
                                bda_4x4, pc_range, (X, Y, Z), (D, H, W),
                                num_bins, depth_min, bin_size)        # (B*N*16,)
    vox = _voxel_centers(X, Y, Z, NV_pad)                             # (3, NV_pad)
    # No dtype cast: features stay in the caller's dtype in HBM (bf16 halves DMA).
    feat = frustum_features.reshape(B, N, D * H, W)

    kernel = _make_kernel(D, H, W, NVT, N, cz, base_val)
    vmem_limit = _vmem_limit_bytes(D, H, W, NVT, T, feat.dtype.itemsize)

    out = pl.pallas_call(
        kernel,
        out_shape=jax.ShapeDtypeStruct((B, 1, NV_pad), jnp.float32),
        grid_spec=pltpu.PrefetchScalarGridSpec(
            num_scalar_prefetch=0,
            grid=(B, N, T),
            in_specs=[
                pl.BlockSpec(memory_space=pltpu.MemorySpace.SMEM),        # params
                pl.BlockSpec((3, NVT), lambda b, n, t: (0, t)),           # voxel centers
                pl.BlockSpec((1, 1, D * H, W),
                             lambda b, n, t: (b, n, 0, 0)),               # features
            ],
            out_specs=pl.BlockSpec((1, 1, NVT), lambda b, n, t: (b, 0, t)),
            scratch_shapes=[pltpu.VMEM((T, NVT), jnp.float32),            # running sum
                            pltpu.VMEM((T, NVT), jnp.float32)],           # nonzero count
        ),
        compiler_params=pltpu.CompilerParams(
            dimension_semantics=("parallel", "arbitrary", "arbitrary"),
            vmem_limit_bytes=vmem_limit),
    )(params, vox, feat)

    return out[:, 0, :NV].reshape(B, X, Y, Z)


# -----------------------------------------------------------------------------
# Independent plain-JAX reference (gather-based trilinear sampling)
# -----------------------------------------------------------------------------
def frustum_to_voxel_reference(trans_lidar_to_cam, trans_cam_to_img,
                               image_shape, bda_4x4, frustum_features,
                               frustum_depth_attr, *, grid_config, pc_range):
    B, N, D, H, W = frustum_features.shape
    X, Y, Z, num_bins, depth_min, bin_size = _grid_dims(grid_config)
    NV = X * Y * Z
    cz = D / ((num_bins - 1.0) * bin_size)
    params = _precompute_params(trans_lidar_to_cam, trans_cam_to_img, image_shape,
                                bda_4x4, pc_range, (X, Y, Z), (D, H, W),
                                num_bins, depth_min, bin_size).reshape(B, N, 16)
    P = params[..., :12].reshape(B, N, 3, 4)
    cu = params[..., 12:13]
    cv = params[..., 13:14]
    koff = params[..., 14:15]

    vox = _voxel_centers(X, Y, Z, NV)
    vx, vy, vz = vox[0], vox[1], vox[2]                               # (NV,)

    def prow(r):
        return (P[:, :, r, 0:1] * vx + P[:, :, r, 1:2] * vy
                + P[:, :, r, 2:3] * vz + P[:, :, r, 3:4])             # (B, N, NV)

    t0, t1, t2 = prow(0), prow(1), prow(2)
    eps = 1e-8
    scale = jnp.where(jnp.abs(t2) > eps, 1.0 / (t2 + eps), 1.0)
    ix = t0 * scale * cu - 0.5
    iy = t1 * scale * cv - 0.5
    iz = t2 * cz - koff
    ix = jnp.where(jnp.isfinite(ix), ix, -2.0 * W)
    iy = jnp.where(jnp.isfinite(iy), iy, -2.0 * H)
    iz = jnp.where(jnp.isfinite(iz), iz, -2.0 * D)
    ix0 = jnp.floor(ix); fx = ix - ix0
    iy0 = jnp.floor(iy); fy = iy - iy0
    iz0 = jnp.floor(iz); fz = iz - iz0

    featf = frustum_features.astype(jnp.float32).reshape(B, N, D * H * W)

    def corner(zc, yc, xc, w):
        valid = ((zc >= 0) & (zc <= D - 1) & (yc >= 0) & (yc <= H - 1)
                 & (xc >= 0) & (xc <= W - 1))
        zl = jnp.clip(zc, 0, D - 1).astype(jnp.int32)
        yl = jnp.clip(yc, 0, H - 1).astype(jnp.int32)
        xl = jnp.clip(xc, 0, W - 1).astype(jnp.int32)
        idx = zl * (H * W) + yl * W + xl
        val = jnp.take_along_axis(featf, idx, axis=-1)
        return jnp.where(valid, val, 0.0) * w

    samp = (corner(iz0, iy0, ix0, (1 - fz) * (1 - fy) * (1 - fx))
            + corner(iz0, iy0, ix0 + 1, (1 - fz) * (1 - fy) * fx)
            + corner(iz0, iy0 + 1, ix0, (1 - fz) * fy * (1 - fx))
            + corner(iz0, iy0 + 1, ix0 + 1, (1 - fz) * fy * fx)
            + corner(iz0 + 1, iy0, ix0, fz * (1 - fy) * (1 - fx))
            + corner(iz0 + 1, iy0, ix0 + 1, fz * (1 - fy) * fx)
            + corner(iz0 + 1, iy0 + 1, ix0, fz * fy * (1 - fx))
            + corner(iz0 + 1, iy0 + 1, ix0 + 1, fz * fy * fx))        # (B, N, NV)

    cnt = jnp.sum((samp != 0.0).astype(jnp.float32), axis=1)
    ssum = jnp.sum(samp, axis=1)
    base = jnp.ones_like(ssum) if frustum_depth_attr else jnp.zeros_like(ssum)
    score = jnp.where(cnt > 0.0, ssum / jnp.maximum(cnt, 1.0), base)
    return jnp.nan_to_num(score).reshape(B, X, Y, Z)


# -----------------------------------------------------------------------------
if __name__ == "__main__":
    key = jax.random.PRNGKey(0)
    B, N = 2, 2
    D, H, W = 8, 16, 16            # frustum depth bins, feature-map H, W
    grid_config = {'x': [-7.5, 7.5, 0.5],
                   'y': [-7.5, 7.5, 0.5],
                   'z': [-2.0, 2.0, 0.5],
                   'depth': [1.0, 9.0, 1.0]}   # X=Y=30, Z=8 -> NV=7200 (pads to tiles)
    pc_range = [-7.5, -7.5, -2.0, 7.5, 7.5, 2.0]

    k1, k2, k3 = jax.random.split(key, 3)

    intr = jnp.array([[24.0, 0.0, 32.0, 0.0],
                      [0.0, 24.0, 32.0, 0.0],
                      [0.0, 0.0, 1.0, 0.0]], jnp.float32)
    trans_cam_to_img = (jnp.broadcast_to(intr, (B, N, 3, 4))
                        + 0.01 * jax.random.normal(k1, (B, N, 3, 4), jnp.float32))

    extr_top = jnp.array([[0.0, -1.0, 0.0, 0.0],
                          [0.0, 0.0, -1.0, 0.5],
                          [1.0, 0.0, 0.0, 2.0]], jnp.float32)
    top = (jnp.broadcast_to(extr_top, (B, N, 3, 4))
           + 0.02 * jax.random.normal(k2, (B, N, 3, 4), jnp.float32))
    bottom = jnp.broadcast_to(jnp.array([[0.0, 0.0, 0.0, 1.0]], jnp.float32),
                              (B, N, 1, 4))
    trans_lidar_to_cam = jnp.concatenate([top, bottom], axis=2)     # affine 4x4

    bda_4x4 = jnp.broadcast_to(jnp.eye(4, dtype=jnp.float32), (B, 4, 4))
    image_shape = jnp.array([[64, 64], [64, 64]], jnp.int32)
    frustum_features = jax.random.normal(k3, (B, N, D, H, W), jnp.float32)
    frustum_depth_attr = False

    out = frustum_to_voxel(trans_lidar_to_cam, trans_cam_to_img, image_shape,
                           bda_4x4, frustum_features, frustum_depth_attr,
                           grid_config=grid_config, pc_range=pc_range)
    out = jax.block_until_ready(out)

    ref = frustum_to_voxel_reference(trans_lidar_to_cam, trans_cam_to_img,
                                     image_shape, bda_4x4, frustum_features,
                                     frustum_depth_attr,
                                     grid_config=grid_config,
                                     pc_range=pc_range)
    ref = jax.block_until_ready(ref)

    np.testing.assert_allclose(np.asarray(out), np.asarray(ref),
                               rtol=2e-3, atol=2e-3)
    print("KERNEL_OK")
</pallas_src>

<mosaic_0001>
module attributes {stable_mosaic.version = 11 : i64} {
  func.func @kernel(%arg0: i32, %arg1: i32, %arg2: i32, %arg3: memref<64xf32, #tpu.memory_space<smem>>, %arg4: memref<3x2048xf32, #tpu.memory_space<vmem>>, %arg5: memref<1x1x128x16xf32, #tpu.memory_space<vmem>>, %arg6: memref<1x1x2048xf32, #tpu.memory_space<vmem>>, %arg7: memref<4x2048xf32, #tpu.memory_space<vmem>>, %arg8: memref<4x2048xf32, #tpu.memory_space<vmem>>) attributes {dimension_semantics = [#tpu.dimension_semantics<parallel>, #tpu.dimension_semantics<arbitrary>, #tpu.dimension_semantics<arbitrary>], iteration_bounds = array<i64: 2, 2, 4>, scalar_prefetch = 0 : i64, scratch_operands = 2 : i64, tpu.core_type = #tpu.core_type<tc>, window_params = [{transform_indices = @transform_0, window_bounds = array<i64: 64>}, {transform_indices = @transform_1, window_bounds = array<i64: 3, 2048>}, {transform_indices = @transform_2, window_bounds = array<i64: 1, 1, 128, 16>}, {transform_indices = @transform_3, window_bounds = array<i64: 1, 1, 2048>}]} {
    %c0_i32 = arith.constant 0 : i32
    %0 = arith.cmpi eq, %arg1, %c0_i32 : i32
    %1 = arith.extui %0 : i1 to i32
    %c0_i32_0 = arith.constant 0 : i32
    %2 = arith.cmpi ne, %1, %c0_i32_0 : i32
    scf.if %2 {
      %cst_37 = arith.constant 0.000000e+00 : f32
      %178 = vector.broadcast %cst_37 : f32 to vector<1x2048xf32>
      %179 = arith.index_cast %arg2 : i32 to index
      %c0_38 = arith.constant 0 : index
      %180 = vector.load %arg7[%179, %c0_38] : memref<4x2048xf32, #tpu.memory_space<vmem>>, vector<1x2048xf32>
      tpu.vector_store %arg7[%179, %c0_38], %178 {strides = array<i32>} : memref<4x2048xf32, #tpu.memory_space<vmem>>, vector<1x2048xf32>,
      %cst_39 = arith.constant 0.000000e+00 : f32
      %181 = vector.broadcast %cst_39 : f32 to vector<1x2048xf32>
      %182 = arith.index_cast %arg2 : i32 to index
      %c0_40 = arith.constant 0 : index
      %183 = vector.load %arg8[%182, %c0_40] : memref<4x2048xf32, #tpu.memory_space<vmem>>, vector<1x2048xf32>
      tpu.vector_store %arg8[%182, %c0_40], %181 {strides = array<i32>} : memref<4x2048xf32, #tpu.memory_space<vmem>>, vector<1x2048xf32>,
    } else {
    }
    %c2_i32 = arith.constant 2 : i32
    %3 = arith.muli %arg0, %c2_i32 : i32
    %4 = arith.addi %3, %arg1 : i32
    %c16_i32 = arith.constant 16 : i32
    %5 = arith.muli %4, %c16_i32 : i32
    %c0_i32_1 = arith.constant 0 : i32
    %6 = arith.addi %5, %c0_i32_1 : i32
    %7 = arith.index_cast %6 : i32 to index
    %8 = memref.load %arg3[%7] : memref<64xf32, #tpu.memory_space<smem>>
    %c1_i32 = arith.constant 1 : i32
    %9 = arith.addi %5, %c1_i32 : i32
    %10 = arith.index_cast %9 : i32 to index
    %11 = memref.load %arg3[%10] : memref<64xf32, #tpu.memory_space<smem>>
    %c2_i32_2 = arith.constant 2 : i32
    %12 = arith.addi %5, %c2_i32_2 : i32
    %13 = arith.index_cast %12 : i32 to index
    %14 = memref.load %arg3[%13] : memref<64xf32, #tpu.memory_space<smem>>
    %c3_i32 = arith.constant 3 : i32
    %15 = arith.addi %5, %c3_i32 : i32
    %16 = arith.index_cast %15 : i32 to index
    %17 = memref.load %arg3[%16] : memref<64xf32, #tpu.memory_space<smem>>
    %c4_i32 = arith.constant 4 : i32
    %18 = arith.addi %5, %c4_i32 : i32
    %19 = arith.index_cast %18 : i32 to index
    %20 = memref.load %arg3[%19] : memref<64xf32, #tpu.memory_space<smem>>
    %c5_i32 = arith.constant 5 : i32
    %21 = arith.addi %5, %c5_i32 : i32
    %22 = arith.index_cast %21 : i32 to index
    %23 = memref.load %arg3[%22] : memref<64xf32, #tpu.memory_space<smem>>
    %c6_i32 = arith.constant 6 : i32
    %24 = arith.addi %5, %c6_i32 : i32
    %25 = arith.index_cast %24 : i32 to index
    %26 = memref.load %arg3[%25] : memref<64xf32, #tpu.memory_space<smem>>
    %c7_i32 = arith.constant 7 : i32
    %27 = arith.addi %5, %c7_i32 : i32
    %28 = arith.index_cast %27 : i32 to index
    %29 = memref.load %arg3[%28] : memref<64xf32, #tpu.memory_space<smem>>
    %c8_i32 = arith.constant 8 : i32
    %30 = arith.addi %5, %c8_i32 : i32
    %31 = arith.index_cast %30 : i32 to index
    %32 = memref.load %arg3[%31] : memref<64xf32, #tpu.memory_space<smem>>
    %c9_i32 = arith.constant 9 : i32
    %33 = arith.addi %5, %c9_i32 : i32
    %34 = arith.index_cast %33 : i32 to index
    %35 = memref.load %arg3[%34] : memref<64xf32, #tpu.memory_space<smem>>
    %c10_i32 = arith.constant 10 : i32
    %36 = arith.addi %5, %c10_i32 : i32
    %37 = arith.index_cast %36 : i32 to index
    %38 = memref.load %arg3[%37] : memref<64xf32, #tpu.memory_space<smem>>
    %c11_i32 = arith.constant 11 : i32
    %39 = arith.addi %5, %c11_i32 : i32
    %40 = arith.index_cast %39 : i32 to index
    %41 = memref.load %arg3[%40] : memref<64xf32, #tpu.memory_space<smem>>
    %c12_i32 = arith.constant 12 : i32
    %42 = arith.addi %5, %c12_i32 : i32
    %43 = arith.index_cast %42 : i32 to index
    %44 = memref.load %arg3[%43] : memref<64xf32, #tpu.memory_space<smem>>
    %c13_i32 = arith.constant 13 : i32
    %45 = arith.addi %5, %c13_i32 : i32
    %46 = arith.index_cast %45 : i32 to index
    %47 = memref.load %arg3[%46] : memref<64xf32, #tpu.memory_space<smem>>
    %c14_i32 = arith.constant 14 : i32
    %48 = arith.addi %5, %c14_i32 : i32
    %49 = arith.index_cast %48 : i32 to index
    %50 = memref.load %arg3[%49] : memref<64xf32, #tpu.memory_space<smem>>
    %c0 = arith.constant 0 : index
    %c0_3 = arith.constant 0 : index
    %51 = vector.load %arg4[%c0, %c0_3] : memref<3x2048xf32, #tpu.memory_space<vmem>>, vector<3x2048xf32>
    %52 = vector.extract_strided_slice %51 {offsets = [0, 0], sizes = [1, 2048], strides = [1, 1]} : vector<3x2048xf32> to vector<1x2048xf32>
    %53 = vector.extract_strided_slice %51 {offsets = [1, 0], sizes = [1, 2048], strides = [1, 1]} : vector<3x2048xf32> to vector<1x2048xf32>
    %54 = vector.extract_strided_slice %51 {offsets = [2, 0], sizes = [1, 2048], strides = [1, 1]} : vector<3x2048xf32> to vector<1x2048xf32>
    %55 = vector.broadcast %8 : f32 to vector<1x2048xf32>
    %56 = arith.mulf %55, %52 : vector<1x2048xf32>
    %57 = vector.broadcast %11 : f32 to vector<1x2048xf32>
    %58 = arith.mulf %57, %53 : vector<1x2048xf32>
    %59 = arith.addf %56, %58 : vector<1x2048xf32>
    %60 = vector.broadcast %14 : f32 to vector<1x2048xf32>
    %61 = arith.mulf %60, %54 : vector<1x2048xf32>
    %62 = arith.addf %59, %61 : vector<1x2048xf32>
    %63 = vector.broadcast %17 : f32 to vector<1x2048xf32>
    %64 = arith.addf %62, %63 : vector<1x2048xf32>
    %65 = vector.broadcast %20 : f32 to vector<1x2048xf32>
    %66 = arith.mulf %65, %52 : vector<1x2048xf32>
    %67 = vector.broadcast %23 : f32 to vector<1x2048xf32>
    %68 = arith.mulf %67, %53 : vector<1x2048xf32>
    %69 = arith.addf %66, %68 : vector<1x2048xf32>
    %70 = vector.broadcast %26 : f32 to vector<1x2048xf32>
    %71 = arith.mulf %70, %54 : vector<1x2048xf32>
    %72 = arith.addf %69, %71 : vector<1x2048xf32>
    %73 = vector.broadcast %29 : f32 to vector<1x2048xf32>
    %74 = arith.addf %72, %73 : vector<1x2048xf32>
    %75 = vector.broadcast %32 : f32 to vector<1x2048xf32>
    %76 = arith.mulf %75, %52 : vector<1x2048xf32>
    %77 = vector.broadcast %35 : f32 to vector<1x2048xf32>
    %78 = arith.mulf %77, %53 : vector<1x2048xf32>
    %79 = arith.addf %76, %78 : vector<1x2048xf32>
    %80 = vector.broadcast %38 : f32 to vector<1x2048xf32>
    %81 = arith.mulf %80, %54 : vector<1x2048xf32>
    %82 = arith.addf %79, %81 : vector<1x2048xf32>
    %83 = vector.broadcast %41 : f32 to vector<1x2048xf32>
    %84 = arith.addf %82, %83 : vector<1x2048xf32>
    %85 = math.absf %84 : vector<1x2048xf32>
    %cst = arith.constant 9.99999993E-9 : f32
    %86 = vector.broadcast %cst : f32 to vector<1x2048xf32>
    %87 = arith.cmpf ogt, %85, %86 : vector<1x2048xf32>
    %cst_4 = arith.constant 9.99999993E-9 : f32
    %88 = vector.broadcast %cst_4 : f32 to vector<1x2048xf32>
    %89 = arith.addf %84, %88 : vector<1x2048xf32>
    %cst_5 = arith.constant 1.000000e+00 : f32
    %90 = vector.broadcast %cst_5 : f32 to vector<1x2048xf32>
    %91 = arith.divf %90, %89 : vector<1x2048xf32>
    %cst_6 = arith.constant 1.000000e+00 : f32
    %92 = vector.broadcast %cst_6 : f32 to vector<1x2048xf32>
    %93 = arith.select %87, %91, %92 : vector<1x2048xi1>, vector<1x2048xf32>
    %94 = arith.mulf %64, %93 : vector<1x2048xf32>
    %95 = vector.broadcast %44 : f32 to vector<1x2048xf32>
    %96 = arith.mulf %94, %95 : vector<1x2048xf32>
    %cst_7 = arith.constant 5.000000e-01 : f32
    %97 = vector.broadcast %cst_7 : f32 to vector<1x2048xf32>
    %98 = arith.subf %96, %97 : vector<1x2048xf32>
    %99 = arith.mulf %74, %93 : vector<1x2048xf32>
    %100 = vector.broadcast %47 : f32 to vector<1x2048xf32>
    %101 = arith.mulf %99, %100 : vector<1x2048xf32>
    %cst_8 = arith.constant 5.000000e-01 : f32
    %102 = vector.broadcast %cst_8 : f32 to vector<1x2048xf32>
    %103 = arith.subf %101, %102 : vector<1x2048xf32>
    %cst_9 = arith.constant 1.14285719 : f32
    %104 = vector.broadcast %cst_9 : f32 to vector<1x2048xf32>
    %105 = arith.mulf %84, %104 : vector<1x2048xf32>
    %106 = vector.broadcast %50 : f32 to vector<1x2048xf32>
    %107 = arith.subf %105, %106 : vector<1x2048xf32>
    %108 = tpu.weird %98 : vector<1x2048xf32> -> vector<1x2048xi1>
    %cst_10 = arith.constant dense<true> : vector<1x2048xi1>
    %109 = arith.xori %108, %cst_10 : vector<1x2048xi1>
    %cst_11 = arith.constant -3.200000e+01 : f32
    %110 = vector.broadcast %cst_11 : f32 to vector<1x2048xf32>
    %111 = arith.select %109, %98, %110 : vector<1x2048xi1>, vector<1x2048xf32>
    %112 = tpu.weird %103 : vector<1x2048xf32> -> vector<1x2048xi1>
    %cst_12 = arith.constant dense<true> : vector<1x2048xi1>
    %113 = arith.xori %112, %cst_12 : vector<1x2048xi1>
    %cst_13 = arith.constant -3.200000e+01 : f32
    %114 = vector.broadcast %cst_13 : f32 to vector<1x2048xf32>
    %115 = arith.select %113, %103, %114 : vector<1x2048xi1>, vector<1x2048xf32>
    %116 = tpu.weird %107 : vector<1x2048xf32> -> vector<1x2048xi1>
    %cst_14 = arith.constant dense<true> : vector<1x2048xi1>
    %117 = arith.xori %116, %cst_14 : vector<1x2048xi1>
    %cst_15 = arith.constant -1.600000e+01 : f32
    %118 = vector.broadcast %cst_15 : f32 to vector<1x2048xf32>
    %119 = arith.select %117, %107, %118 : vector<1x2048xi1>, vector<1x2048xf32>
    %120 = tpu.iota {dimensions = array<i32: 0>} : vector<16x2048xi32>
    %121 = arith.sitofp %120 : vector<16x2048xi32> to vector<16x2048xf32>
    %122 = vector.broadcast %111 : vector<1x2048xf32> to vector<16x2048xf32>
    %123 = arith.subf %121, %122 : vector<16x2048xf32>
    %124 = math.absf %123 : vector<16x2048xf32>
    %cst_16 = arith.constant 1.000000e+00 : f32
    %125 = vector.broadcast %cst_16 : f32 to vector<16x2048xf32>
    %126 = arith.subf %125, %124 : vector<16x2048xf32>
    %cst_17 = arith.constant 0.000000e+00 : f32
    %127 = vector.broadcast %cst_17 : f32 to vector<16x2048xf32>
    %128 = arith.maximumf %126, %127 : vector<16x2048xf32>
    %129 = tpu.iota {dimensions = array<i32: 0>} : vector<16x2048xi32>
    %130 = arith.sitofp %129 : vector<16x2048xi32> to vector<16x2048xf32>
    %131 = vector.broadcast %115 : vector<1x2048xf32> to vector<16x2048xf32>
    %132 = arith.subf %130, %131 : vector<16x2048xf32>
    %133 = math.absf %132 : vector<16x2048xf32>
    %cst_18 = arith.constant 1.000000e+00 : f32
    %134 = vector.broadcast %cst_18 : f32 to vector<16x2048xf32>
    %135 = arith.subf %134, %133 : vector<16x2048xf32>
    %cst_19 = arith.constant 0.000000e+00 : f32
    %136 = vector.broadcast %cst_19 : f32 to vector<16x2048xf32>
    %137 = arith.maximumf %135, %136 : vector<16x2048xf32>
    %138 = tpu.iota {dimensions = array<i32: 0>} : vector<8x2048xi32>
    %139 = arith.sitofp %138 : vector<8x2048xi32> to vector<8x2048xf32>
    %140 = vector.broadcast %119 : vector<1x2048xf32> to vector<8x2048xf32>
    %141 = arith.subf %139, %140 : vector<8x2048xf32>
    %142 = math.absf %141 : vector<8x2048xf32>
    %cst_20 = arith.constant 1.000000e+00 : f32
    %143 = vector.broadcast %cst_20 : f32 to vector<8x2048xf32>
    %144 = arith.subf %143, %142 : vector<8x2048xf32>
    %cst_21 = arith.constant 0.000000e+00 : f32
    %145 = vector.broadcast %cst_21 : f32 to vector<8x2048xf32>
    %146 = arith.maximumf %144, %145 : vector<8x2048xf32>
    %c0_22 = arith.constant 0 : index
    %c0_23 = arith.constant 0 : index
    %c0_24 = arith.constant 0 : index
    %c0_25 = arith.constant 0 : index
    %147 = vector.load %arg5[%c0_22, %c0_23, %c0_24, %c0_25] : memref<1x1x128x16xf32, #tpu.memory_space<vmem>>, vector<1x1x128x16xf32>
    %148 = vector.shape_cast %147 : vector<1x1x128x16xf32> to vector<128x16xf32>
    %cst_26 = arith.constant dense<0.000000e+00> : vector<128x2048xf32>
    %149 = tpu.matmul %148, %128, %cst_26 {dimension_numbers = #tpu.dot_dimension_numbers<[1], [0], [0], [1], [0, 0, 1, 1], [], []>} : vector<128x16xf32>, vector<16x2048xf32>, vector<128x2048xf32> -> vector<128x2048xf32>
    %150 = vector.shape_cast %149 : vector<128x2048xf32> to vector<8x16x2048xf32>
    %151 = vector.shape_cast %137 : vector<16x2048xf32> to vector<1x16x2048xf32>
    %152 = vector.broadcast %151 : vector<1x16x2048xf32> to vector<8x16x2048xf32>
    %153 = arith.mulf %150, %152 : vector<8x16x2048xf32>
    %cst_27 = arith.constant dense<0.000000e+00> : vector<8x2048xf32>
    %154 = vector.multi_reduction <add>, %153, %cst_27 [1] : vector<8x16x2048xf32> to vector<8x2048xf32>
    %155 = arith.mulf %154, %146 : vector<8x2048xf32>
    %cst_28 = arith.constant dense<0.000000e+00> : vector<2048xf32>
    %156 = vector.multi_reduction <add>, %155, %cst_28 [0] : vector<8x2048xf32> to vector<2048xf32>
    %157 = vector.shape_cast %156 : vector<2048xf32> to vector<1x2048xf32>
    %158 = arith.index_cast %arg2 : i32 to index
    %c0_29 = arith.constant 0 : index
    %159 = vector.load %arg7[%158, %c0_29] : memref<4x2048xf32, #tpu.memory_space<vmem>>, vector<1x2048xf32>
    %160 = arith.addf %159, %157 : vector<1x2048xf32>
    %161 = arith.index_cast %arg2 : i32 to index
    %c0_30 = arith.constant 0 : index
    %162 = vector.load %arg8[%161, %c0_30] : memref<4x2048xf32, #tpu.memory_space<vmem>>, vector<1x2048xf32>
    %cst_31 = arith.constant 0.000000e+00 : f32
    %163 = vector.broadcast %cst_31 : f32 to vector<1x2048xf32>
    %164 = arith.cmpf one, %157, %163 : vector<1x2048xf32>
    %165 = arith.extui %164 : vector<1x2048xi1> to vector<1x2048xi32>
    %166 = arith.sitofp %165 : vector<1x2048xi32> to vector<1x2048xf32>
    %167 = arith.addf %162, %166 : vector<1x2048xf32>
    %168 = arith.index_cast %arg2 : i32 to index
    %c0_32 = arith.constant 0 : index
    %169 = vector.load %arg7[%168, %c0_32] : memref<4x2048xf32, #tpu.memory_space<vmem>>, vector<1x2048xf32>
    tpu.vector_store %arg7[%168, %c0_32], %160 {strides = array<i32>} : memref<4x2048xf32, #tpu.memory_space<vmem>>, vector<1x2048xf32>,
    %170 = arith.index_cast %arg2 : i32 to index
    %c0_33 = arith.constant 0 : index
    %171 = vector.load %arg8[%170, %c0_33] : memref<4x2048xf32, #tpu.memory_space<vmem>>, vector<1x2048xf32>
    tpu.vector_store %arg8[%170, %c0_33], %167 {strides = array<i32>} : memref<4x2048xf32, #tpu.memory_space<vmem>>, vector<1x2048xf32>,
    %c1_i32_34 = arith.constant 1 : i32
    %172 = arith.cmpi eq, %arg1, %c1_i32_34 : i32
    %true = arith.constant true
    %173 = arith.xori %172, %true : i1
    %174 = arith.extui %173 : i1 to i32
    %c0_i32_35 = arith.constant 0 : i32
    %175 = arith.cmpi ne, %174, %c0_i32_35 : i32
    scf.if %175 {
      %178 = vector.shape_cast %160 : vector<1x2048xf32> to vector<1x1x2048xf32>
      %c0_37 = arith.constant 0 : index
      %c0_38 = arith.constant 0 : index
      %c0_39 = arith.constant 0 : index
      %179 = vector.load %arg6[%c0_37, %c0_38, %c0_39] : memref<1x1x2048xf32, #tpu.memory_space<vmem>>, vector<1x1x2048xf32>
      tpu.vector_store %arg6[%c0_37, %c0_38, %c0_39], %178 {strides = array<i32>} : memref<1x1x2048xf32, #tpu.memory_space<vmem>>, vector<1x1x2048xf32>,
    } else {
    }
    %176 = arith.extui %172 : i1 to i32
    %c0_i32_36 = arith.constant 0 : i32
    %177 = arith.cmpi ne, %176, %c0_i32_36 : i32
    scf.if %177 {
      %cst_37 = arith.constant 0.000000e+00 : f32
      %178 = vector.broadcast %cst_37 : f32 to vector<1x2048xf32>
      %179 = arith.cmpf ogt, %167, %178 : vector<1x2048xf32>
      %cst_38 = arith.constant 1.000000e+00 : f32
      %180 = vector.broadcast %cst_38 : f32 to vector<1x2048xf32>
      %181 = arith.maximumf %167, %180 : vector<1x2048xf32>
      %182 = arith.divf %160, %181 : vector<1x2048xf32>
      %cst_39 = arith.constant 0.000000e+00 : f32
      %183 = vector.broadcast %cst_39 : f32 to vector<1x2048xf32>
      %184 = arith.select %179, %182, %183 : vector<1x2048xi1>, vector<1x2048xf32>
      %185 = arith.cmpf one, %184, %184 : vector<1x2048xf32>
      %cst_40 = arith.constant 0.000000e+00 : f32
      %186 = vector.broadcast %cst_40 : f32 to vector<1x2048xf32>
      %187 = arith.select %185, %186, %184 : vector<1x2048xi1>, vector<1x2048xf32>
      %cst_41 = arith.constant 0x7F800000 : f32
      %188 = vector.broadcast %cst_41 : f32 to vector<1x2048xf32>
      %189 = arith.cmpf oeq, %187, %188 : vector<1x2048xf32>
      %cst_42 = arith.constant 3.40282347E+38 : f32
      %190 = vector.broadcast %cst_42 : f32 to vector<1x2048xf32>
      %191 = arith.select %189, %190, %187 : vector<1x2048xi1>, vector<1x2048xf32>
      %cst_43 = arith.constant 0xFF800000 : f32
      %192 = vector.broadcast %cst_43 : f32 to vector<1x2048xf32>
      %193 = arith.cmpf oeq, %191, %192 : vector<1x2048xf32>
      %cst_44 = arith.constant -3.40282347E+38 : f32
      %194 = vector.broadcast %cst_44 : f32 to vector<1x2048xf32>
      %195 = arith.select %193, %194, %191 : vector<1x2048xi1>, vector<1x2048xf32>
      %196 = vector.shape_cast %195 : vector<1x2048xf32> to vector<1x1x2048xf32>
      %c0_45 = arith.constant 0 : index
      %c0_46 = arith.constant 0 : index
      %c0_47 = arith.constant 0 : index
      %197 = vector.load %arg6[%c0_45, %c0_46, %c0_47] : memref<1x1x2048xf32, #tpu.memory_space<vmem>>, vector<1x1x2048xf32>
      tpu.vector_store %arg6[%c0_45, %c0_46, %c0_47], %196 {strides = array<i32>} : memref<1x1x2048xf32, #tpu.memory_space<vmem>>, vector<1x1x2048xf32>,
    } else {
    }
    return
  }
  func.func @transform_0(%arg0: i32, %arg1: i32, %arg2: i32) -> i32 {
    %c0_i32 = arith.constant 0 : i32
    %c0_i32_0 = arith.constant 0 : i32
    return %c0_i32 : i32
  }
  func.func @transform_1(%arg0: i32, %arg1: i32, %arg2: i32) -> (i32, i32) {
    %c0_i32 = arith.constant 0 : i32
    %c0_i32_0 = arith.constant 0 : i32
    return %c0_i32, %arg2 : i32, i32
  }
  func.func @transform_2(%arg0: i32, %arg1: i32, %arg2: i32) -> (i32, i32, i32, i32) {
    %c0_i32 = arith.constant 0 : i32
    %c0_i32_0 = arith.constant 0 : i32
    %c0_i32_1 = arith.constant 0 : i32
    return %arg0, %arg1, %c0_i32, %c0_i32_0 : i32, i32, i32, i32
  }
  func.func @transform_3(%arg0: i32, %arg1: i32, %arg2: i32) -> (i32, i32, i32) {
    %c0_i32 = arith.constant 0 : i32
    %c0_i32_0 = arith.constant 0 : i32
    return %arg0, %c0_i32, %arg2 : i32, i32, i32
  }
}

</mosaic_0001>

<llo_original>
// kernel: tpu_custom_call.1
$region0: #{tpu_custom_call.1}
  #allocation0 [shape = 'u32[]', space=smem, size = 0x4, offset = 0x4, fixed_abs, tag = 'smem constant byte address 0x4 - core index']
  #allocation1 [shape = 'u32[72,128]{1,0:T(1,128)}', space=vmem, size = 0x9000, scoped, tag = 'internal scratch']
  #allocation2 [shape = 'f32[4,2048]{1,0:T(4,128)}', space=vmem, size = 0x8000, scoped, tag = 'scratch operand']
  #allocation3 [shape = 'f32[4,2048]{1,0:T(4,128)}', space=vmem, size = 0x8000, scoped, tag = 'scratch operand']
  %s0 = inlined_call_operand.vmem [shape: f32[64], index: 0, kind: input, shape index: {}]
  %s1 = inlined_call_operand.vmem [shape: f32[3,8192], index: 1, kind: input, shape index: {}]
  %s2 = inlined_call_operand.vmem [shape: f32[2,2,128,16], index: 2, kind: input, shape index: {}]
  %s3 = inlined_call_operand.hbm [shape: f32[2,1,8192], index: 3, kind: output, shape index: {}]
  %s4 = sld [smem:[#allocation0]]
  $region61: #{tpu_custom_call.1} parent=0
    _
  %s6 = ssub.s32 1, %s4
  %s7 = scalar_select 0, %s6, %s4
  $region1: #{tpu_custom_call.1} parent=0
    #allocation4 [shape = 'u8[512]{0}', space=smem, size = 0x200, scoped, tag = 'input window, operand 0, single buffered']
    #allocation5 [shape = 's32[2]{0}', space=sflag, size = 0x8, scoped, tag = 'scoped memory for tpu_custom_call.1']
    #allocation6 [shape = 's32[2]{0}', space=sflag, size = 0x8, scoped, tag = 'scoped memory for tpu_custom_call.1']
    #allocation7 [shape = 'u8[16384]{0}', space=vmem, size = 0x4000, scoped, tag = 'output window, operand 0']
    %8 = vsyncpa [#allocation6], 0
    %9 = vsyncpa [#allocation5], 0
    %s10 = scalar_lea.sflag [#allocation5], 1
    %11 = vsyncpa %s10, 0
    loop: start=0, step=1, limit=18
    $region2: #{tpu_custom_call.1} parent=1 // loop_pre_header
      _
    $region3: #{tpu_custom_call.1} parent=1 // loop_header
      %s13 = sphi 0, %s17
      %p14 = scmp.ge.s32.totalorder %s13, 18
      %s20 = sphi 0, %s39
      %s21 = sphi 0, %s35
      %s22 = sphi 0, %s31
      %s23 = sphi 0, %s20
      %s24 = sphi 0, %s21
      %s25 = sphi 0, %s22
      %s26 = sphi 0, %s23
      %s27 = sphi 0, %s24
      %s28 = sphi 0, %s25
      %s40 = sphi 0, %s40
      %s42 = sphi 0, %s40
      %s43 = sphi 0, %s42
      %s57 = sphi 0, %s43
      %s63 = sphi 0, %s65
      %s66 = sphi 0, %s63
      %s67 = sphi 0, %s66
      %s83 = sphi 0, %s67
      %s91 = sphi 0, %s93
      %s94 = sphi 0, %s91
      %s95 = sphi 0, %s94
      %s111 = sphi 0, %s95
      %s119 = sphi 0, %s121
      %s122 = sphi 0, %s119
      %s123 = sphi 0, %s122
      %s139 = sphi 0, %s123
    $region4: #{tpu_custom_call.1} parent=1 // loop_header_branch
      %16 = sbr.rel (%p14) target = $region8
    $region5: #{tpu_custom_call.1} parent=1 // loop_body
      %s18 = ssub.s32 %s13, 1
      %s19 = ssub.s32 %s13, 2
      %s29 = sadd.s32 1, %s22
      %p30 = scmp.ge.s32.totalorder %s29, 4
      %s31 = scalar_select %p30, 0, %s29
      %s32 = sadd.s32 1, %s21
      %s33 = scalar_select %p30, %s32, %s21
      %p34 = scmp.ge.s32.totalorder %s33, 2
      %s35 = scalar_select %p34, 0, %s33
      %s36 = sadd.s32 1, %s20
      %s37 = scalar_select %p34, %s36, %s20
      %p38 = scmp.ge.s32.totalorder %s37, 2
      %s39 = scalar_select %p38, 0, %s37
      %s41 = sadd.s32 %s40, 1
      %p44 = scmp.eq.s32.totalorder %s13, 15
      %p45 = scmp.ne.s32.totalorder %s40, %s42
      %p46 = scmp.eq.s32.totalorder %s13, 0
      %p47 = por %p45, %p46
      %p48 = scmp.ne.s32.totalorder %s40, %s42
      %p49 = scmp.eq.s32.totalorder %s18, 15
      %p50 = por %p48, %p49
      %p51 = scmp.ne.s32.totalorder %s42, %s43
      %p52 = scmp.eq.s32.totalorder %s18, 0
      %p53 = por %p51, %p52
      %p54 = scmp.ne.s32.totalorder %s42, %s43
      %p55 = scmp.eq.s32.totalorder %s19, 15
      %p56 = por %p54, %p55
      %p58 = scmp.ne.s32.totalorder %s43, %s57
      %p59 = scmp.eq.s32.totalorder %s19, 0
      %p60 = por %p58, %p59
      %s61 = ssub.s32 %s22, %s31
      %p62 = scmp.eq.s32.totalorder %s61, 0
      %s64 = sadd.s32 %s63, 1
      %s65 = scalar_select %p62, %s63, %s64
      %p68 = pneg %p62
      %p69 = scmp.eq.s32.totalorder %s13, 15
      %p70 = por %p68, %p69
      %p71 = scmp.ne.s32.totalorder %s63, %s66
      %p72 = scmp.eq.s32.totalorder %s13, 0
      %p73 = por %p71, %p72
      %p74 = scmp.ne.s32.totalorder %s63, %s66
      %p75 = scmp.eq.s32.totalorder %s18, 15
      %p76 = por %p74, %p75
      %p77 = scmp.ne.s32.totalorder %s66, %s67
      %p78 = scmp.eq.s32.totalorder %s18, 0
      %p79 = por %p77, %p78
      %p80 = scmp.ne.s32.totalorder %s66, %s67
      %p81 = scmp.eq.s32.totalorder %s19, 15
      %p82 = por %p80, %p81
      %p84 = scmp.ne.s32.totalorder %s67, %s83
      %p85 = scmp.eq.s32.totalorder %s19, 0
      %p86 = por %p84, %p85
      %s87 = ssub.s32 %s20, %s39
      %s88 = ssub.s32 %s21, %s35
      %s89 = sor.u32 %s87, %s88
      %p90 = scmp.eq.s32.totalorder %s89, 0
      %s92 = sadd.s32 %s91, 1
      %s93 = scalar_select %p90, %s91, %s92
      %p96 = pneg %p90
      %p97 = scmp.eq.s32.totalorder %s13, 15
      %p98 = por %p96, %p97
      %p99 = scmp.ne.s32.totalorder %s91, %s94
      %p100 = scmp.eq.s32.totalorder %s13, 0
      %p101 = por %p99, %p100
      %p102 = scmp.ne.s32.totalorder %s91, %s94
      %p103 = scmp.eq.s32.totalorder %s18, 15
      %p104 = por %p102, %p103
      %p105 = scmp.ne.s32.totalorder %s94, %s95
      %p106 = scmp.eq.s32.totalorder %s18, 0
      %p107 = por %p105, %p106
      %p108 = scmp.ne.s32.totalorder %s94, %s95
      %p109 = scmp.eq.s32.totalorder %s19, 15
      %p110 = por %p108, %p109
      %p112 = scmp.ne.s32.totalorder %s95, %s111
      %p113 = scmp.eq.s32.totalorder %s19, 0
      %p114 = por %p112, %p113
      %s115 = ssub.s32 %s20, %s39
      %s116 = ssub.s32 %s22, %s31
      %s117 = sor.u32 %s115, %s116
      %p118 = scmp.eq.s32.totalorder %s117, 0
      %s120 = sadd.s32 %s119, 1
      %s121 = scalar_select %p118, %s119, %s120
      %p124 = pneg %p118
      %p125 = scmp.eq.s32.totalorder %s13, 15
      %p126 = por %p124, %p125
      %p127 = scmp.ne.s32.totalorder %s119, %s122
      %p128 = scmp.eq.s32.totalorder %s13, 0
      %p129 = por %p127, %p128
      %p130 = scmp.ne.s32.totalorder %s119, %s122
      %p131 = scmp.eq.s32.totalorder %s18, 15
      %p132 = por %p130, %p131
      %p133 = scmp.ne.s32.totalorder %s122, %s123
      %p134 = scmp.eq.s32.totalorder %s18, 0
      %p135 = por %p133, %p134
      %p136 = scmp.ne.s32.totalorder %s122, %s123
      %p137 = scmp.eq.s32.totalorder %s19, 15
      %p138 = por %p136, %p137
      %p140 = scmp.ne.s32.totalorder %s123, %s139
      %p141 = scmp.eq.s32.totalorder %s19, 0
      %p142 = por %p140, %p141
      %p143 = scmp.le.s32.totalorder 1, %s13
      %p144 = scmp.lt.s32.totalorder %s13, 17
      %p145 = pnand %p143, %p144
      %p146 = pneg %p145
      // Predicated region
      $region9: #{tpu_custom_call.1} parent=5 // pred_check
        _
      $region10: #{tpu_custom_call.1} parent=5 // pred_check_branch
        %148 = sbr.rel (%p145) target = $region12
      $region11: #{tpu_custom_call.1} parent=5 // pred_region
        %s149 = ssub.s32 %s13, 1
        // Predicated region
        $region13: #{tpu_custom_call.1} parent=11 // pred_check
          %p150 = pneg %p53
        $region14: #{tpu_custom_call.1} parent=11 // pred_check_branch
          %152 = sbr.rel (%p150) target = $region16
        $region15: #{tpu_custom_call.1} parent=11 // pred_region
          %154 = vsyncadd [#allocation6], 0
          %s156 = sshll.u32 %s0, 4
          %s157 = int_to_ptr.vmem [resolvable:$true] %s156
          %159 = dma.vmem_to_smem %s157, 16, [#allocation4], [#allocation6]
        $region16: #{tpu_custom_call.1} parent=11 // pred_fallthru
          _
      $region12: #{tpu_custom_call.1} parent=5 // pred_fallthru
        _
      %p160 = scmp.lt.s32.totalorder %s13, 16
      // Predicated region
      $region17: #{tpu_custom_call.1} parent=5 // pred_check
        %p161 = pneg %p160
      $region18: #{tpu_custom_call.1} parent=5 // pred_check_branch
        %163 = sbr.rel (%p161) target = $region20
      $region19: #{tpu_custom_call.1} parent=5 // pred_region
        // Predicated region
        $region21: #{tpu_custom_call.1} parent=19 // pred_check
          %p164 = pneg %p73
        $region22: #{tpu_custom_call.1} parent=19 // pred_check_branch
          %166 = sbr.rel (%p164) target = $region24
        $region23: #{tpu_custom_call.1} parent=19 // pred_region
          %s167 = smul.u32 16, %s22
          %p168 = scmp.lt.s32.totalorder %s167, 63
          %s169 = scalar_select %p168, %s167, 63
          %s170 = smul.addr %s169, 4
          %s171 = scalar_lea.vmem %s1, %s170
          %s172 = smul.u32 16, %s22
        $region24: #{tpu_custom_call.1} parent=19 // pred_fallthru
          _
        // Predicated region
        $region25: #{tpu_custom_call.1} parent=19 // pred_check
          %p173 = pneg %p101
        $region26: #{tpu_custom_call.1} parent=19 // pred_check_branch
          %175 = sbr.rel (%p173) target = $region28
        $region27: #{tpu_custom_call.1} parent=19 // pred_region
          %p176 = scmp.lt.s32.totalorder %s20, 1
          %s177 = scalar_select %p176, %s20, 1
          %p178 = scmp.lt.s32.totalorder %s21, 1
          %s179 = scalar_select %p178, %s21, 1
          %s180 = smul.addr %s179, 16
          %s181 = smul.addr %s177, 32
          %s182 = sadd.s32 %s180, %s181
          %s183 = smul.addr %s182, 8
          %s184 = scalar_lea.vmem %s2, %s183
        $region28: #{tpu_custom_call.1} parent=19 // pred_fallthru
          _
      $region20: #{tpu_custom_call.1} parent=5 // pred_fallthru
        _
      %p185 = scmp.le.s32.totalorder 1, %s13
      %p186 = scmp.lt.s32.totalorder %s13, 17
      %p187 = pnand %p185, %p186
      %p188 = pneg %p187
      // Predicated region
      $region29: #{tpu_custom_call.1} parent=5 // pred_check
        _
      $region30: #{tpu_custom_call.1} parent=5 // pred_check_branch
        %190 = sbr.rel (%p187) target = $region32
      $region31: #{tpu_custom_call.1} parent=5 // pred_region
        %s191 = ssub.s32 %s13, 1
        // Predicated region
        $region33: #{tpu_custom_call.1} parent=31 // pred_check
          %p192 = pneg %p53
        $region34: #{tpu_custom_call.1} parent=31 // pred_check_branch
          %194 = sbr.rel (%p192) target = $region36
        $region35: #{tpu_custom_call.1} parent=31 // pred_region
          %196 = dma.done [#allocation6], 16
        $region36: #{tpu_custom_call.1} parent=31 // pred_fallthru
          _
        %197 = sfence
        %p198 = pneg %p53
        %p199 = pneg %p50
        %s200 = smul.u32 16, %s25
        %p201 = scmp.lt.s32.totalorder %s200, 63
        %s202 = scalar_select %p201, %s200, 63
        %s203 = smul.addr %s202, 4
        %s204 = scalar_lea.vmem %s1, %s203
        %p205 = pneg %p79
        %p206 = pneg %p76
        %p207 = scmp.lt.s32.totalorder %s23, 1
        %s208 = scalar_select %p207, %s23, 1
        %p209 = scmp.lt.s32.totalorder %s24, 1
        %s210 = scalar_select %p209, %s24, 1
        %s211 = smul.addr %s210, 16
        %s212 = smul.addr %s208, 32
        %s213 = sadd.s32 %s211, %s212
        %s214 = smul.addr %s213, 8
        %s215 = scalar_lea.vmem %s2, %s214
        %p216 = pneg %p107
        %p217 = pneg %p104
        %p218 = pneg %p135
        %p219 = pneg %p132
        %s220 = sand.u32 %s122, 1
        %s221 = scalar_lea.sflag [#allocation5], %s220
        %s222 = sand.u32 %s122, 1
        %s223 = smul.addr %s222, 16
        %s224 = scalar_lea.vmem [#allocation7], %s223
        %s225 = smul.u32 16, %s25
        %p226 = scmp.lt.s32.totalorder %s225, 63
        %s227 = scalar_select %p226, %s225, 63
        %s228 = smul.addr %s227, 4
        %s229 = scalar_lea.vmem %s1, %s228
        %s230 = smul.u32 16, %s25
        %p231 = scmp.lt.s32.totalorder %s23, 1
        %s232 = scalar_select %p231, %s23, 1
        %p233 = scmp.lt.s32.totalorder %s24, 1
        %s234 = scalar_select %p233, %s24, 1
        %s235 = smul.addr %s234, 16
        %s236 = smul.addr %s232, 32
        %s237 = sadd.s32 %s235, %s236
        %s238 = smul.addr %s237, 8
        %s239 = scalar_lea.vmem %s2, %s238
        %s240 = smul.u32 16, %s25
        %p241 = scmp.eq.s32.totalorder %s24, 0
        // Predicated region
        $region37: #{tpu_custom_call.1} parent=31 // pred_check
          %p242 = pneg %p241
        $region38: #{tpu_custom_call.1} parent=31 // pred_check_branch
          %244 = sbr.rel (%p242) target = $region40
        $region39: #{tpu_custom_call.1} parent=31 // pred_region
          %s245 = sshra.s32 %s25, 2
          %s246 = sand.u32 %s25, 3
          %s247 = sshra.s32 %s25, 2
          %s248 = sand.u32 %s25, 3
          %s249 = smul.u32 %s245, 16
          %s250 = smul.u32 %s249, 4
          %s251 = sadd.s32 %s250, %s248
          %s252 = scalar_lea.vmem [#allocation2], %s251
          %253 = vst [vmem:[%s252] ss:$4 sm:$0xff] 0.0
          %s254 = sadd.s32 %s249, 8
          %s255 = smul.u32 %s254, 4
          %s256 = sadd.s32 %s255, %s248
          %s257 = scalar_lea.vmem [#allocation2], %s256
          %258 = vst [vmem:[%s257] ss:$4 sm:$0xff] 0.0
          %s259 = scalar_lea.vmem [#allocation3], %s251
          %260 = vst [vmem:[%s259] ss:$4 sm:$0xff] 0.0
          %s261 = scalar_lea.vmem [#allocation3], %s256
          %262 = vst [vmem:[%s261] ss:$4 sm:$0xff] 0.0
        $region40: #{tpu_custom_call.1} parent=31 // pred_fallthru
          _
        %s263 = smul.u32 %s23, 2
        %s264 = sadd.s32 %s263, %s24
        %s265 = smul.u32 %s264, 16
        %s266 = sld [smem:[#allocation4 + %s265]]
        %s267 = sadd.s32 %s265, 1
        %s268 = sld [smem:[#allocation4 + %s267]]
        %s269 = sadd.s32 %s265, 2
        %s270 = sld [smem:[#allocation4 + %s269]]
        %s271 = sadd.s32 %s265, 3
        %s272 = sld [smem:[#allocation4 + %s271]]
        %s273 = sadd.s32 %s265, 4
        %s274 = sld [smem:[#allocation4 + %s273]]
        %s275 = sadd.s32 %s265, 5
        %s276 = sld [smem:[#allocation4 + %s275]]
        %s277 = sadd.s32 %s265, 6
        %s278 = sld [smem:[#allocation4 + %s277]]
        %s279 = sadd.s32 %s265, 7
        %s280 = sld [smem:[#allocation4 + %s279]]
        %s281 = sadd.s32 %s265, 8
        %s282 = sld [smem:[#allocation4 + %s281]]
        %s283 = sadd.s32 %s265, 9
        %s284 = sld [smem:[#allocation4 + %s283]]
        %s285 = sadd.s32 %s265, 10
        %s286 = sld [smem:[#allocation4 + %s285]]
        %s287 = sadd.s32 %s265, 11
        %s288 = sld [smem:[#allocation4 + %s287]]
        %s289 = sadd.s32 %s265, 12
        %s290 = sld [smem:[#allocation4 + %s289]]
        %s291 = sadd.s32 %s265, 13
        %s292 = sld [smem:[#allocation4 + %s291]]
        %s293 = sadd.s32 %s265, 14
        %s294 = sld [smem:[#allocation4 + %s293]]
        %v295 = vld [vmem:[%s229] sm:$0x77]
        %v296 = vld [vmem:[%s229 + $0x8] sm:$0x77]
        %v297 = vld [vmem:[%s229 + $0x10] sm:$0x77]
        %v298 = vld [vmem:[%s229 + $0x18] sm:$0x77]
        %v299 = vld [vmem:[%s229 + $0x20] sm:$0x77]
        %v300 = vld [vmem:[%s229 + $0x28] sm:$0x77]
        %v301 = vld [vmem:[%s229 + $0x30] sm:$0x77]
        %v302 = vld [vmem:[%s229 + $0x38] sm:$0x77]
        %v303 = vstv %s266
        %v304 = vmul.f32 %v303, %v295
        %v305 = vmul.f32 %v303, %v296
        %v306 = vmul.f32 %v303, %v297
        %v307 = vmul.f32 %v303, %v298
        %v308 = vmul.f32 %v303, %v299
        %v309 = vmul.f32 %v303, %v300
        %v310 = vmul.f32 %v303, %v301
        %v311 = vmul.f32 %v303, %v302
        %v312 = vstv %s268
        %v313 = vmul.f32 %v312, %v295
        %v314 = vmul.f32 %v312, %v296
        %v315 = vmul.f32 %v312, %v297
        %v316 = vmul.f32 %v312, %v298
        %v317 = vmul.f32 %v312, %v299
        %v318 = vmul.f32 %v312, %v300
        %v319 = vmul.f32 %v312, %v301
        %v320 = vmul.f32 %v312, %v302
        %v329 = vrot.slane %v313, 5
        %v330 = vrot.slane %v329, 4
        %v331 = vrot.slane %v314, 5
        %v332 = vrot.slane %v331, 4
        %v333 = vrot.slane %v315, 5
        %v334 = vrot.slane %v333, 4
        %v335 = vrot.slane %v316, 5
        %v336 = vrot.slane %v335, 4
        %v337 = vrot.slane %v317, 5
        %v338 = vrot.slane %v337, 4
        %v339 = vrot.slane %v318, 5
        %v340 = vrot.slane %v339, 4
        %v341 = vrot.slane %v319, 5
        %v342 = vrot.slane %v341, 4
        %v343 = vrot.slane %v320, 5
        %v344 = vrot.slane %v343, 4
        %v353 = vadd.f32 %v304, %v330
        %v354 = vadd.f32 %v305, %v332
        %v355 = vadd.f32 %v306, %v334
        %v356 = vadd.f32 %v307, %v336
        %v357 = vadd.f32 %v308, %v338
        %v358 = vadd.f32 %v309, %v340
        %v359 = vadd.f32 %v310, %v342
        %v360 = vadd.f32 %v311, %v344
        %v361 = vstv %s270
        %v362 = vmul.f32 %v361, %v295
        %v363 = vmul.f32 %v361, %v296
        %v364 = vmul.f32 %v361, %v297
        %v365 = vmul.f32 %v361, %v298
        %v366 = vmul.f32 %v361, %v299
        %v367 = vmul.f32 %v361, %v300
        %v368 = vmul.f32 %v361, %v301
        %v369 = vmul.f32 %v361, %v302
        %v378 = vrot.slane %v362, 6
        %v379 = vrot.slane %v378, 4
        %v380 = vrot.slane %v363, 6
        %v381 = vrot.slane %v380, 4
        %v382 = vrot.slane %v364, 6
        %v383 = vrot.slane %v382, 4
        %v384 = vrot.slane %v365, 6
        %v385 = vrot.slane %v384, 4
        %v386 = vrot.slane %v366, 6
        %v387 = vrot.slane %v386, 4
        %v388 = vrot.slane %v367, 6
        %v389 = vrot.slane %v388, 4
        %v390 = vrot.slane %v368, 6
        %v391 = vrot.slane %v390, 4
        %v392 = vrot.slane %v369, 6
        %v393 = vrot.slane %v392, 4
        %v402 = vadd.f32 %v353, %v379
        %v403 = vadd.f32 %v354, %v381
        %v404 = vadd.f32 %v355, %v383
        %v405 = vadd.f32 %v356, %v385
        %v406 = vadd.f32 %v357, %v387
        %v407 = vadd.f32 %v358, %v389
        %v408 = vadd.f32 %v359, %v391
        %v409 = vadd.f32 %v360, %v393
        %v410 = vstv %s272
        %v411 = vadd.f32 %v402, %v410
        %v412 = vadd.f32 %v403, %v410
        %v413 = vadd.f32 %v404, %v410
        %v414 = vadd.f32 %v405, %v410
        %v415 = vadd.f32 %v406, %v410
        %v416 = vadd.f32 %v407, %v410
        %v417 = vadd.f32 %v408, %v410
        %v418 = vadd.f32 %v409, %v410
        %v419 = vstv %s274
        %v420 = vmul.f32 %v419, %v295
        %v421 = vmul.f32 %v419, %v296
        %v422 = vmul.f32 %v419, %v297
        %v423 = vmul.f32 %v419, %v298
        %v424 = vmul.f32 %v419, %v299
        %v425 = vmul.f32 %v419, %v300
        %v426 = vmul.f32 %v419, %v301
        %v427 = vmul.f32 %v419, %v302
        %v428 = vstv %s276
        %v429 = vmul.f32 %v428, %v295
        %v430 = vmul.f32 %v428, %v296
        %v431 = vmul.f32 %v428, %v297
        %v432 = vmul.f32 %v428, %v298
        %v433 = vmul.f32 %v428, %v299
        %v434 = vmul.f32 %v428, %v300
        %v435 = vmul.f32 %v428, %v301
        %v436 = vmul.f32 %v428, %v302
        %v445 = vrot.slane %v429, 5
        %v446 = vrot.slane %v445, 4
        %v447 = vrot.slane %v430, 5
        %v448 = vrot.slane %v447, 4
        %v449 = vrot.slane %v431, 5
        %v450 = vrot.slane %v449, 4
        %v451 = vrot.slane %v432, 5
        %v452 = vrot.slane %v451, 4
        %v453 = vrot.slane %v433, 5
        %v454 = vrot.slane %v453, 4
        %v455 = vrot.slane %v434, 5
        %v456 = vrot.slane %v455, 4
        %v457 = vrot.slane %v435, 5
        %v458 = vrot.slane %v457, 4
        %v459 = vrot.slane %v436, 5
        %v460 = vrot.slane %v459, 4
        %v469 = vadd.f32 %v420, %v446
        %v470 = vadd.f32 %v421, %v448
        %v471 = vadd.f32 %v422, %v450
        %v472 = vadd.f32 %v423, %v452
        %v473 = vadd.f32 %v424, %v454
        %v474 = vadd.f32 %v425, %v456
        %v475 = vadd.f32 %v426, %v458
        %v476 = vadd.f32 %v427, %v460
        %v477 = vstv %s278
        %v478 = vmul.f32 %v477, %v295
        %v479 = vmul.f32 %v477, %v296
        %v480 = vmul.f32 %v477, %v297
        %v481 = vmul.f32 %v477, %v298
        %v482 = vmul.f32 %v477, %v299
        %v483 = vmul.f32 %v477, %v300
        %v484 = vmul.f32 %v477, %v301
        %v485 = vmul.f32 %v477, %v302
        %v494 = vrot.slane %v478, 6
        %v495 = vrot.slane %v494, 4
        %v496 = vrot.slane %v479, 6
        %v497 = vrot.slane %v496, 4
        %v498 = vrot.slane %v480, 6
        %v499 = vrot.slane %v498, 4
        %v500 = vrot.slane %v481, 6
        %v501 = vrot.slane %v500, 4
        %v502 = vrot.slane %v482, 6
        %v503 = vrot.slane %v502, 4
        %v504 = vrot.slane %v483, 6
        %v505 = vrot.slane %v504, 4
        %v506 = vrot.slane %v484, 6
        %v507 = vrot.slane %v506, 4
        %v508 = vrot.slane %v485, 6
        %v509 = vrot.slane %v508, 4
        %v518 = vadd.f32 %v469, %v495
        %v519 = vadd.f32 %v470, %v497
        %v520 = vadd.f32 %v471, %v499
        %v521 = vadd.f32 %v472, %v501
        %v522 = vadd.f32 %v473, %v503
        %v523 = vadd.f32 %v474, %v505
        %v524 = vadd.f32 %v475, %v507
        %v525 = vadd.f32 %v476, %v509
        %v526 = vstv %s280
        %v527 = vadd.f32 %v518, %v526
        %v528 = vadd.f32 %v519, %v526
        %v529 = vadd.f32 %v520, %v526
        %v530 = vadd.f32 %v521, %v526
        %v531 = vadd.f32 %v522, %v526
        %v532 = vadd.f32 %v523, %v526
        %v533 = vadd.f32 %v524, %v526
        %v534 = vadd.f32 %v525, %v526
        %v535 = vstv %s282
        %v536 = vmul.f32 %v535, %v295
        %v537 = vmul.f32 %v535, %v296
        %v538 = vmul.f32 %v535, %v297
        %v539 = vmul.f32 %v535, %v298
        %v540 = vmul.f32 %v535, %v299
        %v541 = vmul.f32 %v535, %v300
        %v542 = vmul.f32 %v535, %v301
        %v543 = vmul.f32 %v535, %v302
        %v544 = vstv %s284
        %v545 = vmul.f32 %v544, %v295
        %v546 = vmul.f32 %v544, %v296
        %v547 = vmul.f32 %v544, %v297
        %v548 = vmul.f32 %v544, %v298
        %v549 = vmul.f32 %v544, %v299
        %v550 = vmul.f32 %v544, %v300
        %v551 = vmul.f32 %v544, %v301
        %v552 = vmul.f32 %v544, %v302
        %v561 = vrot.slane %v545, 5
        %v562 = vrot.slane %v561, 4
        %v563 = vrot.slane %v546, 5
        %v564 = vrot.slane %v563, 4
        %v565 = vrot.slane %v547, 5
        %v566 = vrot.slane %v565, 4
        %v567 = vrot.slane %v548, 5
        %v568 = vrot.slane %v567, 4
        %v569 = vrot.slane %v549, 5
        %v570 = vrot.slane %v569, 4
        %v571 = vrot.slane %v550, 5
        %v572 = vrot.slane %v571, 4
        %v573 = vrot.slane %v551, 5
        %v574 = vrot.slane %v573, 4
        %v575 = vrot.slane %v552, 5
        %v576 = vrot.slane %v575, 4
        %v585 = vadd.f32 %v536, %v562
        %v586 = vadd.f32 %v537, %v564
        %v587 = vadd.f32 %v538, %v566
        %v588 = vadd.f32 %v539, %v568
        %v589 = vadd.f32 %v540, %v570
        %v590 = vadd.f32 %v541, %v572
        %v591 = vadd.f32 %v542, %v574
        %v592 = vadd.f32 %v543, %v576
        %v593 = vstv %s286
        %v594 = vmul.f32 %v593, %v295
        %v595 = vmul.f32 %v593, %v296
        %v596 = vmul.f32 %v593, %v297
        %v597 = vmul.f32 %v593, %v298
        %v598 = vmul.f32 %v593, %v299
        %v599 = vmul.f32 %v593, %v300
        %v600 = vmul.f32 %v593, %v301
        %v601 = vmul.f32 %v593, %v302
        %v610 = vrot.slane %v594, 6
        %v611 = vrot.slane %v610, 4
        %v612 = vrot.slane %v595, 6
        %v613 = vrot.slane %v612, 4
        %v614 = vrot.slane %v596, 6
        %v615 = vrot.slane %v614, 4
        %v616 = vrot.slane %v597, 6
        %v617 = vrot.slane %v616, 4
        %v618 = vrot.slane %v598, 6
        %v619 = vrot.slane %v618, 4
        %v620 = vrot.slane %v599, 6
        %v621 = vrot.slane %v620, 4
        %v622 = vrot.slane %v600, 6
        %v623 = vrot.slane %v622, 4
        %v624 = vrot.slane %v601, 6
        %v625 = vrot.slane %v624, 4
        %v634 = vadd.f32 %v585, %v611
        %v635 = vadd.f32 %v586, %v613
        %v636 = vadd.f32 %v587, %v615
        %v637 = vadd.f32 %v588, %v617
        %v638 = vadd.f32 %v589, %v619
        %v639 = vadd.f32 %v590, %v621
        %v640 = vadd.f32 %v591, %v623
        %v641 = vadd.f32 %v592, %v625
        %v642 = vstv %s288
        %v643 = vadd.f32 %v634, %v642
        %v644 = vadd.f32 %v635, %v642
        %v645 = vadd.f32 %v636, %v642
        %v646 = vadd.f32 %v637, %v642
        %v647 = vadd.f32 %v638, %v642
        %v648 = vadd.f32 %v639, %v642
        %v649 = vadd.f32 %v640, %v642
        %v650 = vadd.f32 %v641, %v642
        %v651 = vand.u32 2147483647, %v643
        %v652 = vand.u32 2147483647, %v644
        %v653 = vand.u32 2147483647, %v645
        %v654 = vand.u32 2147483647, %v646
        %v655 = vand.u32 2147483647, %v647
        %v656 = vand.u32 2147483647, %v648
        %v657 = vand.u32 2147483647, %v649
        %v658 = vand.u32 2147483647, %v650
        %vm659 = vcmp.gt.f32.partialorder %v651, 1e-08
        %vm660 = vcmp.gt.f32.partialorder %v652, 1e-08
        %vm661 = vcmp.gt.f32.partialorder %v653, 1e-08
        %vm662 = vcmp.gt.f32.partialorder %v654, 1e-08
        %vm663 = vcmp.gt.f32.partialorder %v655, 1e-08
        %vm664 = vcmp.gt.f32.partialorder %v656, 1e-08
        %vm665 = vcmp.gt.f32.partialorder %v657, 1e-08
        %vm666 = vcmp.gt.f32.partialorder %v658, 1e-08
        %v667 = vadd.f32 %v643, 1e-08
        %v668 = vadd.f32 %v644, 1e-08
        %v669 = vadd.f32 %v645, 1e-08
        %v670 = vadd.f32 %v646, 1e-08
        %v671 = vadd.f32 %v647, 1e-08
        %v672 = vadd.f32 %v648, 1e-08
        %v673 = vadd.f32 %v649, 1e-08
        %v674 = vadd.f32 %v650, 1e-08
        %v675 = vrcp.pop %v667
        %v676 = vmul.f32 %v667, %v675
        %v677 = vsub.f32 1.0, %v676
        %v678 = vmul.f32 %v675, %v677
        %v679 = vadd.f32 %v675, %v678
        %vm680 = vweird.f32 %v667
        %vm681 = vweird.f32 %v675
        %vm682 = vmor %vm680, %vm681
        %v683 = vsel %vm682, %v675, %v679
        %v684 = vand.u32 2147483647, %v667
        %vm685 = vcmp.eq.f32.partialorder %v684, 8.507059e+37
        %v686 = vand.u32 %v667, 2147483648
        %v687 = vor.u32 1.1754944e-38, %v686
        %v688 = vsel %vm685, %v687, %v683
        %v689 = vmul.f32 1.0, %v688
        %v690 = vrcp.pop %v668
        %v691 = vmul.f32 %v668, %v690
        %v692 = vsub.f32 1.0, %v691
        %v693 = vmul.f32 %v690, %v692
        %v694 = vadd.f32 %v690, %v693
        %vm695 = vweird.f32 %v668
        %vm696 = vweird.f32 %v690
        %vm697 = vmor %vm695, %vm696
        %v698 = vsel %vm697, %v690, %v694
        %v699 = vand.u32 2147483647, %v668
        %vm700 = vcmp.eq.f32.partialorder %v699, 8.507059e+37
        %v701 = vand.u32 %v668, 2147483648
        %v702 = vor.u32 1.1754944e-38, %v701
        %v703 = vsel %vm700, %v702, %v698
        %v704 = vmul.f32 1.0, %v703
        %v705 = vrcp.pop %v669
        %v706 = vmul.f32 %v669, %v705
        %v707 = vsub.f32 1.0, %v706
        %v708 = vmul.f32 %v705, %v707
        %v709 = vadd.f32 %v705, %v708
        %vm710 = vweird.f32 %v669
        %vm711 = vweird.f32 %v705
        %vm712 = vmor %vm710, %vm711
        %v713 = vsel %vm712, %v705, %v709
        %v714 = vand.u32 2147483647, %v669
        %vm715 = vcmp.eq.f32.partialorder %v714, 8.507059e+37
        %v716 = vand.u32 %v669, 2147483648
        %v717 = vor.u32 1.1754944e-38, %v716
        %v718 = vsel %vm715, %v717, %v713
        %v719 = vmul.f32 1.0, %v718
        %v720 = vrcp.pop %v670
        %v721 = vmul.f32 %v670, %v720
        %v722 = vsub.f32 1.0, %v721
        %v723 = vmul.f32 %v720, %v722
        %v724 = vadd.f32 %v720, %v723
        %vm725 = vweird.f32 %v670
        %vm726 = vweird.f32 %v720
        %vm727 = vmor %vm725, %vm726
        %v728 = vsel %vm727, %v720, %v724
        %v729 = vand.u32 2147483647, %v670
        %vm730 = vcmp.eq.f32.partialorder %v729, 8.507059e+37
        %v731 = vand.u32 %v670, 2147483648
        %v732 = vor.u32 1.1754944e-38, %v731
        %v733 = vsel %vm730, %v732, %v728
        %v734 = vmul.f32 1.0, %v733
        %v735 = vrcp.pop %v671
        %v736 = vmul.f32 %v671, %v735
        %v737 = vsub.f32 1.0, %v736
        %v738 = vmul.f32 %v735, %v737
        %v739 = vadd.f32 %v735, %v738
        %vm740 = vweird.f32 %v671
        %vm741 = vweird.f32 %v735
        %vm742 = vmor %vm740, %vm741
        %v743 = vsel %vm742, %v735, %v739
        %v744 = vand.u32 2147483647, %v671
        %vm745 = vcmp.eq.f32.partialorder %v744, 8.507059e+37
        %v746 = vand.u32 %v671, 2147483648
        %v747 = vor.u32 1.1754944e-38, %v746
        %v748 = vsel %vm745, %v747, %v743
        %v749 = vmul.f32 1.0, %v748
        %v750 = vrcp.pop %v672
        %v751 = vmul.f32 %v672, %v750
        %v752 = vsub.f32 1.0, %v751
        %v753 = vmul.f32 %v750, %v752
        %v754 = vadd.f32 %v750, %v753
        %vm755 = vweird.f32 %v672
        %vm756 = vweird.f32 %v750
        %vm757 = vmor %vm755, %vm756
        %v758 = vsel %vm757, %v750, %v754
        %v759 = vand.u32 2147483647, %v672
        %vm760 = vcmp.eq.f32.partialorder %v759, 8.507059e+37
        %v761 = vand.u32 %v672, 2147483648
        %v762 = vor.u32 1.1754944e-38, %v761
        %v763 = vsel %vm760, %v762, %v758
        %v764 = vmul.f32 1.0, %v763
        %v765 = vrcp.pop %v673
        %v766 = vmul.f32 %v673, %v765
        %v767 = vsub.f32 1.0, %v766
        %v768 = vmul.f32 %v765, %v767
        %v769 = vadd.f32 %v765, %v768
        %vm770 = vweird.f32 %v673
        %vm771 = vweird.f32 %v765
        %vm772 = vmor %vm770, %vm771
        %v773 = vsel %vm772, %v765, %v769
        %v774 = vand.u32 2147483647, %v673
        %vm775 = vcmp.eq.f32.partialorder %v774, 8.507059e+37
        %v776 = vand.u32 %v673, 2147483648
        %v777 = vor.u32 1.1754944e-38, %v776
        %v778 = vsel %vm775, %v777, %v773
        %v779 = vmul.f32 1.0, %v778
        %v780 = vrcp.pop %v674
        %v781 = vmul.f32 %v674, %v780
        %v782 = vsub.f32 1.0, %v781
        %v783 = vmul.f32 %v780, %v782
        %v784 = vadd.f32 %v780, %v783
        %vm785 = vweird.f32 %v674
        %vm786 = vweird.f32 %v780
        %vm787 = vmor %vm785, %vm786
        %v788 = vsel %vm787, %v780, %v784
        %v789 = vand.u32 2147483647, %v674
        %vm790 = vcmp.eq.f32.partialorder %v789, 8.507059e+37
        %v791 = vand.u32 %v674, 2147483648
        %v792 = vor.u32 1.1754944e-38, %v791
        %v793 = vsel %vm790, %v792, %v788
        %v794 = vmul.f32 1.0, %v793
        %v795 = vsel %vm659, %v689, 1.0
        %v796 = vsel %vm660, %v704, 1.0
        %v797 = vsel %vm661, %v719, 1.0
        %v798 = vsel %vm662, %v734, 1.0
        %v799 = vsel %vm663, %v749, 1.0
        %v800 = vsel %vm664, %v764, 1.0
        %v801 = vsel %vm665, %v779, 1.0
        %v802 = vsel %vm666, %v794, 1.0
        %v803 = vmul.f32 %v411, %v795
        %v804 = vmul.f32 %v412, %v796
        %v805 = vmul.f32 %v413, %v797
        %v806 = vmul.f32 %v414, %v798
        %v807 = vmul.f32 %v415, %v799
        %v808 = vmul.f32 %v416, %v800
        %v809 = vmul.f32 %v417, %v801
        %v810 = vmul.f32 %v418, %v802
        %v811 = vstv %s290
        %v812 = vmul.f32 %v803, %v811
        %v813 = vmul.f32 %v804, %v811
        %v814 = vmul.f32 %v805, %v811
        %v815 = vmul.f32 %v806, %v811
        %v816 = vmul.f32 %v807, %v811
        %v817 = vmul.f32 %v808, %v811
        %v818 = vmul.f32 %v809, %v811
        %v819 = vmul.f32 %v810, %v811
        %v820 = vsub.f32 %v812, 0.5
        %v821 = vsub.f32 %v813, 0.5
        %v822 = vsub.f32 %v814, 0.5
        %v823 = vsub.f32 %v815, 0.5
        %v824 = vsub.f32 %v816, 0.5
        %v825 = vsub.f32 %v817, 0.5
        %v826 = vsub.f32 %v818, 0.5
        %v827 = vsub.f32 %v819, 0.5
        %v828 = vmul.f32 %v527, %v795
        %v829 = vmul.f32 %v528, %v796
        %v830 = vmul.f32 %v529, %v797
        %v831 = vmul.f32 %v530, %v798
        %v832 = vmul.f32 %v531, %v799
        %v833 = vmul.f32 %v532, %v800
        %v834 = vmul.f32 %v533, %v801
        %v835 = vmul.f32 %v534, %v802
        %v836 = vstv %s292
        %v837 = vmul.f32 %v828, %v836
        %v838 = vmul.f32 %v829, %v836
        %v839 = vmul.f32 %v830, %v836
        %v840 = vmul.f32 %v831, %v836
        %v841 = vmul.f32 %v832, %v836
        %v842 = vmul.f32 %v833, %v836
        %v843 = vmul.f32 %v834, %v836
        %v844 = vmul.f32 %v835, %v836
        %v845 = vsub.f32 %v837, 0.5
        %v846 = vsub.f32 %v838, 0.5
        %v847 = vsub.f32 %v839, 0.5
        %v848 = vsub.f32 %v840, 0.5
        %v849 = vsub.f32 %v841, 0.5
        %v850 = vsub.f32 %v842, 0.5
        %v851 = vsub.f32 %v843, 0.5
        %v852 = vsub.f32 %v844, 0.5
        %v853 = vmul.f32 %v643, 1.1428572
        %v854 = vmul.f32 %v644, 1.1428572
        %v855 = vmul.f32 %v645, 1.1428572
        %v856 = vmul.f32 %v646, 1.1428572
        %v857 = vmul.f32 %v647, 1.1428572
        %v858 = vmul.f32 %v648, 1.1428572
        %v859 = vmul.f32 %v649, 1.1428572
        %v860 = vmul.f32 %v650, 1.1428572
        %v861 = vstv %s294
        %v862 = vsub.f32 %v853, %v861
        %v863 = vsub.f32 %v854, %v861
        %v864 = vsub.f32 %v855, %v861
        %v865 = vsub.f32 %v856, %v861
        %v866 = vsub.f32 %v857, %v861
        %v867 = vsub.f32 %v858, %v861
        %v868 = vsub.f32 %v859, %v861
        %v869 = vsub.f32 %v860, %v861
        %vm870 = vweird.f32 %v820
        %vm871 = vweird.f32 %v821
        %vm872 = vweird.f32 %v822
        %vm873 = vweird.f32 %v823
        %vm874 = vweird.f32 %v824
        %vm875 = vweird.f32 %v825
        %vm876 = vweird.f32 %v826
        %vm877 = vweird.f32 %v827
        %vm878 = vmxor %vm870, 1
        %vm879 = vmxor %vm871, 1
        %vm880 = vmxor %vm872, 1
        %vm881 = vmxor %vm873, 1
        %vm882 = vmxor %vm874, 1
        %vm883 = vmxor %vm875, 1
        %vm884 = vmxor %vm876, 1
        %vm885 = vmxor %vm877, 1
        %v886 = vsel %vm878, %v820, -32.0
        %v887 = vsel %vm879, %v821, -32.0
        %v888 = vsel %vm880, %v822, -32.0
        %v889 = vsel %vm881, %v823, -32.0
        %v890 = vsel %vm882, %v824, -32.0
        %v891 = vsel %vm883, %v825, -32.0
        %v892 = vsel %vm884, %v826, -32.0
        %v893 = vsel %vm885, %v827, -32.0
        %vm894 = vweird.f32 %v845
        %vm895 = vweird.f32 %v846
        %vm896 = vweird.f32 %v847
        %vm897 = vweird.f32 %v848
        %vm898 = vweird.f32 %v849
        %vm899 = vweird.f32 %v850
        %vm900 = vweird.f32 %v851
        %vm901 = vweird.f32 %v852
        %vm902 = vmxor %vm894, 1
        %vm903 = vmxor %vm895, 1
        %vm904 = vmxor %vm896, 1
        %vm905 = vmxor %vm897, 1
        %vm906 = vmxor %vm898, 1
        %vm907 = vmxor %vm899, 1
        %vm908 = vmxor %vm900, 1
        %vm909 = vmxor %vm901, 1
        %v910 = vsel %vm902, %v845, -32.0
        %v911 = vsel %vm903, %v846, -32.0
        %v912 = vsel %vm904, %v847, -32.0
        %v913 = vsel %vm905, %v848, -32.0
        %v914 = vsel %vm906, %v849, -32.0
        %v915 = vsel %vm907, %v850, -32.0
        %v916 = vsel %vm908, %v851, -32.0
        %v917 = vsel %vm909, %v852, -32.0
        %vm918 = vweird.f32 %v862
        %vm919 = vweird.f32 %v863
        %vm920 = vweird.f32 %v864
        %vm921 = vweird.f32 %v865
        %vm922 = vweird.f32 %v866
        %vm923 = vweird.f32 %v867
        %vm924 = vweird.f32 %v868
        %vm925 = vweird.f32 %v869
        %vm926 = vmxor %vm918, 1
        %vm927 = vmxor %vm919, 1
        %vm928 = vmxor %vm920, 1
        %vm929 = vmxor %vm921, 1
        %vm930 = vmxor %vm922, 1
        %vm931 = vmxor %vm923, 1
        %vm932 = vmxor %vm924, 1
        %vm933 = vmxor %vm925, 1
        %v934 = vsel %vm926, %v862, -16.0
        %v935 = vsel %vm927, %v863, -16.0
        %v936 = vsel %vm928, %v864, -16.0
        %v937 = vsel %vm929, %v865, -16.0
        %v938 = vsel %vm930, %v866, -16.0
        %v939 = vsel %vm931, %v867, -16.0
        %v940 = vsel %vm932, %v868, -16.0
        %v941 = vsel %vm933, %v869, -16.0
        %v942 = vlaneseq
        %v943 = vshrl.u32 %v942, 7
        %v944 = vadd.s32 %v943, 8
        %v945 = vcvt.s32.f32 %v943
        %v946 = vcvt.s32.f32 %v944
        %v955 = vperm.slane %v886, 0
        %v956 = vperm.slane %v886, 4
        %v957 = vperm.slane %v887, 0
        %v958 = vperm.slane %v887, 4
        %v959 = vperm.slane %v888, 0
        %v960 = vperm.slane %v888, 4
        %v961 = vperm.slane %v889, 0
        %v962 = vperm.slane %v889, 4
        %v963 = vperm.slane %v890, 0
        %v964 = vperm.slane %v890, 4
        %v965 = vperm.slane %v891, 0
        %v966 = vperm.slane %v891, 4
        %v967 = vperm.slane %v892, 0
        %v968 = vperm.slane %v892, 4
        %v969 = vperm.slane %v893, 0
        %v970 = vperm.slane %v893, 4
        %v987 = vperm.slane %v955, 0
        %v988 = vperm.slane %v956, 0
        %v989 = vperm.slane %v957, 0
        %v990 = vperm.slane %v958, 0
        %v991 = vperm.slane %v959, 0
        %v992 = vperm.slane %v960, 0
        %v993 = vperm.slane %v961, 0
        %v994 = vperm.slane %v962, 0
        %v995 = vperm.slane %v963, 0
        %v996 = vperm.slane %v964, 0
        %v997 = vperm.slane %v965, 0
        %v998 = vperm.slane %v966, 0
        %v999 = vperm.slane %v967, 0
        %v1000 = vperm.slane %v968, 0
        %v1001 = vperm.slane %v969, 0
        %v1002 = vperm.slane %v970, 0
        %v1003 = vsub.f32 %v945, %v987
        %v1004 = vsub.f32 %v945, %v988
        %v1005 = vsub.f32 %v945, %v989
        %v1006 = vsub.f32 %v945, %v990
        %v1007 = vsub.f32 %v945, %v991
        %v1008 = vsub.f32 %v945, %v992
        %v1009 = vsub.f32 %v945, %v993
        %v1010 = vsub.f32 %v945, %v994
        %v1011 = vsub.f32 %v945, %v995
        %v1012 = vsub.f32 %v945, %v996
        %v1013 = vsub.f32 %v945, %v997
        %v1014 = vsub.f32 %v945, %v998
        %v1015 = vsub.f32 %v945, %v999
        %v1016 = vsub.f32 %v945, %v1000
        %v1017 = vsub.f32 %v945, %v1001
        %v1018 = vsub.f32 %v945, %v1002
        %v1019 = vsub.f32 %v946, %v987
        %v1020 = vsub.f32 %v946, %v988
        %v1021 = vsub.f32 %v946, %v989
        %v1022 = vsub.f32 %v946, %v990
        %v1023 = vsub.f32 %v946, %v991
        %v1024 = vsub.f32 %v946, %v992
        %v1025 = vsub.f32 %v946, %v993
        %v1026 = vsub.f32 %v946, %v994
        %v1027 = vsub.f32 %v946, %v995
        %v1028 = vsub.f32 %v946, %v996
        %v1029 = vsub.f32 %v946, %v997
        %v1030 = vsub.f32 %v946, %v998
        %v1031 = vsub.f32 %v946, %v999
        %v1032 = vsub.f32 %v946, %v1000
        %v1033 = vsub.f32 %v946, %v1001
        %v1034 = vsub.f32 %v946, %v1002
        %v1035 = vand.u32 2147483647, %v1003
        %v1036 = vand.u32 2147483647, %v1004
        %v1037 = vand.u32 2147483647, %v1005
        %v1038 = vand.u32 2147483647, %v1006
        %v1039 = vand.u32 2147483647, %v1007
        %v1040 = vand.u32 2147483647, %v1008
        %v1041 = vand.u32 2147483647, %v1009
        %v1042 = vand.u32 2147483647, %v1010
        %v1043 = vand.u32 2147483647, %v1011
        %v1044 = vand.u32 2147483647, %v1012
        %v1045 = vand.u32 2147483647, %v1013
        %v1046 = vand.u32 2147483647, %v1014
        %v1047 = vand.u32 2147483647, %v1015
        %v1048 = vand.u32 2147483647, %v1016
        %v1049 = vand.u32 2147483647, %v1017
        %v1050 = vand.u32 2147483647, %v1018
        %v1051 = vand.u32 2147483647, %v1019
        %v1052 = vand.u32 2147483647, %v1020
        %v1053 = vand.u32 2147483647, %v1021
        %v1054 = vand.u32 2147483647, %v1022
        %v1055 = vand.u32 2147483647, %v1023
        %v1056 = vand.u32 2147483647, %v1024
        %v1057 = vand.u32 2147483647, %v1025
        %v1058 = vand.u32 2147483647, %v1026
        %v1059 = vand.u32 2147483647, %v1027
        %v1060 = vand.u32 2147483647, %v1028
        %v1061 = vand.u32 2147483647, %v1029
        %v1062 = vand.u32 2147483647, %v1030
        %v1063 = vand.u32 2147483647, %v1031
        %v1064 = vand.u32 2147483647, %v1032
        %v1065 = vand.u32 2147483647, %v1033
        %v1066 = vand.u32 2147483647, %v1034
        %v1067 = vsub.f32 1.0, %v1035
        %v1068 = vsub.f32 1.0, %v1036
        %v1069 = vsub.f32 1.0, %v1037
        %v1070 = vsub.f32 1.0, %v1038
        %v1071 = vsub.f32 1.0, %v1039
        %v1072 = vsub.f32 1.0, %v1040
        %v1073 = vsub.f32 1.0, %v1041
        %v1074 = vsub.f32 1.0, %v1042
        %v1075 = vsub.f32 1.0, %v1043
        %v1076 = vsub.f32 1.0, %v1044
        %v1077 = vsub.f32 1.0, %v1045
        %v1078 = vsub.f32 1.0, %v1046
        %v1079 = vsub.f32 1.0, %v1047
        %v1080 = vsub.f32 1.0, %v1048
        %v1081 = vsub.f32 1.0, %v1049
        %v1082 = vsub.f32 1.0, %v1050
        %v1083 = vsub.f32 1.0, %v1051
        %v1084 = vsub.f32 1.0, %v1052
        %v1085 = vsub.f32 1.0, %v1053
        %v1086 = vsub.f32 1.0, %v1054
        %v1087 = vsub.f32 1.0, %v1055
        %v1088 = vsub.f32 1.0, %v1056
        %v1089 = vsub.f32 1.0, %v1057
        %v1090 = vsub.f32 1.0, %v1058
        %v1091 = vsub.f32 1.0, %v1059
        %v1092 = vsub.f32 1.0, %v1060
        %v1093 = vsub.f32 1.0, %v1061
        %v1094 = vsub.f32 1.0, %v1062
        %v1095 = vsub.f32 1.0, %v1063
        %v1096 = vsub.f32 1.0, %v1064
        %v1097 = vsub.f32 1.0, %v1065
        %v1098 = vsub.f32 1.0, %v1066
        %v1099 = vmax.f32 %v1067, 0.0
        %v1100 = vmax.f32 %v1068, 0.0
        %v1101 = vmax.f32 %v1069, 0.0
        %v1102 = vmax.f32 %v1070, 0.0
        %v1103 = vmax.f32 %v1071, 0.0
        %v1104 = vmax.f32 %v1072, 0.0
        %v1105 = vmax.f32 %v1073, 0.0
        %v1106 = vmax.f32 %v1074, 0.0
        %v1107 = vmax.f32 %v1075, 0.0
        %v1108 = vmax.f32 %v1076, 0.0
        %v1109 = vmax.f32 %v1077, 0.0
        %v1110 = vmax.f32 %v1078, 0.0
        %v1111 = vmax.f32 %v1079, 0.0
        %v1112 = vmax.f32 %v1080, 0.0
        %v1113 = vmax.f32 %v1081, 0.0
        %v1114 = vmax.f32 %v1082, 0.0
        %v1115 = vmax.f32 %v1083, 0.0
        %v1116 = vmax.f32 %v1084, 0.0
        %v1117 = vmax.f32 %v1085, 0.0
        %v1118 = vmax.f32 %v1086, 0.0
        %v1119 = vmax.f32 %v1087, 0.0
        %v1120 = vmax.f32 %v1088, 0.0
        %v1121 = vmax.f32 %v1089, 0.0
        %v1122 = vmax.f32 %v1090, 0.0
        %v1123 = vmax.f32 %v1091, 0.0
        %v1124 = vmax.f32 %v1092, 0.0
        %v1125 = vmax.f32 %v1093, 0.0
        %v1126 = vmax.f32 %v1094, 0.0
        %v1127 = vmax.f32 %v1095, 0.0
        %v1128 = vmax.f32 %v1096, 0.0
        %v1129 = vmax.f32 %v1097, 0.0
        %v1130 = vmax.f32 %v1098, 0.0
        %v1139 = vperm.slane %v910, 0
        %v1140 = vperm.slane %v910, 4
        %v1141 = vperm.slane %v911, 0
        %v1142 = vperm.slane %v911, 4
        %v1143 = vperm.slane %v912, 0
        %v1144 = vperm.slane %v912, 4
        %v1145 = vperm.slane %v913, 0
        %v1146 = vperm.slane %v913, 4
        %v1147 = vperm.slane %v914, 0
        %v1148 = vperm.slane %v914, 4
        %v1149 = vperm.slane %v915, 0
        %v1150 = vperm.slane %v915, 4
        %v1151 = vperm.slane %v916, 0
        %v1152 = vperm.slane %v916, 4
        %v1153 = vperm.slane %v917, 0
        %v1154 = vperm.slane %v917, 4
        %v1171 = vperm.slane %v1139, 0
        %v1172 = vperm.slane %v1140, 0
        %v1173 = vperm.slane %v1141, 0
        %v1174 = vperm.slane %v1142, 0
        %v1175 = vperm.slane %v1143, 0
        %v1176 = vperm.slane %v1144, 0
        %v1177 = vperm.slane %v1145, 0
        %v1178 = vperm.slane %v1146, 0
        %v1179 = vperm.slane %v1147, 0
        %v1180 = vperm.slane %v1148, 0
        %v1181 = vperm.slane %v1149, 0
        %v1182 = vperm.slane %v1150, 0
        %v1183 = vperm.slane %v1151, 0
        %v1184 = vperm.slane %v1152, 0
        %v1185 = vperm.slane %v1153, 0
        %v1186 = vperm.slane %v1154, 0
        %v1187 = vsub.f32 %v945, %v1171
        %v1188 = vsub.f32 %v945, %v1172
        %v1189 = vsub.f32 %v945, %v1173
        %v1190 = vsub.f32 %v945, %v1174
        %v1191 = vsub.f32 %v945, %v1175
        %v1192 = vsub.f32 %v945, %v1176
        %v1193 = vsub.f32 %v945, %v1177
        %v1194 = vsub.f32 %v945, %v1178
        %v1195 = vsub.f32 %v945, %v1179
        %v1196 = vsub.f32 %v945, %v1180
        %v1197 = vsub.f32 %v945, %v1181
        %v1198 = vsub.f32 %v945, %v1182
        %v1199 = vsub.f32 %v945, %v1183
        %v1200 = vsub.f32 %v945, %v1184
        %v1201 = vsub.f32 %v945, %v1185
        %v1202 = vsub.f32 %v945, %v1186
        %v1203 = vsub.f32 %v946, %v1171
        %v1204 = vsub.f32 %v946, %v1172
        %v1205 = vsub.f32 %v946, %v1173
        %v1206 = vsub.f32 %v946, %v1174
        %v1207 = vsub.f32 %v946, %v1175
        %v1208 = vsub.f32 %v946, %v1176
        %v1209 = vsub.f32 %v946, %v1177
        %v1210 = vsub.f32 %v946, %v1178
        %v1211 = vsub.f32 %v946, %v1179
        %v1212 = vsub.f32 %v946, %v1180
        %v1213 = vsub.f32 %v946, %v1181
        %v1214 = vsub.f32 %v946, %v1182
        %v1215 = vsub.f32 %v946, %v1183
        %v1216 = vsub.f32 %v946, %v1184
        %v1217 = vsub.f32 %v946, %v1185
        %v1218 = vsub.f32 %v946, %v1186
        %v1219 = vand.u32 2147483647, %v1187
        %v1220 = vand.u32 2147483647, %v1188
        %v1221 = vand.u32 2147483647, %v1189
        %v1222 = vand.u32 2147483647, %v1190
        %v1223 = vand.u32 2147483647, %v1191
        %v1224 = vand.u32 2147483647, %v1192
        %v1225 = vand.u32 2147483647, %v1193
        %v1226 = vand.u32 2147483647, %v1194
        %v1227 = vand.u32 2147483647, %v1195
        %v1228 = vand.u32 2147483647, %v1196
        %v1229 = vand.u32 2147483647, %v1197
        %v1230 = vand.u32 2147483647, %v1198
        %v1231 = vand.u32 2147483647, %v1199
        %v1232 = vand.u32 2147483647, %v1200
        %v1233 = vand.u32 2147483647, %v1201
        %v1234 = vand.u32 2147483647, %v1202
        %v1235 = vand.u32 2147483647, %v1203
        %v1236 = vand.u32 2147483647, %v1204
        %v1237 = vand.u32 2147483647, %v1205
        %v1238 = vand.u32 2147483647, %v1206
        %v1239 = vand.u32 2147483647, %v1207
        %v1240 = vand.u32 2147483647, %v1208
        %v1241 = vand.u32 2147483647, %v1209
        %v1242 = vand.u32 2147483647, %v1210
        %v1243 = vand.u32 2147483647, %v1211
        %v1244 = vand.u32 2147483647, %v1212
        %v1245 = vand.u32 2147483647, %v1213
        %v1246 = vand.u32 2147483647, %v1214
        %v1247 = vand.u32 2147483647, %v1215
        %v1248 = vand.u32 2147483647, %v1216
        %v1249 = vand.u32 2147483647, %v1217
        %v1250 = vand.u32 2147483647, %v1218
        %v1251 = vsub.f32 1.0, %v1219
        %v1252 = vsub.f32 1.0, %v1220
        %v1253 = vsub.f32 1.0, %v1221
        %v1254 = vsub.f32 1.0, %v1222
        %v1255 = vsub.f32 1.0, %v1223
        %v1256 = vsub.f32 1.0, %v1224
        %v1257 = vsub.f32 1.0, %v1225
        %v1258 = vsub.f32 1.0, %v1226
        %v1259 = vsub.f32 1.0, %v1227
        %v1260 = vsub.f32 1.0, %v1228
        %v1261 = vsub.f32 1.0, %v1229
        %v1262 = vsub.f32 1.0, %v1230
        %v1263 = vsub.f32 1.0, %v1231
        %v1264 = vsub.f32 1.0, %v1232
        %v1265 = vsub.f32 1.0, %v1233
        %v1266 = vsub.f32 1.0, %v1234
        %v1267 = vsub.f32 1.0, %v1235
        %v1268 = vsub.f32 1.0, %v1236
        %v1269 = vsub.f32 1.0, %v1237
        %v1270 = vsub.f32 1.0, %v1238
        %v1271 = vsub.f32 1.0, %v1239
        %v1272 = vsub.f32 1.0, %v1240
        %v1273 = vsub.f32 1.0, %v1241
        %v1274 = vsub.f32 1.0, %v1242
        %v1275 = vsub.f32 1.0, %v1243
        %v1276 = vsub.f32 1.0, %v1244
        %v1277 = vsub.f32 1.0, %v1245
        %v1278 = vsub.f32 1.0, %v1246
        %v1279 = vsub.f32 1.0, %v1247
        %v1280 = vsub.f32 1.0, %v1248
        %v1281 = vsub.f32 1.0, %v1249
        %v1282 = vsub.f32 1.0, %v1250
        %v1283 = vmax.f32 %v1251, 0.0
        %v1284 = vmax.f32 %v1252, 0.0
        %v1285 = vmax.f32 %v1253, 0.0
        %v1286 = vmax.f32 %v1254, 0.0
        %v1287 = vmax.f32 %v1255, 0.0
        %v1288 = vmax.f32 %v1256, 0.0
        %v1289 = vmax.f32 %v1257, 0.0
        %v1290 = vmax.f32 %v1258, 0.0
        %v1291 = vmax.f32 %v1259, 0.0
        %v1292 = vmax.f32 %v1260, 0.0
        %v1293 = vmax.f32 %v1261, 0.0
        %v1294 = vmax.f32 %v1262, 0.0
        %v1295 = vmax.f32 %v1263, 0.0
        %v1296 = vmax.f32 %v1264, 0.0
        %v1297 = vmax.f32 %v1265, 0.0
        %v1298 = vmax.f32 %v1266, 0.0
        %v1299 = vmax.f32 %v1267, 0.0
        %v1300 = vmax.f32 %v1268, 0.0
        %v1301 = vmax.f32 %v1269, 0.0
        %v1302 = vmax.f32 %v1270, 0.0
        %v1303 = vmax.f32 %v1271, 0.0
        %v1304 = vmax.f32 %v1272, 0.0
        %v1305 = vmax.f32 %v1273, 0.0
        %v1306 = vmax.f32 %v1274, 0.0
        %v1307 = vmax.f32 %v1275, 0.0
        %v1308 = vmax.f32 %v1276, 0.0
        %v1309 = vmax.f32 %v1277, 0.0
        %v1310 = vmax.f32 %v1278, 0.0
        %v1311 = vmax.f32 %v1279, 0.0
        %v1312 = vmax.f32 %v1280, 0.0
        %v1313 = vmax.f32 %v1281, 0.0
        %v1314 = vmax.f32 %v1282, 0.0
        %v1323 = vperm.slane %v934, 0
        %v1324 = vperm.slane %v934, 4
        %v1325 = vperm.slane %v935, 0
        %v1326 = vperm.slane %v935, 4
        %v1327 = vperm.slane %v936, 0
        %v1328 = vperm.slane %v936, 4
        %v1329 = vperm.slane %v937, 0
        %v1330 = vperm.slane %v937, 4
        %v1331 = vperm.slane %v938, 0
        %v1332 = vperm.slane %v938, 4
        %v1333 = vperm.slane %v939, 0
        %v1334 = vperm.slane %v939, 4
        %v1335 = vperm.slane %v940, 0
        %v1336 = vperm.slane %v940, 4
        %v1337 = vperm.slane %v941, 0
        %v1338 = vperm.slane %v941, 4
        %v1355 = vperm.slane %v1323, 0
        %v1356 = vperm.slane %v1324, 0
        %v1357 = vperm.slane %v1325, 0
        %v1358 = vperm.slane %v1326, 0
        %v1359 = vperm.slane %v1327, 0
        %v1360 = vperm.slane %v1328, 0
        %v1361 = vperm.slane %v1329, 0
        %v1362 = vperm.slane %v1330, 0
        %v1363 = vperm.slane %v1331, 0
        %v1364 = vperm.slane %v1332, 0
        %v1365 = vperm.slane %v1333, 0
        %v1366 = vperm.slane %v1334, 0
        %v1367 = vperm.slane %v1335, 0
        %v1368 = vperm.slane %v1336, 0
        %v1369 = vperm.slane %v1337, 0
        %v1370 = vperm.slane %v1338, 0
        %v1371 = vsub.f32 %v945, %v1355
        %v1372 = vsub.f32 %v945, %v1356
        %v1373 = vsub.f32 %v945, %v1357
        %v1374 = vsub.f32 %v945, %v1358
        %v1375 = vsub.f32 %v945, %v1359
        %v1376 = vsub.f32 %v945, %v1360
        %v1377 = vsub.f32 %v945, %v1361
        %v1378 = vsub.f32 %v945, %v1362
        %v1379 = vsub.f32 %v945, %v1363
        %v1380 = vsub.f32 %v945, %v1364
        %v1381 = vsub.f32 %v945, %v1365
        %v1382 = vsub.f32 %v945, %v1366
        %v1383 = vsub.f32 %v945, %v1367
        %v1384 = vsub.f32 %v945, %v1368
        %v1385 = vsub.f32 %v945, %v1369
        %v1386 = vsub.f32 %v945, %v1370
        %v1387 = vand.u32 2147483647, %v1371
        %v1388 = vand.u32 2147483647, %v1372
        %v1389 = vand.u32 2147483647, %v1373
        %v1390 = vand.u32 2147483647, %v1374
        %v1391 = vand.u32 2147483647, %v1375
        %v1392 = vand.u32 2147483647, %v1376
        %v1393 = vand.u32 2147483647, %v1377
        %v1394 = vand.u32 2147483647, %v1378
        %v1395 = vand.u32 2147483647, %v1379
        %v1396 = vand.u32 2147483647, %v1380
        %v1397 = vand.u32 2147483647, %v1381
        %v1398 = vand.u32 2147483647, %v1382
        %v1399 = vand.u32 2147483647, %v1383
        %v1400 = vand.u32 2147483647, %v1384
        %v1401 = vand.u32 2147483647, %v1385
        %v1402 = vand.u32 2147483647, %v1386
        %v1403 = vsub.f32 1.0, %v1387
        %v1404 = vsub.f32 1.0, %v1388
        %v1405 = vsub.f32 1.0, %v1389
        %v1406 = vsub.f32 1.0, %v1390
        %v1407 = vsub.f32 1.0, %v1391
        %v1408 = vsub.f32 1.0, %v1392
        %v1409 = vsub.f32 1.0, %v1393
        %v1410 = vsub.f32 1.0, %v1394
        %v1411 = vsub.f32 1.0, %v1395
        %v1412 = vsub.f32 1.0, %v1396
        %v1413 = vsub.f32 1.0, %v1397
        %v1414 = vsub.f32 1.0, %v1398
        %v1415 = vsub.f32 1.0, %v1399
        %v1416 = vsub.f32 1.0, %v1400
        %v1417 = vsub.f32 1.0, %v1401
        %v1418 = vsub.f32 1.0, %v1402
        %v1419 = vmax.f32 %v1403, 0.0
        %v1420 = vmax.f32 %v1404, 0.0
        %v1421 = vmax.f32 %v1405, 0.0
        %v1422 = vmax.f32 %v1406, 0.0
        %v1423 = vmax.f32 %v1407, 0.0
        %v1424 = vmax.f32 %v1408, 0.0
        %v1425 = vmax.f32 %v1409, 0.0
        %v1426 = vmax.f32 %v1410, 0.0
        %v1427 = vmax.f32 %v1411, 0.0
        %v1428 = vmax.f32 %v1412, 0.0
        %v1429 = vmax.f32 %v1413, 0.0
        %v1430 = vmax.f32 %v1414, 0.0
        %v1431 = vmax.f32 %v1415, 0.0
        %v1432 = vmax.f32 %v1416, 0.0
        %v1433 = vmax.f32 %v1417, 0.0
        %v1434 = vmax.f32 %v1418, 0.0
        %v1435 = vld [vmem:[%s239] sm:$0xff]
        %v1436 = vld [vmem:[%s239 + $0x8] sm:$0xff]
        %v1437 = vld [vmem:[%s239 + $0x10] sm:$0xff]
        %v1438 = vld [vmem:[%s239 + $0x18] sm:$0xff]
        %v1439 = vld [vmem:[%s239 + $0x20] sm:$0xff]
        %v1440 = vld [vmem:[%s239 + $0x28] sm:$0xff]
        %v1441 = vld [vmem:[%s239 + $0x30] sm:$0xff]
        %v1442 = vld [vmem:[%s239 + $0x38] sm:$0xff]
        %v1443 = vld [vmem:[%s239 + $0x40] sm:$0xff]
        %v1444 = vld [vmem:[%s239 + $0x48] sm:$0xff]
        %v1445 = vld [vmem:[%s239 + $0x50] sm:$0xff]
        %v1446 = vld [vmem:[%s239 + $0x58] sm:$0xff]
        %v1447 = vld [vmem:[%s239 + $0x60] sm:$0xff]
        %v1448 = vld [vmem:[%s239 + $0x68] sm:$0xff]
        %v1449 = vld [vmem:[%s239 + $0x70] sm:$0xff]
        %v1450 = vld [vmem:[%s239 + $0x78] sm:$0xff]
        %vm1451 = vcmask 130048
        %v1453 = vsel %vm1451, %v1435, 0
        %v1456 = vsel %vm1451, %v1436, 0
        %v1459 = vsel %vm1451, %v1437, 0
        %v1462 = vsel %vm1451, %v1438, 0
        %v1465 = vsel %vm1451, %v1439, 0
        %v1468 = vsel %vm1451, %v1440, 0
        %v1471 = vsel %vm1451, %v1441, 0
        %v1474 = vsel %vm1451, %v1442, 0
        %v1477 = vsel %vm1451, %v1443, 0
        %v1480 = vsel %vm1451, %v1444, 0
        %v1483 = vsel %vm1451, %v1445, 0
        %v1486 = vsel %vm1451, %v1446, 0
        %v1489 = vsel %vm1451, %v1447, 0
        %v1492 = vsel %vm1451, %v1448, 0
        %v1495 = vsel %vm1451, %v1449, 0
        %v1498 = vsel %vm1451, %v1450, 0
        %1500 = vmatpush.msra.mxu0 0.0
        %1501 = vmatpush.msra.mxu0 0.0
        %1502 = vmatpush.msra.mxu0 0.0
        %1503 = vmatpush.msra.mxu0 0.0
        %1504 = vmatpush.msra.mxu0 0.0
        %1505 = vmatpush.msra.mxu0 0.0
        %1506 = vmatpush.msra.mxu0 0.0
        %1507 = vmatpush.msra.mxu0 0.0
        %1508 = vmatpush.msra.mxu0 0.0
        %1509 = vmatpush.msra.mxu0 0.0
        %1510 = vmatpush.msra.mxu0 0.0
        %1511 = vmatpush.msra.mxu0 0.0
        %1512 = vmatpush.msra.mxu0 0.0
        %1513 = vmatpush.msra.mxu0 0.0
        %1514 = vmatpush.msra.mxu0 %v1115
        %1515 = vmatpush.msra.mxu0 %v1099
        %1516 = vmatmul.f32.gmra.mxu0 %v1453
        %v1517 = vpop.f32.mrf.mxu0
        %v1518 = vadd.f32 0.0, %v1517
        %1519 = vmatmul.f32.gmra.mxu0 %v1456
        %v1520 = vpop.f32.mrf.mxu0
        %v1521 = vadd.f32 0.0, %v1520
        %1522 = vmatmul.f32.gmra.mxu0 %v1459
        %v1523 = vpop.f32.mrf.mxu0
        %v1524 = vadd.f32 0.0, %v1523
        %1525 = vmatmul.f32.gmra.mxu0 %v1462
        %v1526 = vpop.f32.mrf.mxu0
        %v1527 = vadd.f32 0.0, %v1526
        %1528 = vmatmul.f32.gmra.mxu0 %v1465
        %v1529 = vpop.f32.mrf.mxu0
        %v1530 = vadd.f32 0.0, %v1529
        %1531 = vmatmul.f32.gmra.mxu0 %v1468
        %v1532 = vpop.f32.mrf.mxu0
        %v1533 = vadd.f32 0.0, %v1532
        %1534 = vmatmul.f32.gmra.mxu0 %v1471
        %v1535 = vpop.f32.mrf.mxu0
        %v1536 = vadd.f32 0.0, %v1535
        %1537 = vmatmul.f32.gmra.mxu0 %v1474
        %v1538 = vpop.f32.mrf.mxu0
        %v1539 = vadd.f32 0.0, %v1538
        %1540 = vmatmul.f32.gmra.mxu0 %v1477
        %v1541 = vpop.f32.mrf.mxu0
        %v1542 = vadd.f32 0.0, %v1541
        %1543 = vmatmul.f32.gmra.mxu0 %v1480
        %v1544 = vpop.f32.mrf.mxu0
        %v1545 = vadd.f32 0.0, %v1544
        %1546 = vmatmul.f32.gmra.mxu0 %v1483
        %v1547 = vpop.f32.mrf.mxu0
        %v1548 = vadd.f32 0.0, %v1547
        %1549 = vmatmul.f32.gmra.mxu0 %v1486
        %v1550 = vpop.f32.mrf.mxu0
        %v1551 = vadd.f32 0.0, %v1550
        %1552 = vmatmul.f32.gmra.mxu0 %v1489
        %v1553 = vpop.f32.mrf.mxu0
        %v1554 = vadd.f32 0.0, %v1553
        %1555 = vmatmul.f32.gmra.mxu0 %v1492
        %v1556 = vpop.f32.mrf.mxu0
        %v1557 = vadd.f32 0.0, %v1556
        %1558 = vmatmul.f32.gmra.mxu0 %v1495
        %v1559 = vpop.f32.mrf.mxu0
        %v1560 = vadd.f32 0.0, %v1559
        %1561 = vmatmul.f32.gmra.mxu0 %v1498
        %v1562 = vpop.f32.mrf.mxu0
        %v1563 = vadd.f32 0.0, %v1562
        %1564 = vdwg.mxu0
        %1565 = vmatpush.msra.mxu0 0.0
        %1566 = vmatpush.msra.mxu0 0.0
        %1567 = vmatpush.msra.mxu0 0.0
        %1568 = vmatpush.msra.mxu0 0.0
        %1569 = vmatpush.msra.mxu0 0.0
        %1570 = vmatpush.msra.mxu0 0.0
        %1571 = vmatpush.msra.mxu0 0.0
        %1572 = vmatpush.msra.mxu0 0.0
        %1573 = vmatpush.msra.mxu0 0.0
        %1574 = vmatpush.msra.mxu0 0.0
        %1575 = vmatpush.msra.mxu0 0.0
        %1576 = vmatpush.msra.mxu0 0.0
        %1577 = vmatpush.msra.mxu0 0.0
        %1578 = vmatpush.msra.mxu0 0.0
        %1579 = vmatpush.msra.mxu0 %v1116
        %1580 = vmatpush.msra.mxu0 %v1100
        %1581 = vmatmul.f32.gmra.mxu0 %v1453
        %v1582 = vpop.f32.mrf.mxu0
        %v1583 = vadd.f32 0.0, %v1582
        %1584 = vmatmul.f32.gmra.mxu0 %v1456
        %v1585 = vpop.f32.mrf.mxu0
        %v1586 = vadd.f32 0.0, %v1585
        %1587 = vmatmul.f32.gmra.mxu0 %v1459
        %v1588 = vpop.f32.mrf.mxu0
        %v1589 = vadd.f32 0.0, %v1588
        %1590 = vmatmul.f32.gmra.mxu0 %v1462
        %v1591 = vpop.f32.mrf.mxu0
        %v1592 = vadd.f32 0.0, %v1591
        %1593 = vmatmul.f32.gmra.mxu0 %v1465
        %v1594 = vpop.f32.mrf.mxu0
        %v1595 = vadd.f32 0.0, %v1594
        %1596 = vmatmul.f32.gmra.mxu0 %v1468
        %v1597 = vpop.f32.mrf.mxu0
        %v1598 = vadd.f32 0.0, %v1597
        %1599 = vmatmul.f32.gmra.mxu0 %v1471
        %v1600 = vpop.f32.mrf.mxu0
        %v1601 = vadd.f32 0.0, %v1600
        %1602 = vmatmul.f32.gmra.mxu0 %v1474
        %v1603 = vpop.f32.mrf.mxu0
        %v1604 = vadd.f32 0.0, %v1603
        %1605 = vmatmul.f32.gmra.mxu0 %v1477
        %v1606 = vpop.f32.mrf.mxu0
        %v1607 = vadd.f32 0.0, %v1606
        %1608 = vmatmul.f32.gmra.mxu0 %v1480
        %v1609 = vpop.f32.mrf.mxu0
        %v1610 = vadd.f32 0.0, %v1609
        %1611 = vmatmul.f32.gmra.mxu0 %v1483
        %v1612 = vpop.f32.mrf.mxu0
        %v1613 = vadd.f32 0.0, %v1612
        %1614 = vmatmul.f32.gmra.mxu0 %v1486
        %v1615 = vpop.f32.mrf.mxu0
        %v1616 = vadd.f32 0.0, %v1615
        %1617 = vmatmul.f32.gmra.mxu0 %v1489
        %v1618 = vpop.f32.mrf.mxu0
        %v1619 = vadd.f32 0.0, %v1618
        %1620 = vmatmul.f32.gmra.mxu0 %v1492
        %v1621 = vpop.f32.mrf.mxu0
        %v1622 = vadd.f32 0.0, %v1621
        %1623 = vmatmul.f32.gmra.mxu0 %v1495
        %v1624 = vpop.f32.mrf.mxu0
        %v1625 = vadd.f32 0.0, %v1624
        %1626 = vmatmul.f32.gmra.mxu0 %v1498
        %v1627 = vpop.f32.mrf.mxu0
        %v1628 = vadd.f32 0.0, %v1627
        %1629 = vdwg.mxu0
        %1630 = vmatpush.msra.mxu0 0.0
        %1631 = vmatpush.msra.mxu0 0.0
        %1632 = vmatpush.msra.mxu0 0.0
        %1633 = vmatpush.msra.mxu0 0.0
        %1634 = vmatpush.msra.mxu0 0.0
        %1635 = vmatpush.msra.mxu0 0.0
        %1636 = vmatpush.msra.mxu0 0.0
        %1637 = vmatpush.msra.mxu0 0.0
        %1638 = vmatpush.msra.mxu0 0.0
        %1639 = vmatpush.msra.mxu0 0.0
        %1640 = vmatpush.msra.mxu0 0.0
        %1641 = vmatpush.msra.mxu0 0.0
        %1642 = vmatpush.msra.mxu0 0.0
        %1643 = vmatpush.msra.mxu0 0.0
        %1644 = vmatpush.msra.mxu0 %v1117
        %1645 = vmatpush.msra.mxu0 %v1101
        %1646 = vmatmul.f32.gmra.mxu0 %v1453
        %v1647 = vpop.f32.mrf.mxu0
        %v1648 = vadd.f32 0.0, %v1647
        %1649 = vmatmul.f32.gmra.mxu0 %v1456
        %v1650 = vpop.f32.mrf.mxu0
        %v1651 = vadd.f32 0.0, %v1650
        %1652 = vmatmul.f32.gmra.mxu0 %v1459
        %v1653 = vpop.f32.mrf.mxu0
        %v1654 = vadd.f32 0.0, %v1653
        %1655 = vmatmul.f32.gmra.mxu0 %v1462
        %v1656 = vpop.f32.mrf.mxu0
        %v1657 = vadd.f32 0.0, %v1656
        %1658 = vmatmul.f32.gmra.mxu0 %v1465
        %v1659 = vpop.f32.mrf.mxu0
        %v1660 = vadd.f32 0.0, %v1659
        %1661 = vmatmul.f32.gmra.mxu0 %v1468
        %v1662 = vpop.f32.mrf.mxu0
        %v1663 = vadd.f32 0.0, %v1662
        %1664 = vmatmul.f32.gmra.mxu0 %v1471
        %v1665 = vpop.f32.mrf.mxu0
        %v1666 = vadd.f32 0.0, %v1665
        %1667 = vmatmul.f32.gmra.mxu0 %v1474
        %v1668 = vpop.f32.mrf.mxu0
        %v1669 = vadd.f32 0.0, %v1668
        %1670 = vmatmul.f32.gmra.mxu0 %v1477
        %v1671 = vpop.f32.mrf.mxu0
        %v1672 = vadd.f32 0.0, %v1671
        %1673 = vmatmul.f32.gmra.mxu0 %v1480
        %v1674 = vpop.f32.mrf.mxu0
        %v1675 = vadd.f32 0.0, %v1674
        %1676 = vmatmul.f32.gmra.mxu0 %v1483
        %v1677 = vpop.f32.mrf.mxu0
        %v1678 = vadd.f32 0.0, %v1677
        %1679 = vmatmul.f32.gmra.mxu0 %v1486
        %v1680 = vpop.f32.mrf.mxu0
        %v1681 = vadd.f32 0.0, %v1680
        %1682 = vmatmul.f32.gmra.mxu0 %v1489
        %v1683 = vpop.f32.mrf.mxu0
        %v1684 = vadd.f32 0.0, %v1683
        %1685 = vmatmul.f32.gmra.mxu0 %v1492
        %v1686 = vpop.f32.mrf.mxu0
        %v1687 = vadd.f32 0.0, %v1686
        %1688 = vmatmul.f32.gmra.mxu0 %v1495
        %v1689 = vpop.f32.mrf.mxu0
        %v1690 = vadd.f32 0.0, %v1689
        %1691 = vmatmul.f32.gmra.mxu0 %v1498
        %v1692 = vpop.f32.mrf.mxu0
        %v1693 = vadd.f32 0.0, %v1692
        %1694 = vdwg.mxu0
        %1695 = vmatpush.msra.mxu0 0.0
        %1696 = vmatpush.msra.mxu0 0.0
        %1697 = vmatpush.msra.mxu0 0.0
        %1698 = vmatpush.msra.mxu0 0.0
        %1699 = vmatpush.msra.mxu0 0.0
        %1700 = vmatpush.msra.mxu0 0.0
        %1701 = vmatpush.msra.mxu0 0.0
        %1702 = vmatpush.msra.mxu0 0.0
        %1703 = vmatpush.msra.mxu0 0.0
        %1704 = vmatpush.msra.mxu0 0.0
        %1705 = vmatpush.msra.mxu0 0.0
        %1706 = vmatpush.msra.mxu0 0.0
        %1707 = vmatpush.msra.mxu0 0.0
        %1708 = vmatpush.msra.mxu0 0.0
        %1709 = vmatpush.msra.mxu0 %v1118
        %1710 = vmatpush.msra.mxu0 %v1102
        %1711 = vmatmul.f32.gmra.mxu0 %v1453
        %v1712 = vpop.f32.mrf.mxu0
        %v1713 = vadd.f32 0.0, %v1712
        %1714 = vmatmul.f32.gmra.mxu0 %v1456
        %v1715 = vpop.f32.mrf.mxu0
        %v1716 = vadd.f32 0.0, %v1715
        %1717 = vmatmul.f32.gmra.mxu0 %v1459
        %v1718 = vpop.f32.mrf.mxu0
        %v1719 = vadd.f32 0.0, %v1718
        %1720 = vmatmul.f32.gmra.mxu0 %v1462
        %v1721 = vpop.f32.mrf.mxu0
        %v1722 = vadd.f32 0.0, %v1721
        %1723 = vmatmul.f32.gmra.mxu0 %v1465
        %v1724 = vpop.f32.mrf.mxu0
        %v1725 = vadd.f32 0.0, %v1724
        %1726 = vmatmul.f32.gmra.mxu0 %v1468
        %v1727 = vpop.f32.mrf.mxu0
        %v1728 = vadd.f32 0.0, %v1727
        %1729 = vmatmul.f32.gmra.mxu0 %v1471
        %v1730 = vpop.f32.mrf.mxu0
        %v1731 = vadd.f32 0.0, %v1730
        %1732 = vmatmul.f32.gmra.mxu0 %v1474
        %v1733 = vpop.f32.mrf.mxu0
        %v1734 = vadd.f32 0.0, %v1733
        %1735 = vmatmul.f32.gmra.mxu0 %v1477
        %v1736 = vpop.f32.mrf.mxu0
        %v1737 = vadd.f32 0.0, %v1736
        %1738 = vmatmul.f32.gmra.mxu0 %v1480
        %v1739 = vpop.f32.mrf.mxu0
        %v1740 = vadd.f32 0.0, %v1739
        %1741 = vmatmul.f32.gmra.mxu0 %v1483
        %v1742 = vpop.f32.mrf.mxu0
        %v1743 = vadd.f32 0.0, %v1742
        %1744 = vmatmul.f32.gmra.mxu0 %v1486
        %v1745 = vpop.f32.mrf.mxu0
        %v1746 = vadd.f32 0.0, %v1745
        %1747 = vmatmul.f32.gmra.mxu0 %v1489
        %v1748 = vpop.f32.mrf.mxu0
        %v1749 = vadd.f32 0.0, %v1748
        %1750 = vmatmul.f32.gmra.mxu0 %v1492
        %v1751 = vpop.f32.mrf.mxu0
        %v1752 = vadd.f32 0.0, %v1751
        %1753 = vmatmul.f32.gmra.mxu0 %v1495
        %v1754 = vpop.f32.mrf.mxu0
        %v1755 = vadd.f32 0.0, %v1754
        %1756 = vmatmul.f32.gmra.mxu0 %v1498
        %v1757 = vpop.f32.mrf.mxu0
        %v1758 = vadd.f32 0.0, %v1757
        %1759 = vdwg.mxu0
        %1760 = vmatpush.msra.mxu0 0.0
        %1761 = vmatpush.msra.mxu0 0.0
        %1762 = vmatpush.msra.mxu0 0.0
        %1763 = vmatpush.msra.mxu0 0.0
        %1764 = vmatpush.msra.mxu0 0.0
        %1765 = vmatpush.msra.mxu0 0.0
        %1766 = vmatpush.msra.mxu0 0.0
        %1767 = vmatpush.msra.mxu0 0.0
        %1768 = vmatpush.msra.mxu0 0.0
        %1769 = vmatpush.msra.mxu0 0.0
        %1770 = vmatpush.msra.mxu0 0.0
        %1771 = vmatpush.msra.mxu0 0.0
        %1772 = vmatpush.msra.mxu0 0.0
        %1773 = vmatpush.msra.mxu0 0.0
        %1774 = vmatpush.msra.mxu0 %v1119
        %1775 = vmatpush.msra.mxu0 %v1103
        %1776 = vmatmul.f32.gmra.mxu0 %v1453
        %v1777 = vpop.f32.mrf.mxu0
        %v1778 = vadd.f32 0.0, %v1777
        %1779 = vmatmul.f32.gmra.mxu0 %v1456
        %v1780 = vpop.f32.mrf.mxu0
        %v1781 = vadd.f32 0.0, %v1780
        %1782 = vmatmul.f32.gmra.mxu0 %v1459
        %v1783 = vpop.f32.mrf.mxu0
        %v1784 = vadd.f32 0.0, %v1783
        %1785 = vmatmul.f32.gmra.mxu0 %v1462
        %v1786 = vpop.f32.mrf.mxu0
        %v1787 = vadd.f32 0.0, %v1786
        %1788 = vmatmul.f32.gmra.mxu0 %v1465
        %v1789 = vpop.f32.mrf.mxu0
        %v1790 = vadd.f32 0.0, %v1789
        %1791 = vmatmul.f32.gmra.mxu0 %v1468
        %v1792 = vpop.f32.mrf.mxu0
        %v1793 = vadd.f32 0.0, %v1792
        %1794 = vmatmul.f32.gmra.mxu0 %v1471
        %v1795 = vpop.f32.mrf.mxu0
        %v1796 = vadd.f32 0.0, %v1795
        %1797 = vmatmul.f32.gmra.mxu0 %v1474
        %v1798 = vpop.f32.mrf.mxu0
        %v1799 = vadd.f32 0.0, %v1798
        %1800 = vmatmul.f32.gmra.mxu0 %v1477
        %v1801 = vpop.f32.mrf.mxu0
        %v1802 = vadd.f32 0.0, %v1801
        %1803 = vmatmul.f32.gmra.mxu0 %v1480
        %v1804 = vpop.f32.mrf.mxu0
        %v1805 = vadd.f32 0.0, %v1804
        %1806 = vmatmul.f32.gmra.mxu0 %v1483
        %v1807 = vpop.f32.mrf.mxu0
        %v1808 = vadd.f32 0.0, %v1807
        %1809 = vmatmul.f32.gmra.mxu0 %v1486
        %v1810 = vpop.f32.mrf.mxu0
        %v1811 = vadd.f32 0.0, %v1810
        %1812 = vmatmul.f32.gmra.mxu0 %v1489
        %v1813 = vpop.f32.mrf.mxu0
        %v1814 = vadd.f32 0.0, %v1813
        %1815 = vmatmul.f32.gmra.mxu0 %v1492
        %v1816 = vpop.f32.mrf.mxu0
        %v1817 = vadd.f32 0.0, %v1816
        %1818 = vmatmul.f32.gmra.mxu0 %v1495
        %v1819 = vpop.f32.mrf.mxu0
        %v1820 = vadd.f32 0.0, %v1819
        %1821 = vmatmul.f32.gmra.mxu0 %v1498
        %v1822 = vpop.f32.mrf.mxu0
        %v1823 = vadd.f32 0.0, %v1822
        %1824 = vdwg.mxu0
        %1825 = vmatpush.msra.mxu0 0.0
        %1826 = vmatpush.msra.mxu0 0.0
        %1827 = vmatpush.msra.mxu0 0.0
        %1828 = vmatpush.msra.mxu0 0.0
        %1829 = vmatpush.msra.mxu0 0.0
        %1830 = vmatpush.msra.mxu0 0.0
        %1831 = vmatpush.msra.mxu0 0.0
        %1832 = vmatpush.msra.mxu0 0.0
        %1833 = vmatpush.msra.mxu0 0.0
        %1834 = vmatpush.msra.mxu0 0.0
        %1835 = vmatpush.msra.mxu0 0.0
        %1836 = vmatpush.msra.mxu0 0.0
        %1837 = vmatpush.msra.mxu0 0.0
        %1838 = vmatpush.msra.mxu0 0.0
        %1839 = vmatpush.msra.mxu0 %v1120
        %1840 = vmatpush.msra.mxu0 %v1104
        %1841 = vmatmul.f32.gmra.mxu0 %v1453
        %v1842 = vpop.f32.mrf.mxu0
        %v1843 = vadd.f32 0.0, %v1842
        %1844 = vmatmul.f32.gmra.mxu0 %v1456
        %v1845 = vpop.f32.mrf.mxu0
        %v1846 = vadd.f32 0.0, %v1845
        %1847 = vmatmul.f32.gmra.mxu0 %v1459
        %v1848 = vpop.f32.mrf.mxu0
        %v1849 = vadd.f32 0.0, %v1848
        %1850 = vmatmul.f32.gmra.mxu0 %v1462
        %v1851 = vpop.f32.mrf.mxu0
        %v1852 = vadd.f32 0.0, %v1851
        %1853 = vmatmul.f32.gmra.mxu0 %v1465
        %v1854 = vpop.f32.mrf.mxu0
        %v1855 = vadd.f32 0.0, %v1854
        %1856 = vmatmul.f32.gmra.mxu0 %v1468
        %v1857 = vpop.f32.mrf.mxu0
        %v1858 = vadd.f32 0.0, %v1857
        %1859 = vmatmul.f32.gmra.mxu0 %v1471
        %v1860 = vpop.f32.mrf.mxu0
        %v1861 = vadd.f32 0.0, %v1860
        %1862 = vmatmul.f32.gmra.mxu0 %v1474
        %v1863 = vpop.f32.mrf.mxu0
        %v1864 = vadd.f32 0.0, %v1863
        %1865 = vmatmul.f32.gmra.mxu0 %v1477
        %v1866 = vpop.f32.mrf.mxu0
        %v1867 = vadd.f32 0.0, %v1866
        %1868 = vmatmul.f32.gmra.mxu0 %v1480
        %v1869 = vpop.f32.mrf.mxu0
        %v1870 = vadd.f32 0.0, %v1869
        %1871 = vmatmul.f32.gmra.mxu0 %v1483
        %v1872 = vpop.f32.mrf.mxu0
        %v1873 = vadd.f32 0.0, %v1872
        %1874 = vmatmul.f32.gmra.mxu0 %v1486
        %v1875 = vpop.f32.mrf.mxu0
        %v1876 = vadd.f32 0.0, %v1875
        %1877 = vmatmul.f32.gmra.mxu0 %v1489
        %v1878 = vpop.f32.mrf.mxu0
        %v1879 = vadd.f32 0.0, %v1878
        %1880 = vmatmul.f32.gmra.mxu0 %v1492
        %v1881 = vpop.f32.mrf.mxu0
        %v1882 = vadd.f32 0.0, %v1881
        %1883 = vmatmul.f32.gmra.mxu0 %v1495
        %v1884 = vpop.f32.mrf.mxu0
        %v1885 = vadd.f32 0.0, %v1884
        %1886 = vmatmul.f32.gmra.mxu0 %v1498
        %v1887 = vpop.f32.mrf.mxu0
        %v1888 = vadd.f32 0.0, %v1887
        %1889 = vdwg.mxu0
        %1890 = vmatpush.msra.mxu0 0.0
        %1891 = vmatpush.msra.mxu0 0.0
        %1892 = vmatpush.msra.mxu0 0.0
        %1893 = vmatpush.msra.mxu0 0.0
        %1894 = vmatpush.msra.mxu0 0.0
        %1895 = vmatpush.msra.mxu0 0.0
        %1896 = vmatpush.msra.mxu0 0.0
        %1897 = vmatpush.msra.mxu0 0.0
        %1898 = vmatpush.msra.mxu0 0.0
        %1899 = vmatpush.msra.mxu0 0.0
        %1900 = vmatpush.msra.mxu0 0.0
        %1901 = vmatpush.msra.mxu0 0.0
        %1902 = vmatpush.msra.mxu0 0.0
        %1903 = vmatpush.msra.mxu0 0.0
        %1904 = vmatpush.msra.mxu0 %v1121
        %1905 = vmatpush.msra.mxu0 %v1105
        %1906 = vmatmul.f32.gmra.mxu0 %v1453
        %v1907 = vpop.f32.mrf.mxu0
        %v1908 = vadd.f32 0.0, %v1907
        %1909 = vmatmul.f32.gmra.mxu0 %v1456
        %v1910 = vpop.f32.mrf.mxu0
        %v1911 = vadd.f32 0.0, %v1910
        %1912 = vmatmul.f32.gmra.mxu0 %v1459
        %v1913 = vpop.f32.mrf.mxu0
        %v1914 = vadd.f32 0.0, %v1913
        %1915 = vmatmul.f32.gmra.mxu0 %v1462
        %v1916 = vpop.f32.mrf.mxu0
        %v1917 = vadd.f32 0.0, %v1916
        %1918 = vmatmul.f32.gmra.mxu0 %v1465
        %v1919 = vpop.f32.mrf.mxu0
        %v1920 = vadd.f32 0.0, %v1919
        %1921 = vmatmul.f32.gmra.mxu0 %v1468
        %v1922 = vpop.f32.mrf.mxu0
        %v1923 = vadd.f32 0.0, %v1922
        %1924 = vmatmul.f32.gmra.mxu0 %v1471
        %v1925 = vpop.f32.mrf.mxu0
        %v1926 = vadd.f32 0.0, %v1925
        %1927 = vmatmul.f32.gmra.mxu0 %v1474
        %v1928 = vpop.f32.mrf.mxu0
        %v1929 = vadd.f32 0.0, %v1928
        %1930 = vmatmul.f32.gmra.mxu0 %v1477
        %v1931 = vpop.f32.mrf.mxu0
        %v1932 = vadd.f32 0.0, %v1931
        %1933 = vmatmul.f32.gmra.mxu0 %v1480
        %v1934 = vpop.f32.mrf.mxu0
        %v1935 = vadd.f32 0.0, %v1934
        %1936 = vmatmul.f32.gmra.mxu0 %v1483
        %v1937 = vpop.f32.mrf.mxu0
        %v1938 = vadd.f32 0.0, %v1937
        %1939 = vmatmul.f32.gmra.mxu0 %v1486
        %v1940 = vpop.f32.mrf.mxu0
        %v1941 = vadd.f32 0.0, %v1940
        %1942 = vmatmul.f32.gmra.mxu0 %v1489
        %v1943 = vpop.f32.mrf.mxu0
        %v1944 = vadd.f32 0.0, %v1943
        %1945 = vmatmul.f32.gmra.mxu0 %v1492
        %v1946 = vpop.f32.mrf.mxu0
        %v1947 = vadd.f32 0.0, %v1946
        %1948 = vmatmul.f32.gmra.mxu0 %v1495
        %v1949 = vpop.f32.mrf.mxu0
        %v1950 = vadd.f32 0.0, %v1949
        %1951 = vmatmul.f32.gmra.mxu0 %v1498
        %v1952 = vpop.f32.mrf.mxu0
        %v1953 = vadd.f32 0.0, %v1952
        %1954 = vdwg.mxu0
        %1955 = vmatpush.msra.mxu0 0.0
        %1956 = vmatpush.msra.mxu0 0.0
        %1957 = vmatpush.msra.mxu0 0.0
        %1958 = vmatpush.msra.mxu0 0.0
        %1959 = vmatpush.msra.mxu0 0.0
        %1960 = vmatpush.msra.mxu0 0.0
        %1961 = vmatpush.msra.mxu0 0.0
        %1962 = vmatpush.msra.mxu0 0.0
        %1963 = vmatpush.msra.mxu0 0.0
        %1964 = vmatpush.msra.mxu0 0.0
        %1965 = vmatpush.msra.mxu0 0.0
        %1966 = vmatpush.msra.mxu0 0.0
        %1967 = vmatpush.msra.mxu0 0.0
        %1968 = vmatpush.msra.mxu0 0.0
        %1969 = vmatpush.msra.mxu0 %v1122
        %1970 = vmatpush.msra.mxu0 %v1106
        %1971 = vmatmul.f32.gmra.mxu0 %v1453
        %v1972 = vpop.f32.mrf.mxu0
        %v1973 = vadd.f32 0.0, %v1972
        %1974 = vmatmul.f32.gmra.mxu0 %v1456
        %v1975 = vpop.f32.mrf.mxu0
        %v1976 = vadd.f32 0.0, %v1975
        %1977 = vmatmul.f32.gmra.mxu0 %v1459
        %v1978 = vpop.f32.mrf.mxu0
        %v1979 = vadd.f32 0.0, %v1978
        %1980 = vmatmul.f32.gmra.mxu0 %v1462
        %v1981 = vpop.f32.mrf.mxu0
        %v1982 = vadd.f32 0.0, %v1981
        %1983 = vmatmul.f32.gmra.mxu0 %v1465
        %v1984 = vpop.f32.mrf.mxu0
        %v1985 = vadd.f32 0.0, %v1984
        %1986 = vmatmul.f32.gmra.mxu0 %v1468
        %v1987 = vpop.f32.mrf.mxu0
        %v1988 = vadd.f32 0.0, %v1987
        %1989 = vmatmul.f32.gmra.mxu0 %v1471
        %v1990 = vpop.f32.mrf.mxu0
        %v1991 = vadd.f32 0.0, %v1990
        %1992 = vmatmul.f32.gmra.mxu0 %v1474
        %v1993 = vpop.f32.mrf.mxu0
        %v1994 = vadd.f32 0.0, %v1993
        %1995 = vmatmul.f32.gmra.mxu0 %v1477
        %v1996 = vpop.f32.mrf.mxu0
        %v1997 = vadd.f32 0.0, %v1996
        %1998 = vmatmul.f32.gmra.mxu0 %v1480
        %v1999 = vpop.f32.mrf.mxu0
        %v2000 = vadd.f32 0.0, %v1999
        %2001 = vmatmul.f32.gmra.mxu0 %v1483
        %v2002 = vpop.f32.mrf.mxu0
        %v2003 = vadd.f32 0.0, %v2002
        %2004 = vmatmul.f32.gmra.mxu0 %v1486
        %v2005 = vpop.f32.mrf.mxu0
        %v2006 = vadd.f32 0.0, %v2005
        %2007 = vmatmul.f32.gmra.mxu0 %v1489
        %v2008 = vpop.f32.mrf.mxu0
        %v2009 = vadd.f32 0.0, %v2008
        %2010 = vmatmul.f32.gmra.mxu0 %v1492
        %v2011 = vpop.f32.mrf.mxu0
        %v2012 = vadd.f32 0.0, %v2011
        %2013 = vmatmul.f32.gmra.mxu0 %v1495
        %v2014 = vpop.f32.mrf.mxu0
        %v2015 = vadd.f32 0.0, %v2014
        %2016 = vmatmul.f32.gmra.mxu0 %v1498
        %v2017 = vpop.f32.mrf.mxu0
        %v2018 = vadd.f32 0.0, %v2017
        %2019 = vdwg.mxu0
        %2020 = vmatpush.msra.mxu0 0.0
        %2021 = vmatpush.msra.mxu0 0.0
        %2022 = vmatpush.msra.mxu0 0.0
        %2023 = vmatpush.msra.mxu0 0.0
        %2024 = vmatpush.msra.mxu0 0.0
        %2025 = vmatpush.msra.mxu0 0.0
        %2026 = vmatpush.msra.mxu0 0.0
        %2027 = vmatpush.msra.mxu0 0.0
        %2028 = vmatpush.msra.mxu0 0.0
        %2029 = vmatpush.msra.mxu0 0.0
        %2030 = vmatpush.msra.mxu0 0.0
        %2031 = vmatpush.msra.mxu0 0.0
        %2032 = vmatpush.msra.mxu0 0.0
        %2033 = vmatpush.msra.mxu0 0.0
        %2034 = vmatpush.msra.mxu0 %v1123
        %2035 = vmatpush.msra.mxu0 %v1107
        %2036 = vmatmul.f32.gmra.mxu0 %v1453
        %v2037 = vpop.f32.mrf.mxu0
        %v2038 = vadd.f32 0.0, %v2037
        %2039 = vmatmul.f32.gmra.mxu0 %v1456
        %v2040 = vpop.f32.mrf.mxu0
        %v2041 = vadd.f32 0.0, %v2040
        %2042 = vmatmul.f32.gmra.mxu0 %v1459
        %v2043 = vpop.f32.mrf.mxu0
        %v2044 = vadd.f32 0.0, %v2043
        %2045 = vmatmul.f32.gmra.mxu0 %v1462
        %v2046 = vpop.f32.mrf.mxu0
        %v2047 = vadd.f32 0.0, %v2046
        %2048 = vmatmul.f32.gmra.mxu0 %v1465
        %v2049 = vpop.f32.mrf.mxu0
        %v2050 = vadd.f32 0.0, %v2049
        %2051 = vmatmul.f32.gmra.mxu0 %v1468
        %v2052 = vpop.f32.mrf.mxu0
        %v2053 = vadd.f32 0.0, %v2052
        %2054 = vmatmul.f32.gmra.mxu0 %v1471
        %v2055 = vpop.f32.mrf.mxu0
        %v2056 = vadd.f32 0.0, %v2055
        %2057 = vmatmul.f32.gmra.mxu0 %v1474
        %v2058 = vpop.f32.mrf.mxu0
        %v2059 = vadd.f32 0.0, %v2058
        %2060 = vmatmul.f32.gmra.mxu0 %v1477
        %v2061 = vpop.f32.mrf.mxu0
        %v2062 = vadd.f32 0.0, %v2061
        %2063 = vmatmul.f32.gmra.mxu0 %v1480
        %v2064 = vpop.f32.mrf.mxu0
        %v2065 = vadd.f32 0.0, %v2064
        %2066 = vmatmul.f32.gmra.mxu0 %v1483
        %v2067 = vpop.f32.mrf.mxu0
        %v2068 = vadd.f32 0.0, %v2067
        %2069 = vmatmul.f32.gmra.mxu0 %v1486
        %v2070 = vpop.f32.mrf.mxu0
        %v2071 = vadd.f32 0.0, %v2070
        %2072 = vmatmul.f32.gmra.mxu0 %v1489
        %v2073 = vpop.f32.mrf.mxu0
        %v2074 = vadd.f32 0.0, %v2073
        %2075 = vmatmul.f32.gmra.mxu0 %v1492
        %v2076 = vpop.f32.mrf.mxu0
        %v2077 = vadd.f32 0.0, %v2076
        %2078 = vmatmul.f32.gmra.mxu0 %v1495
        %v2079 = vpop.f32.mrf.mxu0
        %v2080 = vadd.f32 0.0, %v2079
        %2081 = vmatmul.f32.gmra.mxu0 %v1498
        %v2082 = vpop.f32.mrf.mxu0
        %v2083 = vadd.f32 0.0, %v2082
        %2084 = vdwg.mxu0
        %2085 = vmatpush.msra.mxu0 0.0
        %2086 = vmatpush.msra.mxu0 0.0
        %2087 = vmatpush.msra.mxu0 0.0
        %2088 = vmatpush.msra.mxu0 0.0
        %2089 = vmatpush.msra.mxu0 0.0
        %2090 = vmatpush.msra.mxu0 0.0
        %2091 = vmatpush.msra.mxu0 0.0
        %2092 = vmatpush.msra.mxu0 0.0
        %2093 = vmatpush.msra.mxu0 0.0
        %2094 = vmatpush.msra.mxu0 0.0
        %2095 = vmatpush.msra.mxu0 0.0
        %2096 = vmatpush.msra.mxu0 0.0
        %2097 = vmatpush.msra.mxu0 0.0
        %2098 = vmatpush.msra.mxu0 0.0
        %2099 = vmatpush.msra.mxu0 %v1124
        %2100 = vmatpush.msra.mxu0 %v1108
        %2101 = vmatmul.f32.gmra.mxu0 %v1453
        %v2102 = vpop.f32.mrf.mxu0
        %v2103 = vadd.f32 0.0, %v2102
        %2104 = vmatmul.f32.gmra.mxu0 %v1456
        %v2105 = vpop.f32.mrf.mxu0
        %v2106 = vadd.f32 0.0, %v2105
        %2107 = vmatmul.f32.gmra.mxu0 %v1459
        %v2108 = vpop.f32.mrf.mxu0
        %v2109 = vadd.f32 0.0, %v2108
        %2110 = vmatmul.f32.gmra.mxu0 %v1462
        %v2111 = vpop.f32.mrf.mxu0
        %v2112 = vadd.f32 0.0, %v2111
        %2113 = vmatmul.f32.gmra.mxu0 %v1465
        %v2114 = vpop.f32.mrf.mxu0
        %v2115 = vadd.f32 0.0, %v2114
        %2116 = vmatmul.f32.gmra.mxu0 %v1468
        %v2117 = vpop.f32.mrf.mxu0
        %v2118 = vadd.f32 0.0, %v2117
        %2119 = vmatmul.f32.gmra.mxu0 %v1471
        %v2120 = vpop.f32.mrf.mxu0
        %v2121 = vadd.f32 0.0, %v2120
        %2122 = vmatmul.f32.gmra.mxu0 %v1474
        %v2123 = vpop.f32.mrf.mxu0
        %v2124 = vadd.f32 0.0, %v2123
        %2125 = vmatmul.f32.gmra.mxu0 %v1477
        %v2126 = vpop.f32.mrf.mxu0
        %v2127 = vadd.f32 0.0, %v2126
        %2128 = vmatmul.f32.gmra.mxu0 %v1480
        %v2129 = vpop.f32.mrf.mxu0
        %v2130 = vadd.f32 0.0, %v2129
        %2131 = vmatmul.f32.gmra.mxu0 %v1483
        %v2132 = vpop.f32.mrf.mxu0
        %v2133 = vadd.f32 0.0, %v2132
        %2134 = vmatmul.f32.gmra.mxu0 %v1486
        %v2135 = vpop.f32.mrf.mxu0
        %v2136 = vadd.f32 0.0, %v2135
        %2137 = vmatmul.f32.gmra.mxu0 %v1489
        %v2138 = vpop.f32.mrf.mxu0
        %v2139 = vadd.f32 0.0, %v2138
        %2140 = vmatmul.f32.gmra.mxu0 %v1492
        %v2141 = vpop.f32.mrf.mxu0
        %v2142 = vadd.f32 0.0, %v2141
        %2143 = vmatmul.f32.gmra.mxu0 %v1495
        %v2144 = vpop.f32.mrf.mxu0
        %v2145 = vadd.f32 0.0, %v2144
        %2146 = vmatmul.f32.gmra.mxu0 %v1498
        %v2147 = vpop.f32.mrf.mxu0
        %v2148 = vadd.f32 0.0, %v2147
        %2149 = vdwg.mxu0
        %2150 = vmatpush.msra.mxu0 0.0
        %2151 = vmatpush.msra.mxu0 0.0
        %2152 = vmatpush.msra.mxu0 0.0
        %2153 = vmatpush.msra.mxu0 0.0
        %2154 = vmatpush.msra.mxu0 0.0
        %2155 = vmatpush.msra.mxu0 0.0
        %2156 = vmatpush.msra.mxu0 0.0
        %2157 = vmatpush.msra.mxu0 0.0
        %2158 = vmatpush.msra.mxu0 0.0
        %2159 = vmatpush.msra.mxu0 0.0
        %2160 = vmatpush.msra.mxu0 0.0
        %2161 = vmatpush.msra.mxu0 0.0
        %2162 = vmatpush.msra.mxu0 0.0
        %2163 = vmatpush.msra.mxu0 0.0
        %2164 = vmatpush.msra.mxu0 %v1125
        %2165 = vmatpush.msra.mxu0 %v1109
        %2166 = vmatmul.f32.gmra.mxu0 %v1453
        %v2167 = vpop.f32.mrf.mxu0
        %v2168 = vadd.f32 0.0, %v2167
        %2169 = vmatmul.f32.gmra.mxu0 %v1456
        %v2170 = vpop.f32.mrf.mxu0
        %v2171 = vadd.f32 0.0, %v2170
        %2172 = vmatmul.f32.gmra.mxu0 %v1459
        %v2173 = vpop.f32.mrf.mxu0
        %v2174 = vadd.f32 0.0, %v2173
        %2175 = vmatmul.f32.gmra.mxu0 %v1462
        %v2176 = vpop.f32.mrf.mxu0
        %v2177 = vadd.f32 0.0, %v2176
        %2178 = vmatmul.f32.gmra.mxu0 %v1465
        %v2179 = vpop.f32.mrf.mxu0
        %v2180 = vadd.f32 0.0, %v2179
        %2181 = vmatmul.f32.gmra.mxu0 %v1468
        %v2182 = vpop.f32.mrf.mxu0
        %v2183 = vadd.f32 0.0, %v2182
        %2184 = vmatmul.f32.gmra.mxu0 %v1471
        %v2185 = vpop.f32.mrf.mxu0
        %v2186 = vadd.f32 0.0, %v2185
        %2187 = vmatmul.f32.gmra.mxu0 %v1474
        %v2188 = vpop.f32.mrf.mxu0
        %v2189 = vadd.f32 0.0, %v2188
        %2190 = vmatmul.f32.gmra.mxu0 %v1477
        %v2191 = vpop.f32.mrf.mxu0
        %v2192 = vadd.f32 0.0, %v2191
        %2193 = vmatmul.f32.gmra.mxu0 %v1480
        %v2194 = vpop.f32.mrf.mxu0
        %v2195 = vadd.f32 0.0, %v2194
        %2196 = vmatmul.f32.gmra.mxu0 %v1483
        %v2197 = vpop.f32.mrf.mxu0
        %v2198 = vadd.f32 0.0, %v2197
        %2199 = vmatmul.f32.gmra.mxu0 %v1486
        %v2200 = vpop.f32.mrf.mxu0
        %v2201 = vadd.f32 0.0, %v2200
        %2202 = vmatmul.f32.gmra.mxu0 %v1489
        %v2203 = vpop.f32.mrf.mxu0
        %v2204 = vadd.f32 0.0, %v2203
        %2205 = vmatmul.f32.gmra.mxu0 %v1492
        %v2206 = vpop.f32.mrf.mxu0
        %v2207 = vadd.f32 0.0, %v2206
        %2208 = vmatmul.f32.gmra.mxu0 %v1495
        %v2209 = vpop.f32.mrf.mxu0
        %v2210 = vadd.f32 0.0, %v2209
        %2211 = vmatmul.f32.gmra.mxu0 %v1498
        %v2212 = vpop.f32.mrf.mxu0
        %v2213 = vadd.f32 0.0, %v2212
        %2214 = vdwg.mxu0
        %2215 = vmatpush.msra.mxu0 0.0
        %2216 = vmatpush.msra.mxu0 0.0
        %2217 = vmatpush.msra.mxu0 0.0
        %2218 = vmatpush.msra.mxu0 0.0
        %2219 = vmatpush.msra.mxu0 0.0
        %2220 = vmatpush.msra.mxu0 0.0
        %2221 = vmatpush.msra.mxu0 0.0
        %2222 = vmatpush.msra.mxu0 0.0
        %2223 = vmatpush.msra.mxu0 0.0
        %2224 = vmatpush.msra.mxu0 0.0
        %2225 = vmatpush.msra.mxu0 0.0
        %2226 = vmatpush.msra.mxu0 0.0
        %2227 = vmatpush.msra.mxu0 0.0
        %2228 = vmatpush.msra.mxu0 0.0
        %2229 = vmatpush.msra.mxu0 %v1126
        %2230 = vmatpush.msra.mxu0 %v1110
        %2231 = vmatmul.f32.gmra.mxu0 %v1453
        %v2232 = vpop.f32.mrf.mxu0
        %v2233 = vadd.f32 0.0, %v2232
        %2234 = vmatmul.f32.gmra.mxu0 %v1456
        %v2235 = vpop.f32.mrf.mxu0
        %v2236 = vadd.f32 0.0, %v2235
        %2237 = vmatmul.f32.gmra.mxu0 %v1459
        %v2238 = vpop.f32.mrf.mxu0
        %v2239 = vadd.f32 0.0, %v2238
        %2240 = vmatmul.f32.gmra.mxu0 %v1462
        %v2241 = vpop.f32.mrf.mxu0
        %v2242 = vadd.f32 0.0, %v2241
        %2243 = vmatmul.f32.gmra.mxu0 %v1465
        %v2244 = vpop.f32.mrf.mxu0
        %v2245 = vadd.f32 0.0, %v2244
        %2246 = vmatmul.f32.gmra.mxu0 %v1468
        %v2247 = vpop.f32.mrf.mxu0
        %v2248 = vadd.f32 0.0, %v2247
        %2249 = vmatmul.f32.gmra.mxu0 %v1471
        %v2250 = vpop.f32.mrf.mxu0
        %v2251 = vadd.f32 0.0, %v2250
        %2252 = vmatmul.f32.gmra.mxu0 %v1474
        %v2253 = vpop.f32.mrf.mxu0
        %v2254 = vadd.f32 0.0, %v2253
        %2255 = vmatmul.f32.gmra.mxu0 %v1477
        %v2256 = vpop.f32.mrf.mxu0
        %v2257 = vadd.f32 0.0, %v2256
        %2258 = vmatmul.f32.gmra.mxu0 %v1480
        %v2259 = vpop.f32.mrf.mxu0
        %v2260 = vadd.f32 0.0, %v2259
        %2261 = vmatmul.f32.gmra.mxu0 %v1483
        %v2262 = vpop.f32.mrf.mxu0
        %v2263 = vadd.f32 0.0, %v2262
        %2264 = vmatmul.f32.gmra.mxu0 %v1486
        %v2265 = vpop.f32.mrf.mxu0
        %v2266 = vadd.f32 0.0, %v2265
        %2267 = vmatmul.f32.gmra.mxu0 %v1489
        %v2268 = vpop.f32.mrf.mxu0
        %v2269 = vadd.f32 0.0, %v2268
        %2270 = vmatmul.f32.gmra.mxu0 %v1492
        %v2271 = vpop.f32.mrf.mxu0
        %v2272 = vadd.f32 0.0, %v2271
        %2273 = vmatmul.f32.gmra.mxu0 %v1495
        %v2274 = vpop.f32.mrf.mxu0
        %v2275 = vadd.f32 0.0, %v2274
        %2276 = vmatmul.f32.gmra.mxu0 %v1498
        %v2277 = vpop.f32.mrf.mxu0
        %v2278 = vadd.f32 0.0, %v2277
        %2279 = vdwg.mxu0
        %2280 = vmatpush.msra.mxu0 0.0
        %2281 = vmatpush.msra.mxu0 0.0
        %2282 = vmatpush.msra.mxu0 0.0
        %2283 = vmatpush.msra.mxu0 0.0
        %2284 = vmatpush.msra.mxu0 0.0
        %2285 = vmatpush.msra.mxu0 0.0
        %2286 = vmatpush.msra.mxu0 0.0
        %2287 = vmatpush.msra.mxu0 0.0
        %2288 = vmatpush.msra.mxu0 0.0
        %2289 = vmatpush.msra.mxu0 0.0
        %2290 = vmatpush.msra.mxu0 0.0
        %2291 = vmatpush.msra.mxu0 0.0
        %2292 = vmatpush.msra.mxu0 0.0
        %2293 = vmatpush.msra.mxu0 0.0
        %2294 = vmatpush.msra.mxu0 %v1127
        %2295 = vmatpush.msra.mxu0 %v1111
        %2296 = vmatmul.f32.gmra.mxu0 %v1453
        %v2297 = vpop.f32.mrf.mxu0
        %v2298 = vadd.f32 0.0, %v2297
        %2299 = vmatmul.f32.gmra.mxu0 %v1456
        %v2300 = vpop.f32.mrf.mxu0
        %v2301 = vadd.f32 0.0, %v2300
        %2302 = vmatmul.f32.gmra.mxu0 %v1459
        %v2303 = vpop.f32.mrf.mxu0
        %v2304 = vadd.f32 0.0, %v2303
        %2305 = vmatmul.f32.gmra.mxu0 %v1462
        %v2306 = vpop.f32.mrf.mxu0
        %v2307 = vadd.f32 0.0, %v2306
        %2308 = vmatmul.f32.gmra.mxu0 %v1465
        %v2309 = vpop.f32.mrf.mxu0
        %v2310 = vadd.f32 0.0, %v2309
        %2311 = vmatmul.f32.gmra.mxu0 %v1468
        %v2312 = vpop.f32.mrf.mxu0
        %v2313 = vadd.f32 0.0, %v2312
        %2314 = vmatmul.f32.gmra.mxu0 %v1471
        %v2315 = vpop.f32.mrf.mxu0
        %v2316 = vadd.f32 0.0, %v2315
        %2317 = vmatmul.f32.gmra.mxu0 %v1474
        %v2318 = vpop.f32.mrf.mxu0
        %v2319 = vadd.f32 0.0, %v2318
        %2320 = vmatmul.f32.gmra.mxu0 %v1477
        %v2321 = vpop.f32.mrf.mxu0
        %v2322 = vadd.f32 0.0, %v2321
        %2323 = vmatmul.f32.gmra.mxu0 %v1480
        %v2324 = vpop.f32.mrf.mxu0
        %v2325 = vadd.f32 0.0, %v2324
        %2326 = vmatmul.f32.gmra.mxu0 %v1483
        %v2327 = vpop.f32.mrf.mxu0
        %v2328 = vadd.f32 0.0, %v2327
        %2329 = vmatmul.f32.gmra.mxu0 %v1486
        %v2330 = vpop.f32.mrf.mxu0
        %v2331 = vadd.f32 0.0, %v2330
        %2332 = vmatmul.f32.gmra.mxu0 %v1489
        %v2333 = vpop.f32.mrf.mxu0
        %v2334 = vadd.f32 0.0, %v2333
        %2335 = vmatmul.f32.gmra.mxu0 %v1492
        %v2336 = vpop.f32.mrf.mxu0
        %v2337 = vadd.f32 0.0, %v2336
        %2338 = vmatmul.f32.gmra.mxu0 %v1495
        %v2339 = vpop.f32.mrf.mxu0
        %v2340 = vadd.f32 0.0, %v2339
        %2341 = vmatmul.f32.gmra.mxu0 %v1498
        %v2342 = vpop.f32.mrf.mxu0
        %v2343 = vadd.f32 0.0, %v2342
        %2344 = vdwg.mxu0
        %2345 = vmatpush.msra.mxu0 0.0
        %2346 = vmatpush.msra.mxu0 0.0
        %2347 = vmatpush.msra.mxu0 0.0
        %2348 = vmatpush.msra.mxu0 0.0
        %2349 = vmatpush.msra.mxu0 0.0
        %2350 = vmatpush.msra.mxu0 0.0
        %2351 = vmatpush.msra.mxu0 0.0
        %2352 = vmatpush.msra.mxu0 0.0
        %2353 = vmatpush.msra.mxu0 0.0
        %2354 = vmatpush.msra.mxu0 0.0
        %2355 = vmatpush.msra.mxu0 0.0
        %2356 = vmatpush.msra.mxu0 0.0
        %2357 = vmatpush.msra.mxu0 0.0
        %2358 = vmatpush.msra.mxu0 0.0
        %2359 = vmatpush.msra.mxu0 %v1128
        %2360 = vmatpush.msra.mxu0 %v1112
        %2361 = vmatmul.f32.gmra.mxu0 %v1453
        %v2362 = vpop.f32.mrf.mxu0
        %v2363 = vadd.f32 0.0, %v2362
        %2364 = vmatmul.f32.gmra.mxu0 %v1456
        %v2365 = vpop.f32.mrf.mxu0
        %v2366 = vadd.f32 0.0, %v2365
        %2367 = vmatmul.f32.gmra.mxu0 %v1459
        %v2368 = vpop.f32.mrf.mxu0
        %v2369 = vadd.f32 0.0, %v2368
        %2370 = vmatmul.f32.gmra.mxu0 %v1462
        %v2371 = vpop.f32.mrf.mxu0
        %v2372 = vadd.f32 0.0, %v2371
        %2373 = vmatmul.f32.gmra.mxu0 %v1465
        %v2374 = vpop.f32.mrf.mxu0
        %v2375 = vadd.f32 0.0, %v2374
        %2376 = vmatmul.f32.gmra.mxu0 %v1468
        %v2377 = vpop.f32.mrf.mxu0
        %v2378 = vadd.f32 0.0, %v2377
        %2379 = vmatmul.f32.gmra.mxu0 %v1471
        %v2380 = vpop.f32.mrf.mxu0
        %v2381 = vadd.f32 0.0, %v2380
        %2382 = vmatmul.f32.gmra.mxu0 %v1474
        %v2383 = vpop.f32.mrf.mxu0
        %v2384 = vadd.f32 0.0, %v2383
        %2385 = vmatmul.f32.gmra.mxu0 %v1477
        %v2386 = vpop.f32.mrf.mxu0
        %v2387 = vadd.f32 0.0, %v2386
        %2388 = vmatmul.f32.gmra.mxu0 %v1480
        %v2389 = vpop.f32.mrf.mxu0
        %v2390 = vadd.f32 0.0, %v2389
        %2391 = vmatmul.f32.gmra.mxu0 %v1483
        %v2392 = vpop.f32.mrf.mxu0
        %v2393 = vadd.f32 0.0, %v2392
        %2394 = vmatmul.f32.gmra.mxu0 %v1486
        %v2395 = vpop.f32.mrf.mxu0
        %v2396 = vadd.f32 0.0, %v2395
        %2397 = vmatmul.f32.gmra.mxu0 %v1489
        %v2398 = vpop.f32.mrf.mxu0
        %v2399 = vadd.f32 0.0, %v2398
        %2400 = vmatmul.f32.gmra.mxu0 %v1492
        %v2401 = vpop.f32.mrf.mxu0
        %v2402 = vadd.f32 0.0, %v2401
        %2403 = vmatmul.f32.gmra.mxu0 %v1495
        %v2404 = vpop.f32.mrf.mxu0
        %v2405 = vadd.f32 0.0, %v2404
        %2406 = vmatmul.f32.gmra.mxu0 %v1498
        %v2407 = vpop.f32.mrf.mxu0
        %v2408 = vadd.f32 0.0, %v2407
        %2409 = vdwg.mxu0
        %2410 = vmatpush.msra.mxu0 0.0
        %2411 = vmatpush.msra.mxu0 0.0
        %2412 = vmatpush.msra.mxu0 0.0
        %2413 = vmatpush.msra.mxu0 0.0
        %2414 = vmatpush.msra.mxu0 0.0
        %2415 = vmatpush.msra.mxu0 0.0
        %2416 = vmatpush.msra.mxu0 0.0
        %2417 = vmatpush.msra.mxu0 0.0
        %2418 = vmatpush.msra.mxu0 0.0
        %2419 = vmatpush.msra.mxu0 0.0
        %2420 = vmatpush.msra.mxu0 0.0
        %2421 = vmatpush.msra.mxu0 0.0
        %2422 = vmatpush.msra.mxu0 0.0
        %2423 = vmatpush.msra.mxu0 0.0
        %2424 = vmatpush.msra.mxu0 %v1129
        %2425 = vmatpush.msra.mxu0 %v1113
        %2426 = vmatmul.f32.gmra.mxu0 %v1453
        %v2427 = vpop.f32.mrf.mxu0
        %v2428 = vadd.f32 0.0, %v2427
        %2429 = vmatmul.f32.gmra.mxu0 %v1456
        %v2430 = vpop.f32.mrf.mxu0
        %v2431 = vadd.f32 0.0, %v2430
        %2432 = vmatmul.f32.gmra.mxu0 %v1459
        %v2433 = vpop.f32.mrf.mxu0
        %v2434 = vadd.f32 0.0, %v2433
        %2435 = vmatmul.f32.gmra.mxu0 %v1462
        %v2436 = vpop.f32.mrf.mxu0
        %v2437 = vadd.f32 0.0, %v2436
        %2438 = vmatmul.f32.gmra.mxu0 %v1465
        %v2439 = vpop.f32.mrf.mxu0
        %v2440 = vadd.f32 0.0, %v2439
        %2441 = vmatmul.f32.gmra.mxu0 %v1468
        %v2442 = vpop.f32.mrf.mxu0
        %v2443 = vadd.f32 0.0, %v2442
        %2444 = vmatmul.f32.gmra.mxu0 %v1471
        %v2445 = vpop.f32.mrf.mxu0
        %v2446 = vadd.f32 0.0, %v2445
        %2447 = vmatmul.f32.gmra.mxu0 %v1474
        %v2448 = vpop.f32.mrf.mxu0
        %v2449 = vadd.f32 0.0, %v2448
        %2450 = vmatmul.f32.gmra.mxu0 %v1477
        %v2451 = vpop.f32.mrf.mxu0
        %v2452 = vadd.f32 0.0, %v2451
        %2453 = vmatmul.f32.gmra.mxu0 %v1480
        %v2454 = vpop.f32.mrf.mxu0
        %v2455 = vadd.f32 0.0, %v2454
        %2456 = vmatmul.f32.gmra.mxu0 %v1483
        %v2457 = vpop.f32.mrf.mxu0
        %v2458 = vadd.f32 0.0, %v2457
        %2459 = vmatmul.f32.gmra.mxu0 %v1486
        %v2460 = vpop.f32.mrf.mxu0
        %v2461 = vadd.f32 0.0, %v2460
        %2462 = vmatmul.f32.gmra.mxu0 %v1489
        %v2463 = vpop.f32.mrf.mxu0
        %v2464 = vadd.f32 0.0, %v2463
        %2465 = vmatmul.f32.gmra.mxu0 %v1492
        %v2466 = vpop.f32.mrf.mxu0
        %v2467 = vadd.f32 0.0, %v2466
        %2468 = vmatmul.f32.gmra.mxu0 %v1495
        %v2469 = vpop.f32.mrf.mxu0
        %v2470 = vadd.f32 0.0, %v2469
        %2471 = vmatmul.f32.gmra.mxu0 %v1498
        %v2472 = vpop.f32.mrf.mxu0
        %v2473 = vadd.f32 0.0, %v2472
        %2474 = vdwg.mxu0
        %2475 = vmatpush.msra.mxu0 0.0
        %2476 = vmatpush.msra.mxu0 0.0
        %2477 = vmatpush.msra.mxu0 0.0
        %2478 = vmatpush.msra.mxu0 0.0
        %2479 = vmatpush.msra.mxu0 0.0
        %2480 = vmatpush.msra.mxu0 0.0
        %2481 = vmatpush.msra.mxu0 0.0
        %2482 = vmatpush.msra.mxu0 0.0
        %2483 = vmatpush.msra.mxu0 0.0
        %2484 = vmatpush.msra.mxu0 0.0
        %2485 = vmatpush.msra.mxu0 0.0
        %2486 = vmatpush.msra.mxu0 0.0
        %2487 = vmatpush.msra.mxu0 0.0
        %2488 = vmatpush.msra.mxu0 0.0
        %2489 = vmatpush.msra.mxu0 %v1130
        %2490 = vmatpush.msra.mxu0 %v1114
        %2491 = vmatmul.f32.gmra.mxu0 %v1453
        %v2492 = vpop.f32.mrf.mxu0
        %v2493 = vadd.f32 0.0, %v2492
        %2494 = vmatmul.f32.gmra.mxu0 %v1456
        %v2495 = vpop.f32.mrf.mxu0
        %v2496 = vadd.f32 0.0, %v2495
        %2497 = vmatmul.f32.gmra.mxu0 %v1459
        %v2498 = vpop.f32.mrf.mxu0
        %v2499 = vadd.f32 0.0, %v2498
        %2500 = vmatmul.f32.gmra.mxu0 %v1462
        %v2501 = vpop.f32.mrf.mxu0
        %v2502 = vadd.f32 0.0, %v2501
        %2503 = vmatmul.f32.gmra.mxu0 %v1465
        %v2504 = vpop.f32.mrf.mxu0
        %v2505 = vadd.f32 0.0, %v2504
        %2506 = vmatmul.f32.gmra.mxu0 %v1468
        %v2507 = vpop.f32.mrf.mxu0
        %v2508 = vadd.f32 0.0, %v2507
        %2509 = vmatmul.f32.gmra.mxu0 %v1471
        %v2510 = vpop.f32.mrf.mxu0
        %v2511 = vadd.f32 0.0, %v2510
        %2512 = vmatmul.f32.gmra.mxu0 %v1474
        %v2513 = vpop.f32.mrf.mxu0
        %v2514 = vadd.f32 0.0, %v2513
        %2515 = vmatmul.f32.gmra.mxu0 %v1477
        %v2516 = vpop.f32.mrf.mxu0
        %v2517 = vadd.f32 0.0, %v2516
        %2518 = vmatmul.f32.gmra.mxu0 %v1480
        %v2519 = vpop.f32.mrf.mxu0
        %v2520 = vadd.f32 0.0, %v2519
        %2521 = vmatmul.f32.gmra.mxu0 %v1483
        %v2522 = vpop.f32.mrf.mxu0
        %v2523 = vadd.f32 0.0, %v2522
        %2524 = vmatmul.f32.gmra.mxu0 %v1486
        %v2525 = vpop.f32.mrf.mxu0
        %v2526 = vadd.f32 0.0, %v2525
        %2527 = vmatmul.f32.gmra.mxu0 %v1489
        %v2528 = vpop.f32.mrf.mxu0
        %v2529 = vadd.f32 0.0, %v2528
        %2530 = vmatmul.f32.gmra.mxu0 %v1492
        %v2531 = vpop.f32.mrf.mxu0
        %v2532 = vadd.f32 0.0, %v2531
        %2533 = vmatmul.f32.gmra.mxu0 %v1495
        %v2534 = vpop.f32.mrf.mxu0
        %v2535 = vadd.f32 0.0, %v2534
        %2536 = vmatmul.f32.gmra.mxu0 %v1498
        %v2537 = vpop.f32.mrf.mxu0
        %v2538 = vadd.f32 0.0, %v2537
        %2539 = vdwg.mxu0
        %v2540 = vmul.f32 %v1518, %v1283
        %v2541 = vmul.f32 %v1583, %v1284
        %v2542 = vmul.f32 %v1648, %v1285
        %v2543 = vmul.f32 %v1713, %v1286
        %v2544 = vmul.f32 %v1778, %v1287
        %v2545 = vmul.f32 %v1843, %v1288
        %v2546 = vmul.f32 %v1908, %v1289
        %v2547 = vmul.f32 %v1973, %v1290
        %v2548 = vmul.f32 %v2038, %v1291
        %v2549 = vmul.f32 %v2103, %v1292
        %v2550 = vmul.f32 %v2168, %v1293
        %v2551 = vmul.f32 %v2233, %v1294
        %v2552 = vmul.f32 %v2298, %v1295
        %v2553 = vmul.f32 %v2363, %v1296
        %v2554 = vmul.f32 %v2428, %v1297
        %v2555 = vmul.f32 %v2493, %v1298
        %v2556 = vmul.f32 %v1521, %v1299
        %v2557 = vmul.f32 %v1586, %v1300
        %v2558 = vmul.f32 %v1651, %v1301
        %v2559 = vmul.f32 %v1716, %v1302
        %v2560 = vmul.f32 %v1781, %v1303
        %v2561 = vmul.f32 %v1846, %v1304
        %v2562 = vmul.f32 %v1911, %v1305
        %v2563 = vmul.f32 %v1976, %v1306
        %v2564 = vmul.f32 %v2041, %v1307
        %v2565 = vmul.f32 %v2106, %v1308
        %v2566 = vmul.f32 %v2171, %v1309
        %v2567 = vmul.f32 %v2236, %v1310
        %v2568 = vmul.f32 %v2301, %v1311
        %v2569 = vmul.f32 %v2366, %v1312
        %v2570 = vmul.f32 %v2431, %v1313
        %v2571 = vmul.f32 %v2496, %v1314
        %v2572 = vmul.f32 %v1524, %v1283
        %v2573 = vmul.f32 %v1589, %v1284
        %v2574 = vmul.f32 %v1654, %v1285
        %v2575 = vmul.f32 %v1719, %v1286
        %v2576 = vmul.f32 %v1784, %v1287
        %v2577 = vmul.f32 %v1849, %v1288
        %v2578 = vmul.f32 %v1914, %v1289
        %v2579 = vmul.f32 %v1979, %v1290
        %v2580 = vmul.f32 %v2044, %v1291
        %v2581 = vmul.f32 %v2109, %v1292
        %v2582 = vmul.f32 %v2174, %v1293
        %v2583 = vmul.f32 %v2239, %v1294
        %v2584 = vmul.f32 %v2304, %v1295
        %v2585 = vmul.f32 %v2369, %v1296
        %v2586 = vmul.f32 %v2434, %v1297
        %v2587 = vmul.f32 %v2499, %v1298
        %v2588 = vmul.f32 %v1527, %v1299
        %v2589 = vmul.f32 %v1592, %v1300
        %v2590 = vmul.f32 %v1657, %v1301
        %v2591 = vmul.f32 %v1722, %v1302
        %v2592 = vmul.f32 %v1787, %v1303
        %v2593 = vmul.f32 %v1852, %v1304
        %v2594 = vmul.f32 %v1917, %v1305
        %v2595 = vmul.f32 %v1982, %v1306
        %v2596 = vmul.f32 %v2047, %v1307
        %v2597 = vmul.f32 %v2112, %v1308
        %v2598 = vmul.f32 %v2177, %v1309
        %v2599 = vmul.f32 %v2242, %v1310
        %v2600 = vmul.f32 %v2307, %v1311
        %v2601 = vmul.f32 %v2372, %v1312
        %v2602 = vmul.f32 %v2437, %v1313
        %v2603 = vmul.f32 %v2502, %v1314
        %v2604 = vmul.f32 %v1530, %v1283
        %v2605 = vmul.f32 %v1595, %v1284
        %v2606 = vmul.f32 %v1660, %v1285
        %v2607 = vmul.f32 %v1725, %v1286
        %v2608 = vmul.f32 %v1790, %v1287
        %v2609 = vmul.f32 %v1855, %v1288
        %v2610 = vmul.f32 %v1920, %v1289
        %v2611 = vmul.f32 %v1985, %v1290
        %v2612 = vmul.f32 %v2050, %v1291
        %v2613 = vmul.f32 %v2115, %v1292
        %v2614 = vmul.f32 %v2180, %v1293
        %v2615 = vmul.f32 %v2245, %v1294
        %v2616 = vmul.f32 %v2310, %v1295
        %v2617 = vmul.f32 %v2375, %v1296
        %v2618 = vmul.f32 %v2440, %v1297
        %v2619 = vmul.f32 %v2505, %v1298
        %v2620 = vmul.f32 %v1533, %v1299
        %v2621 = vmul.f32 %v1598, %v1300
        %v2622 = vmul.f32 %v1663, %v1301
        %v2623 = vmul.f32 %v1728, %v1302
        %v2624 = vmul.f32 %v1793, %v1303
        %v2625 = vmul.f32 %v1858, %v1304
        %v2626 = vmul.f32 %v1923, %v1305
        %v2627 = vmul.f32 %v1988, %v1306
        %v2628 = vmul.f32 %v2053, %v1307
        %v2629 = vmul.f32 %v2118, %v1308
        %v2630 = vmul.f32 %v2183, %v1309
        %v2631 = vmul.f32 %v2248, %v1310
        %v2632 = vmul.f32 %v2313, %v1311
        %v2633 = vmul.f32 %v2378, %v1312
        %v2634 = vmul.f32 %v2443, %v1313
        %v2635 = vmul.f32 %v2508, %v1314
        %v2636 = vmul.f32 %v1536, %v1283
        %v2637 = vmul.f32 %v1601, %v1284
        %v2638 = vmul.f32 %v1666, %v1285
        %v2639 = vmul.f32 %v1731, %v1286
        %v2640 = vmul.f32 %v1796, %v1287
        %v2641 = vmul.f32 %v1861, %v1288
        %v2642 = vmul.f32 %v1926, %v1289
        %v2643 = vmul.f32 %v1991, %v1290
        %v2644 = vmul.f32 %v2056, %v1291
        %v2645 = vmul.f32 %v2121, %v1292
        %v2646 = vmul.f32 %v2186, %v1293
        %v2647 = vmul.f32 %v2251, %v1294
        %v2648 = vmul.f32 %v2316, %v1295
        %v2649 = vmul.f32 %v2381, %v1296
        %v2650 = vmul.f32 %v2446, %v1297
        %v2651 = vmul.f32 %v2511, %v1298
        %v2652 = vmul.f32 %v1539, %v1299
        %v2653 = vmul.f32 %v1604, %v1300
        %v2654 = vmul.f32 %v1669, %v1301
        %v2655 = vmul.f32 %v1734, %v1302
        %v2656 = vmul.f32 %v1799, %v1303
        %v2657 = vmul.f32 %v1864, %v1304
        %v2658 = vmul.f32 %v1929, %v1305
        %v2659 = vmul.f32 %v1994, %v1306
        %v2660 = vmul.f32 %v2059, %v1307
        %v2661 = vmul.f32 %v2124, %v1308
        %v2662 = vmul.f32 %v2189, %v1309
        %v2663 = vmul.f32 %v2254, %v1310
        %v2664 = vmul.f32 %v2319, %v1311
        %v2665 = vmul.f32 %v2384, %v1312
        %v2666 = vmul.f32 %v2449, %v1313
        %v2667 = vmul.f32 %v2514, %v1314
        %v2668 = vmul.f32 %v1542, %v1283
        %v2669 = vmul.f32 %v1607, %v1284
        %v2670 = vmul.f32 %v1672, %v1285
        %v2671 = vmul.f32 %v1737, %v1286
        %v2672 = vmul.f32 %v1802, %v1287
        %v2673 = vmul.f32 %v1867, %v1288
        %v2674 = vmul.f32 %v1932, %v1289
        %v2675 = vmul.f32 %v1997, %v1290
        %v2676 = vmul.f32 %v2062, %v1291
        %v2677 = vmul.f32 %v2127, %v1292
        %v2678 = vmul.f32 %v2192, %v1293
        %v2679 = vmul.f32 %v2257, %v1294
        %v2680 = vmul.f32 %v2322, %v1295
        %v2681 = vmul.f32 %v2387, %v1296
        %v2682 = vmul.f32 %v2452, %v1297
        %v2683 = vmul.f32 %v2517, %v1298
        %v2684 = vmul.f32 %v1545, %v1299
        %v2685 = vmul.f32 %v1610, %v1300
        %v2686 = vmul.f32 %v1675, %v1301
        %v2687 = vmul.f32 %v1740, %v1302
        %v2688 = vmul.f32 %v1805, %v1303
        %v2689 = vmul.f32 %v1870, %v1304
        %v2690 = vmul.f32 %v1935, %v1305
        %v2691 = vmul.f32 %v2000, %v1306
        %v2692 = vmul.f32 %v2065, %v1307
        %v2693 = vmul.f32 %v2130, %v1308
        %v2694 = vmul.f32 %v2195, %v1309
        %v2695 = vmul.f32 %v2260, %v1310
        %v2696 = vmul.f32 %v2325, %v1311
        %v2697 = vmul.f32 %v2390, %v1312
        %v2698 = vmul.f32 %v2455, %v1313
        %v2699 = vmul.f32 %v2520, %v1314
        %v2700 = vmul.f32 %v1548, %v1283
        %v2701 = vmul.f32 %v1613, %v1284
        %v2702 = vmul.f32 %v1678, %v1285
        %v2703 = vmul.f32 %v1743, %v1286
        %v2704 = vmul.f32 %v1808, %v1287
        %v2705 = vmul.f32 %v1873, %v1288
        %v2706 = vmul.f32 %v1938, %v1289
        %v2707 = vmul.f32 %v2003, %v1290
        %v2708 = vmul.f32 %v2068, %v1291
        %v2709 = vmul.f32 %v2133, %v1292
        %v2710 = vmul.f32 %v2198, %v1293
        %v2711 = vmul.f32 %v2263, %v1294
        %v2712 = vmul.f32 %v2328, %v1295
        %v2713 = vmul.f32 %v2393, %v1296
        %v2714 = vmul.f32 %v2458, %v1297
        %v2715 = vmul.f32 %v2523, %v1298
        %v2716 = vmul.f32 %v1551, %v1299
        %v2717 = vmul.f32 %v1616, %v1300
        %v2718 = vmul.f32 %v1681, %v1301
        %v2719 = vmul.f32 %v1746, %v1302
        %v2720 = vmul.f32 %v1811, %v1303
        %v2721 = vmul.f32 %v1876, %v1304
        %v2722 = vmul.f32 %v1941, %v1305
        %v2723 = vmul.f32 %v2006, %v1306
        %v2724 = vmul.f32 %v2071, %v1307
        %v2725 = vmul.f32 %v2136, %v1308
        %v2726 = vmul.f32 %v2201, %v1309
        %v2727 = vmul.f32 %v2266, %v1310
        %v2728 = vmul.f32 %v2331, %v1311
        %v2729 = vmul.f32 %v2396, %v1312
        %v2730 = vmul.f32 %v2461, %v1313
        %v2731 = vmul.f32 %v2526, %v1314
        %v2732 = vmul.f32 %v1554, %v1283
        %v2733 = vmul.f32 %v1619, %v1284
        %v2734 = vmul.f32 %v1684, %v1285
        %v2735 = vmul.f32 %v1749, %v1286
        %v2736 = vmul.f32 %v1814, %v1287
        %v2737 = vmul.f32 %v1879, %v1288
        %v2738 = vmul.f32 %v1944, %v1289
        %v2739 = vmul.f32 %v2009, %v1290
        %v2740 = vmul.f32 %v2074, %v1291
        %v2741 = vmul.f32 %v2139, %v1292
        %v2742 = vmul.f32 %v2204, %v1293
        %v2743 = vmul.f32 %v2269, %v1294
        %v2744 = vmul.f32 %v2334, %v1295
        %v2745 = vmul.f32 %v2399, %v1296
        %v2746 = vmul.f32 %v2464, %v1297
        %v2747 = vmul.f32 %v2529, %v1298
        %v2748 = vmul.f32 %v1557, %v1299
        %v2749 = vmul.f32 %v1622, %v1300
        %v2750 = vmul.f32 %v1687, %v1301
        %v2751 = vmul.f32 %v1752, %v1302
        %v2752 = vmul.f32 %v1817, %v1303
        %v2753 = vmul.f32 %v1882, %v1304
        %v2754 = vmul.f32 %v1947, %v1305
        %v2755 = vmul.f32 %v2012, %v1306
        %v2756 = vmul.f32 %v2077, %v1307
        %v2757 = vmul.f32 %v2142, %v1308
        %v2758 = vmul.f32 %v2207, %v1309
        %v2759 = vmul.f32 %v2272, %v1310
        %v2760 = vmul.f32 %v2337, %v1311
        %v2761 = vmul.f32 %v2402, %v1312
        %v2762 = vmul.f32 %v2467, %v1313
        %v2763 = vmul.f32 %v2532, %v1314
        %v2764 = vmul.f32 %v1560, %v1283
        %v2765 = vmul.f32 %v1625, %v1284
        %v2766 = vmul.f32 %v1690, %v1285
        %v2767 = vmul.f32 %v1755, %v1286
        %v2768 = vmul.f32 %v1820, %v1287
        %v2769 = vmul.f32 %v1885, %v1288
        %v2770 = vmul.f32 %v1950, %v1289
        %v2771 = vmul.f32 %v2015, %v1290
        %v2772 = vmul.f32 %v2080, %v1291
        %v2773 = vmul.f32 %v2145, %v1292
        %v2774 = vmul.f32 %v2210, %v1293
        %v2775 = vmul.f32 %v2275, %v1294
        %v2776 = vmul.f32 %v2340, %v1295
        %v2777 = vmul.f32 %v2405, %v1296
        %v2778 = vmul.f32 %v2470, %v1297
        %v2779 = vmul.f32 %v2535, %v1298
        %v2780 = vmul.f32 %v1563, %v1299
        %v2781 = vmul.f32 %v1628, %v1300
        %v2782 = vmul.f32 %v1693, %v1301
        %v2783 = vmul.f32 %v1758, %v1302
        %v2784 = vmul.f32 %v1823, %v1303
        %v2785 = vmul.f32 %v1888, %v1304
        %v2786 = vmul.f32 %v1953, %v1305
        %v2787 = vmul.f32 %v2018, %v1306
        %v2788 = vmul.f32 %v2083, %v1307
        %v2789 = vmul.f32 %v2148, %v1308
        %v2790 = vmul.f32 %v2213, %v1309
        %v2791 = vmul.f32 %v2278, %v1310
        %v2792 = vmul.f32 %v2343, %v1311
        %v2793 = vmul.f32 %v2408, %v1312
        %v2794 = vmul.f32 %v2473, %v1313
        %v2795 = vmul.f32 %v2538, %v1314
        %v2796 = vadd.f32 %v2540, %v2556
        %v2797 = vrot.slane %v2796, 4
        %v2798 = vadd.f32 %v2796, %v2797
        %v2799 = vrot.slane %v2798, 2
        %v2800 = vadd.f32 %v2798, %v2799
        %v2801 = vrot.slane %v2800, 1
        %v2802 = vadd.f32 %v2800, %v2801
        %v2803 = vadd.f32 %v2541, %v2557
        %v2804 = vrot.slane %v2803, 4
        %v2805 = vadd.f32 %v2803, %v2804
        %v2806 = vrot.slane %v2805, 2
        %v2807 = vadd.f32 %v2805, %v2806
        %v2808 = vrot.slane %v2807, 1
        %v2809 = vadd.f32 %v2807, %v2808
        %v2810 = vadd.f32 %v2542, %v2558
        %v2811 = vrot.slane %v2810, 4
        %v2812 = vadd.f32 %v2810, %v2811
        %v2813 = vrot.slane %v2812, 2
        %v2814 = vadd.f32 %v2812, %v2813
        %v2815 = vrot.slane %v2814, 1
        %v2816 = vadd.f32 %v2814, %v2815
        %v2817 = vadd.f32 %v2543, %v2559
        %v2818 = vrot.slane %v2817, 4
        %v2819 = vadd.f32 %v2817, %v2818
        %v2820 = vrot.slane %v2819, 2
        %v2821 = vadd.f32 %v2819, %v2820
        %v2822 = vrot.slane %v2821, 1
        %v2823 = vadd.f32 %v2821, %v2822
        %v2824 = vadd.f32 %v2544, %v2560
        %v2825 = vrot.slane %v2824, 4
        %v2826 = vadd.f32 %v2824, %v2825
        %v2827 = vrot.slane %v2826, 2
        %v2828 = vadd.f32 %v2826, %v2827
        %v2829 = vrot.slane %v2828, 1
        %v2830 = vadd.f32 %v2828, %v2829
        %v2831 = vadd.f32 %v2545, %v2561
        %v2832 = vrot.slane %v2831, 4
        %v2833 = vadd.f32 %v2831, %v2832
        %v2834 = vrot.slane %v2833, 2
        %v2835 = vadd.f32 %v2833, %v2834
        %v2836 = vrot.slane %v2835, 1
        %v2837 = vadd.f32 %v2835, %v2836
        %v2838 = vadd.f32 %v2546, %v2562
        %v2839 = vrot.slane %v2838, 4
        %v2840 = vadd.f32 %v2838, %v2839
        %v2841 = vrot.slane %v2840, 2
        %v2842 = vadd.f32 %v2840, %v2841
        %v2843 = vrot.slane %v2842, 1
        %v2844 = vadd.f32 %v2842, %v2843
        %v2845 = vadd.f32 %v2547, %v2563
        %v2846 = vrot.slane %v2845, 4
        %v2847 = vadd.f32 %v2845, %v2846
        %v2848 = vrot.slane %v2847, 2
        %v2849 = vadd.f32 %v2847, %v2848
        %v2850 = vrot.slane %v2849, 1
        %v2851 = vadd.f32 %v2849, %v2850
        %v2852 = vadd.f32 %v2548, %v2564
        %v2853 = vrot.slane %v2852, 4
        %v2854 = vadd.f32 %v2852, %v2853
        %v2855 = vrot.slane %v2854, 2
        %v2856 = vadd.f32 %v2854, %v2855
        %v2857 = vrot.slane %v2856, 1
        %v2858 = vadd.f32 %v2856, %v2857
        %v2859 = vadd.f32 %v2549, %v2565
        %v2860 = vrot.slane %v2859, 4
        %v2861 = vadd.f32 %v2859, %v2860
        %v2862 = vrot.slane %v2861, 2
        %v2863 = vadd.f32 %v2861, %v2862
        %v2864 = vrot.slane %v2863, 1
        %v2865 = vadd.f32 %v2863, %v2864
        %v2866 = vadd.f32 %v2550, %v2566
        %v2867 = vrot.slane %v2866, 4
        %v2868 = vadd.f32 %v2866, %v2867
        %v2869 = vrot.slane %v2868, 2
        %v2870 = vadd.f32 %v2868, %v2869
        %v2871 = vrot.slane %v2870, 1
        %v2872 = vadd.f32 %v2870, %v2871
        %v2873 = vadd.f32 %v2551, %v2567
        %v2874 = vrot.slane %v2873, 4
        %v2875 = vadd.f32 %v2873, %v2874
        %v2876 = vrot.slane %v2875, 2
        %v2877 = vadd.f32 %v2875, %v2876
        %v2878 = vrot.slane %v2877, 1
        %v2879 = vadd.f32 %v2877, %v2878
        %v2880 = vadd.f32 %v2552, %v2568
        %v2881 = vrot.slane %v2880, 4
        %v2882 = vadd.f32 %v2880, %v2881
        %v2883 = vrot.slane %v2882, 2
        %v2884 = vadd.f32 %v2882, %v2883
        %v2885 = vrot.slane %v2884, 1
        %v2886 = vadd.f32 %v2884, %v2885
        %v2887 = vadd.f32 %v2553, %v2569
        %v2888 = vrot.slane %v2887, 4
        %v2889 = vadd.f32 %v2887, %v2888
        %v2890 = vrot.slane %v2889, 2
        %v2891 = vadd.f32 %v2889, %v2890
        %v2892 = vrot.slane %v2891, 1
        %v2893 = vadd.f32 %v2891, %v2892
        %v2894 = vadd.f32 %v2554, %v2570
        %v2895 = vrot.slane %v2894, 4
        %v2896 = vadd.f32 %v2894, %v2895
        %v2897 = vrot.slane %v2896, 2
        %v2898 = vadd.f32 %v2896, %v2897
        %v2899 = vrot.slane %v2898, 1
        %v2900 = vadd.f32 %v2898, %v2899
        %v2901 = vadd.f32 %v2555, %v2571
        %v2902 = vrot.slane %v2901, 4
        %v2903 = vadd.f32 %v2901, %v2902
        %v2904 = vrot.slane %v2903, 2
        %v2905 = vadd.f32 %v2903, %v2904
        %v2906 = vrot.slane %v2905, 1
        %v2907 = vadd.f32 %v2905, %v2906
        %v2908 = vadd.f32 %v2572, %v2588
        %v2909 = vrot.slane %v2908, 4
        %v2910 = vadd.f32 %v2908, %v2909
        %v2911 = vrot.slane %v2910, 2
        %v2912 = vadd.f32 %v2910, %v2911
        %v2913 = vrot.slane %v2912, 1
        %v2914 = vadd.f32 %v2912, %v2913
        %v2915 = vadd.f32 %v2573, %v2589
        %v2916 = vrot.slane %v2915, 4
        %v2917 = vadd.f32 %v2915, %v2916
        %v2918 = vrot.slane %v2917, 2
        %v2919 = vadd.f32 %v2917, %v2918
        %v2920 = vrot.slane %v2919, 1
        %v2921 = vadd.f32 %v2919, %v2920
        %v2922 = vadd.f32 %v2574, %v2590
        %v2923 = vrot.slane %v2922, 4
        %v2924 = vadd.f32 %v2922, %v2923
        %v2925 = vrot.slane %v2924, 2
        %v2926 = vadd.f32 %v2924, %v2925
        %v2927 = vrot.slane %v2926, 1
        %v2928 = vadd.f32 %v2926, %v2927
        %v2929 = vadd.f32 %v2575, %v2591
        %v2930 = vrot.slane %v2929, 4
        %v2931 = vadd.f32 %v2929, %v2930
        %v2932 = vrot.slane %v2931, 2
        %v2933 = vadd.f32 %v2931, %v2932
        %v2934 = vrot.slane %v2933, 1
        %v2935 = vadd.f32 %v2933, %v2934
        %v2936 = vadd.f32 %v2576, %v2592
        %v2937 = vrot.slane %v2936, 4
        %v2938 = vadd.f32 %v2936, %v2937
        %v2939 = vrot.slane %v2938, 2
        %v2940 = vadd.f32 %v2938, %v2939
        %v2941 = vrot.slane %v2940, 1
        %v2942 = vadd.f32 %v2940, %v2941
        %v2943 = vadd.f32 %v2577, %v2593
        %v2944 = vrot.slane %v2943, 4
        %v2945 = vadd.f32 %v2943, %v2944
        %v2946 = vrot.slane %v2945, 2
        %v2947 = vadd.f32 %v2945, %v2946
        %v2948 = vrot.slane %v2947, 1
        %v2949 = vadd.f32 %v2947, %v2948
        %v2950 = vadd.f32 %v2578, %v2594
        %v2951 = vrot.slane %v2950, 4
        %v2952 = vadd.f32 %v2950, %v2951
        %v2953 = vrot.slane %v2952, 2
        %v2954 = vadd.f32 %v2952, %v2953
        %v2955 = vrot.slane %v2954, 1
        %v2956 = vadd.f32 %v2954, %v2955
        %v2957 = vadd.f32 %v2579, %v2595
        %v2958 = vrot.slane %v2957, 4
        %v2959 = vadd.f32 %v2957, %v2958
        %v2960 = vrot.slane %v2959, 2
        %v2961 = vadd.f32 %v2959, %v2960
        %v2962 = vrot.slane %v2961, 1
        %v2963 = vadd.f32 %v2961, %v2962
        %v2964 = vadd.f32 %v2580, %v2596
        %v2965 = vrot.slane %v2964, 4
        %v2966 = vadd.f32 %v2964, %v2965
        %v2967 = vrot.slane %v2966, 2
        %v2968 = vadd.f32 %v2966, %v2967
        %v2969 = vrot.slane %v2968, 1
        %v2970 = vadd.f32 %v2968, %v2969
        %v2971 = vadd.f32 %v2581, %v2597
        %v2972 = vrot.slane %v2971, 4
        %v2973 = vadd.f32 %v2971, %v2972
        %v2974 = vrot.slane %v2973, 2
        %v2975 = vadd.f32 %v2973, %v2974
        %v2976 = vrot.slane %v2975, 1
        %v2977 = vadd.f32 %v2975, %v2976
        %v2978 = vadd.f32 %v2582, %v2598
        %v2979 = vrot.slane %v2978, 4
        %v2980 = vadd.f32 %v2978, %v2979
        %v2981 = vrot.slane %v2980, 2
        %v2982 = vadd.f32 %v2980, %v2981
        %v2983 = vrot.slane %v2982, 1
        %v2984 = vadd.f32 %v2982, %v2983
        %v2985 = vadd.f32 %v2583, %v2599
        %v2986 = vrot.slane %v2985, 4
        %v2987 = vadd.f32 %v2985, %v2986
        %v2988 = vrot.slane %v2987, 2
        %v2989 = vadd.f32 %v2987, %v2988
        %v2990 = vrot.slane %v2989, 1
        %v2991 = vadd.f32 %v2989, %v2990
        %v2992 = vadd.f32 %v2584, %v2600
        %v2993 = vrot.slane %v2992, 4
        %v2994 = vadd.f32 %v2992, %v2993
        %v2995 = vrot.slane %v2994, 2
        %v2996 = vadd.f32 %v2994, %v2995
        %v2997 = vrot.slane %v2996, 1
        %v2998 = vadd.f32 %v2996, %v2997
        %v2999 = vadd.f32 %v2585, %v2601
        %v3000 = vrot.slane %v2999, 4
        %v3001 = vadd.f32 %v2999, %v3000
        %v3002 = vrot.slane %v3001, 2
        %v3003 = vadd.f32 %v3001, %v3002
        %v3004 = vrot.slane %v3003, 1
        %v3005 = vadd.f32 %v3003, %v3004
        %v3006 = vadd.f32 %v2586, %v2602
        %v3007 = vrot.slane %v3006, 4
        %v3008 = vadd.f32 %v3006, %v3007
        %v3009 = vrot.slane %v3008, 2
        %v3010 = vadd.f32 %v3008, %v3009
        %v3011 = vrot.slane %v3010, 1
        %v3012 = vadd.f32 %v3010, %v3011
        %v3013 = vadd.f32 %v2587, %v2603
        %v3014 = vrot.slane %v3013, 4
        %v3015 = vadd.f32 %v3013, %v3014
        %v3016 = vrot.slane %v3015, 2
        %v3017 = vadd.f32 %v3015, %v3016
        %v3018 = vrot.slane %v3017, 1
        %v3019 = vadd.f32 %v3017, %v3018
        %v3020 = vadd.f32 %v2604, %v2620
        %v3021 = vrot.slane %v3020, 4
        %v3022 = vadd.f32 %v3020, %v3021
        %v3023 = vrot.slane %v3022, 2
        %v3024 = vadd.f32 %v3022, %v3023
        %v3025 = vrot.slane %v3024, 1
        %v3026 = vadd.f32 %v3024, %v3025
        %v3027 = vadd.f32 %v2605, %v2621
        %v3028 = vrot.slane %v3027, 4
        %v3029 = vadd.f32 %v3027, %v3028
        %v3030 = vrot.slane %v3029, 2
        %v3031 = vadd.f32 %v3029, %v3030
        %v3032 = vrot.slane %v3031, 1
        %v3033 = vadd.f32 %v3031, %v3032
        %v3034 = vadd.f32 %v2606, %v2622
        %v3035 = vrot.slane %v3034, 4
        %v3036 = vadd.f32 %v3034, %v3035
        %v3037 = vrot.slane %v3036, 2
        %v3038 = vadd.f32 %v3036, %v3037
        %v3039 = vrot.slane %v3038, 1
        %v3040 = vadd.f32 %v3038, %v3039
        %v3041 = vadd.f32 %v2607, %v2623
        %v3042 = vrot.slane %v3041, 4
        %v3043 = vadd.f32 %v3041, %v3042
        %v3044 = vrot.slane %v3043, 2
        %v3045 = vadd.f32 %v3043, %v3044
        %v3046 = vrot.slane %v3045, 1
        %v3047 = vadd.f32 %v3045, %v3046
        %v3048 = vadd.f32 %v2608, %v2624
        %v3049 = vrot.slane %v3048, 4
        %v3050 = vadd.f32 %v3048, %v3049
        %v3051 = vrot.slane %v3050, 2
        %v3052 = vadd.f32 %v3050, %v3051
        %v3053 = vrot.slane %v3052, 1
        %v3054 = vadd.f32 %v3052, %v3053
        %v3055 = vadd.f32 %v2609, %v2625
        %v3056 = vrot.slane %v3055, 4
        %v3057 = vadd.f32 %v3055, %v3056
        %v3058 = vrot.slane %v3057, 2
        %v3059 = vadd.f32 %v3057, %v3058
        %v3060 = vrot.slane %v3059, 1
        %v3061 = vadd.f32 %v3059, %v3060
        %v3062 = vadd.f32 %v2610, %v2626
        %v3063 = vrot.slane %v3062, 4
        %v3064 = vadd.f32 %v3062, %v3063
        %v3065 = vrot.slane %v3064, 2
        %v3066 = vadd.f32 %v3064, %v3065
        %v3067 = vrot.slane %v3066, 1
        %v3068 = vadd.f32 %v3066, %v3067
        %v3069 = vadd.f32 %v2611, %v2627
        %v3070 = vrot.slane %v3069, 4
        %v3071 = vadd.f32 %v3069, %v3070
        %v3072 = vrot.slane %v3071, 2
        %v3073 = vadd.f32 %v3071, %v3072
        %v3074 = vrot.slane %v3073, 1
        %v3075 = vadd.f32 %v3073, %v3074
        %v3076 = vadd.f32 %v2612, %v2628
        %v3077 = vrot.slane %v3076, 4
        %v3078 = vadd.f32 %v3076, %v3077
        %v3079 = vrot.slane %v3078, 2
        %v3080 = vadd.f32 %v3078, %v3079
        %v3081 = vrot.slane %v3080, 1
        %v3082 = vadd.f32 %v3080, %v3081
        %v3083 = vadd.f32 %v2613, %v2629
        %v3084 = vrot.slane %v3083, 4
        %v3085 = vadd.f32 %v3083, %v3084
        %v3086 = vrot.slane %v3085, 2
        %v3087 = vadd.f32 %v3085, %v3086
        %v3088 = vrot.slane %v3087, 1
        %v3089 = vadd.f32 %v3087, %v3088
        %v3090 = vadd.f32 %v2614, %v2630
        %v3091 = vrot.slane %v3090, 4
        %v3092 = vadd.f32 %v3090, %v3091
        %v3093 = vrot.slane %v3092, 2
        %v3094 = vadd.f32 %v3092, %v3093
        %v3095 = vrot.slane %v3094, 1
        %v3096 = vadd.f32 %v3094, %v3095
        %v3097 = vadd.f32 %v2615, %v2631
        %v3098 = vrot.slane %v3097, 4
        %v3099 = vadd.f32 %v3097, %v3098
        %v3100 = vrot.slane %v3099, 2
        %v3101 = vadd.f32 %v3099, %v3100
        %v3102 = vrot.slane %v3101, 1
        %v3103 = vadd.f32 %v3101, %v3102
        %v3104 = vadd.f32 %v2616, %v2632
        %v3105 = vrot.slane %v3104, 4
        %v3106 = vadd.f32 %v3104, %v3105
        %v3107 = vrot.slane %v3106, 2
        %v3108 = vadd.f32 %v3106, %v3107
        %v3109 = vrot.slane %v3108, 1
        %v3110 = vadd.f32 %v3108, %v3109
        %v3111 = vadd.f32 %v2617, %v2633
        %v3112 = vrot.slane %v3111, 4
        %v3113 = vadd.f32 %v3111, %v3112
        %v3114 = vrot.slane %v3113, 2
        %v3115 = vadd.f32 %v3113, %v3114
        %v3116 = vrot.slane %v3115, 1
        %v3117 = vadd.f32 %v3115, %v3116
        %v3118 = vadd.f32 %v2618, %v2634
        %v3119 = vrot.slane %v3118, 4
        %v3120 = vadd.f32 %v3118, %v3119
        %v3121 = vrot.slane %v3120, 2
        %v3122 = vadd.f32 %v3120, %v3121
        %v3123 = vrot.slane %v3122, 1
        %v3124 = vadd.f32 %v3122, %v3123
        %v3125 = vadd.f32 %v2619, %v2635
        %v3126 = vrot.slane %v3125, 4
        %v3127 = vadd.f32 %v3125, %v3126
        %v3128 = vrot.slane %v3127, 2
        %v3129 = vadd.f32 %v3127, %v3128
        %v3130 = vrot.slane %v3129, 1
        %v3131 = vadd.f32 %v3129, %v3130
        %v3132 = vadd.f32 %v2636, %v2652
        %v3133 = vrot.slane %v3132, 4
        %v3134 = vadd.f32 %v3132, %v3133
        %v3135 = vrot.slane %v3134, 2
        %v3136 = vadd.f32 %v3134, %v3135
        %v3137 = vrot.slane %v3136, 1
        %v3138 = vadd.f32 %v3136, %v3137
        %v3139 = vadd.f32 %v2637, %v2653
        %v3140 = vrot.slane %v3139, 4
        %v3141 = vadd.f32 %v3139, %v3140
        %v3142 = vrot.slane %v3141, 2
        %v3143 = vadd.f32 %v3141, %v3142
        %v3144 = vrot.slane %v3143, 1
        %v3145 = vadd.f32 %v3143, %v3144
        %v3146 = vadd.f32 %v2638, %v2654
        %v3147 = vrot.slane %v3146, 4
        %v3148 = vadd.f32 %v3146, %v3147
        %v3149 = vrot.slane %v3148, 2
        %v3150 = vadd.f32 %v3148, %v3149
        %v3151 = vrot.slane %v3150, 1
        %v3152 = vadd.f32 %v3150, %v3151
        %v3153 = vadd.f32 %v2639, %v2655
        %v3154 = vrot.slane %v3153, 4
        %v3155 = vadd.f32 %v3153, %v3154
        %v3156 = vrot.slane %v3155, 2
        %v3157 = vadd.f32 %v3155, %v3156
        %v3158 = vrot.slane %v3157, 1
        %v3159 = vadd.f32 %v3157, %v3158
        %v3160 = vadd.f32 %v2640, %v2656
        %v3161 = vrot.slane %v3160, 4
        %v3162 = vadd.f32 %v3160, %v3161
        %v3163 = vrot.slane %v3162, 2
        %v3164 = vadd.f32 %v3162, %v3163
        %v3165 = vrot.slane %v3164, 1
        %v3166 = vadd.f32 %v3164, %v3165
        %v3167 = vadd.f32 %v2641, %v2657
        %v3168 = vrot.slane %v3167, 4
        %v3169 = vadd.f32 %v3167, %v3168
        %v3170 = vrot.slane %v3169, 2
        %v3171 = vadd.f32 %v3169, %v3170
        %v3172 = vrot.slane %v3171, 1
        %v3173 = vadd.f32 %v3171, %v3172
        %v3174 = vadd.f32 %v2642, %v2658
        %v3175 = vrot.slane %v3174, 4
        %v3176 = vadd.f32 %v3174, %v3175
        %v3177 = vrot.slane %v3176, 2
        %v3178 = vadd.f32 %v3176, %v3177
        %v3179 = vrot.slane %v3178, 1
        %v3180 = vadd.f32 %v3178, %v3179
        %v3181 = vadd.f32 %v2643, %v2659
        %v3182 = vrot.slane %v3181, 4
        %v3183 = vadd.f32 %v3181, %v3182
        %v3184 = vrot.slane %v3183, 2
        %v3185 = vadd.f32 %v3183, %v3184
        %v3186 = vrot.slane %v3185, 1
        %v3187 = vadd.f32 %v3185, %v3186
        %v3188 = vadd.f32 %v2644, %v2660
        %v3189 = vrot.slane %v3188, 4
        %v3190 = vadd.f32 %v3188, %v3189
        %v3191 = vrot.slane %v3190, 2
        %v3192 = vadd.f32 %v3190, %v3191
        %v3193 = vrot.slane %v3192, 1
        %v3194 = vadd.f32 %v3192, %v3193
        %v3195 = vadd.f32 %v2645, %v2661
        %v3196 = vrot.slane %v3195, 4
        %v3197 = vadd.f32 %v3195, %v3196
        %v3198 = vrot.slane %v3197, 2
        %v3199 = vadd.f32 %v3197, %v3198
        %v3200 = vrot.slane %v3199, 1
        %v3201 = vadd.f32 %v3199, %v3200
        %v3202 = vadd.f32 %v2646, %v2662
        %v3203 = vrot.slane %v3202, 4
        %v3204 = vadd.f32 %v3202, %v3203
        %v3205 = vrot.slane %v3204, 2
        %v3206 = vadd.f32 %v3204, %v3205
        %v3207 = vrot.slane %v3206, 1
        %v3208 = vadd.f32 %v3206, %v3207
        %v3209 = vadd.f32 %v2647, %v2663
        %v3210 = vrot.slane %v3209, 4
        %v3211 = vadd.f32 %v3209, %v3210
        %v3212 = vrot.slane %v3211, 2
        %v3213 = vadd.f32 %v3211, %v3212
        %v3214 = vrot.slane %v3213, 1
        %v3215 = vadd.f32 %v3213, %v3214
        %v3216 = vadd.f32 %v2648, %v2664
        %v3217 = vrot.slane %v3216, 4
        %v3218 = vadd.f32 %v3216, %v3217
        %v3219 = vrot.slane %v3218, 2
        %v3220 = vadd.f32 %v3218, %v3219
        %v3221 = vrot.slane %v3220, 1
        %v3222 = vadd.f32 %v3220, %v3221
        %v3223 = vadd.f32 %v2649, %v2665
        %v3224 = vrot.slane %v3223, 4
        %v3225 = vadd.f32 %v3223, %v3224
        %v3226 = vrot.slane %v3225, 2
        %v3227 = vadd.f32 %v3225, %v3226
        %v3228 = vrot.slane %v3227, 1
        %v3229 = vadd.f32 %v3227, %v3228
        %v3230 = vadd.f32 %v2650, %v2666
        %v3231 = vrot.slane %v3230, 4
        %v3232 = vadd.f32 %v3230, %v3231
        %v3233 = vrot.slane %v3232, 2
        %v3234 = vadd.f32 %v3232, %v3233
        %v3235 = vrot.slane %v3234, 1
        %v3236 = vadd.f32 %v3234, %v3235
        %v3237 = vadd.f32 %v2651, %v2667
        %v3238 = vrot.slane %v3237, 4
        %v3239 = vadd.f32 %v3237, %v3238
        %v3240 = vrot.slane %v3239, 2
        %v3241 = vadd.f32 %v3239, %v3240
        %v3242 = vrot.slane %v3241, 1
        %v3243 = vadd.f32 %v3241, %v3242
        %v3244 = vadd.f32 %v2668, %v2684
        %v3245 = vrot.slane %v3244, 4
        %v3246 = vadd.f32 %v3244, %v3245
        %v3247 = vrot.slane %v3246, 2
        %v3248 = vadd.f32 %v3246, %v3247
        %v3249 = vrot.slane %v3248, 1
        %v3250 = vadd.f32 %v3248, %v3249
        %v3251 = vadd.f32 %v2669, %v2685
        %v3252 = vrot.slane %v3251, 4
        %v3253 = vadd.f32 %v3251, %v3252
        %v3254 = vrot.slane %v3253, 2
        %v3255 = vadd.f32 %v3253, %v3254
        %v3256 = vrot.slane %v3255, 1
        %v3257 = vadd.f32 %v3255, %v3256
        %v3258 = vadd.f32 %v2670, %v2686
        %v3259 = vrot.slane %v3258, 4
        %v3260 = vadd.f32 %v3258, %v3259
        %v3261 = vrot.slane %v3260, 2
        %v3262 = vadd.f32 %v3260, %v3261
        %v3263 = vrot.slane %v3262, 1
        %v3264 = vadd.f32 %v3262, %v3263
        %v3265 = vadd.f32 %v2671, %v2687
        %v3266 = vrot.slane %v3265, 4
        %v3267 = vadd.f32 %v3265, %v3266
        %v3268 = vrot.slane %v3267, 2
        %v3269 = vadd.f32 %v3267, %v3268
        %v3270 = vrot.slane %v3269, 1
        %v3271 = vadd.f32 %v3269, %v3270
        %v3272 = vadd.f32 %v2672, %v2688
        %v3273 = vrot.slane %v3272, 4
        %v3274 = vadd.f32 %v3272, %v3273
        %v3275 = vrot.slane %v3274, 2
        %v3276 = vadd.f32 %v3274, %v3275
        %v3277 = vrot.slane %v3276, 1
        %v3278 = vadd.f32 %v3276, %v3277
        %v3279 = vadd.f32 %v2673, %v2689
        %v3280 = vrot.slane %v3279, 4
        %v3281 = vadd.f32 %v3279, %v3280
        %v3282 = vrot.slane %v3281, 2
        %v3283 = vadd.f32 %v3281, %v3282
        %v3284 = vrot.slane %v3283, 1
        %v3285 = vadd.f32 %v3283, %v3284
        %v3286 = vadd.f32 %v2674, %v2690
        %v3287 = vrot.slane %v3286, 4
        %v3288 = vadd.f32 %v3286, %v3287
        %v3289 = vrot.slane %v3288, 2
        %v3290 = vadd.f32 %v3288, %v3289
        %v3291 = vrot.slane %v3290, 1
        %v3292 = vadd.f32 %v3290, %v3291
        %v3293 = vadd.f32 %v2675, %v2691
        %v3294 = vrot.slane %v3293, 4
        %v3295 = vadd.f32 %v3293, %v3294
        %v3296 = vrot.slane %v3295, 2
        %v3297 = vadd.f32 %v3295, %v3296
        %v3298 = vrot.slane %v3297, 1
        %v3299 = vadd.f32 %v3297, %v3298
        %v3300 = vadd.f32 %v2676, %v2692
        %v3301 = vrot.slane %v3300, 4
        %v3302 = vadd.f32 %v3300, %v3301
        %v3303 = vrot.slane %v3302, 2
        %v3304 = vadd.f32 %v3302, %v3303
        %v3305 = vrot.slane %v3304, 1
        %v3306 = vadd.f32 %v3304, %v3305
        %v3307 = vadd.f32 %v2677, %v2693
        %v3308 = vrot.slane %v3307, 4
        %v3309 = vadd.f32 %v3307, %v3308
        %v3310 = vrot.slane %v3309, 2
        %v3311 = vadd.f32 %v3309, %v3310
        %v3312 = vrot.slane %v3311, 1
        %v3313 = vadd.f32 %v3311, %v3312
        %v3314 = vadd.f32 %v2678, %v2694
        %v3315 = vrot.slane %v3314, 4
        %v3316 = vadd.f32 %v3314, %v3315
        %v3317 = vrot.slane %v3316, 2
        %v3318 = vadd.f32 %v3316, %v3317
        %v3319 = vrot.slane %v3318, 1
        %v3320 = vadd.f32 %v3318, %v3319
        %v3321 = vadd.f32 %v2679, %v2695
        %v3322 = vrot.slane %v3321, 4
        %v3323 = vadd.f32 %v3321, %v3322
        %v3324 = vrot.slane %v3323, 2
        %v3325 = vadd.f32 %v3323, %v3324
        %v3326 = vrot.slane %v3325, 1
        %v3327 = vadd.f32 %v3325, %v3326
        %v3328 = vadd.f32 %v2680, %v2696
        %v3329 = vrot.slane %v3328, 4
        %v3330 = vadd.f32 %v3328, %v3329
        %v3331 = vrot.slane %v3330, 2
        %v3332 = vadd.f32 %v3330, %v3331
        %v3333 = vrot.slane %v3332, 1
        %v3334 = vadd.f32 %v3332, %v3333
        %v3335 = vadd.f32 %v2681, %v2697
        %v3336 = vrot.slane %v3335, 4
        %v3337 = vadd.f32 %v3335, %v3336
        %v3338 = vrot.slane %v3337, 2
        %v3339 = vadd.f32 %v3337, %v3338
        %v3340 = vrot.slane %v3339, 1
        %v3341 = vadd.f32 %v3339, %v3340
        %v3342 = vadd.f32 %v2682, %v2698
        %v3343 = vrot.slane %v3342, 4
        %v3344 = vadd.f32 %v3342, %v3343
        %v3345 = vrot.slane %v3344, 2
        %v3346 = vadd.f32 %v3344, %v3345
        %v3347 = vrot.slane %v3346, 1
        %v3348 = vadd.f32 %v3346, %v3347
        %v3349 = vadd.f32 %v2683, %v2699
        %v3350 = vrot.slane %v3349, 4
        %v3351 = vadd.f32 %v3349, %v3350
        %v3352 = vrot.slane %v3351, 2
        %v3353 = vadd.f32 %v3351, %v3352
        %v3354 = vrot.slane %v3353, 1
        %v3355 = vadd.f32 %v3353, %v3354
        %v3356 = vadd.f32 %v2700, %v2716
        %v3357 = vrot.slane %v3356, 4
        %v3358 = vadd.f32 %v3356, %v3357
        %v3359 = vrot.slane %v3358, 2
        %v3360 = vadd.f32 %v3358, %v3359
        %v3361 = vrot.slane %v3360, 1
        %v3362 = vadd.f32 %v3360, %v3361
        %v3363 = vadd.f32 %v2701, %v2717
        %v3364 = vrot.slane %v3363, 4
        %v3365 = vadd.f32 %v3363, %v3364
        %v3366 = vrot.slane %v3365, 2
        %v3367 = vadd.f32 %v3365, %v3366
        %v3368 = vrot.slane %v3367, 1
        %v3369 = vadd.f32 %v3367, %v3368
        %v3370 = vadd.f32 %v2702, %v2718
        %v3371 = vrot.slane %v3370, 4
        %v3372 = vadd.f32 %v3370, %v3371
        %v3373 = vrot.slane %v3372, 2
        %v3374 = vadd.f32 %v3372, %v3373
        %v3375 = vrot.slane %v3374, 1
        %v3376 = vadd.f32 %v3374, %v3375
        %v3377 = vadd.f32 %v2703, %v2719
        %v3378 = vrot.slane %v3377, 4
        %v3379 = vadd.f32 %v3377, %v3378
        %v3380 = vrot.slane %v3379, 2
        %v3381 = vadd.f32 %v3379, %v3380
        %v3382 = vrot.slane %v3381, 1
        %v3383 = vadd.f32 %v3381, %v3382
        %v3384 = vadd.f32 %v2704, %v2720
        %v3385 = vrot.slane %v3384, 4
        %v3386 = vadd.f32 %v3384, %v3385
        %v3387 = vrot.slane %v3386, 2
        %v3388 = vadd.f32 %v3386, %v3387
        %v3389 = vrot.slane %v3388, 1
        %v3390 = vadd.f32 %v3388, %v3389
        %v3391 = vadd.f32 %v2705, %v2721
        %v3392 = vrot.slane %v3391, 4
        %v3393 = vadd.f32 %v3391, %v3392
        %v3394 = vrot.slane %v3393, 2
        %v3395 = vadd.f32 %v3393, %v3394
        %v3396 = vrot.slane %v3395, 1
        %v3397 = vadd.f32 %v3395, %v3396
        %v3398 = vadd.f32 %v2706, %v2722
        %v3399 = vrot.slane %v3398, 4
        %v3400 = vadd.f32 %v3398, %v3399
        %v3401 = vrot.slane %v3400, 2
        %v3402 = vadd.f32 %v3400, %v3401
        %v3403 = vrot.slane %v3402, 1
        %v3404 = vadd.f32 %v3402, %v3403
        %v3405 = vadd.f32 %v2707, %v2723
        %v3406 = vrot.slane %v3405, 4
        %v3407 = vadd.f32 %v3405, %v3406
        %v3408 = vrot.slane %v3407, 2
        %v3409 = vadd.f32 %v3407, %v3408
        %v3410 = vrot.slane %v3409, 1
        %v3411 = vadd.f32 %v3409, %v3410
        %v3412 = vadd.f32 %v2708, %v2724
        %v3413 = vrot.slane %v3412, 4
        %v3414 = vadd.f32 %v3412, %v3413
        %v3415 = vrot.slane %v3414, 2
        %v3416 = vadd.f32 %v3414, %v3415
        %v3417 = vrot.slane %v3416, 1
        %v3418 = vadd.f32 %v3416, %v3417
        %v3419 = vadd.f32 %v2709, %v2725
        %v3420 = vrot.slane %v3419, 4
        %v3421 = vadd.f32 %v3419, %v3420
        %v3422 = vrot.slane %v3421, 2
        %v3423 = vadd.f32 %v3421, %v3422
        %v3424 = vrot.slane %v3423, 1
        %v3425 = vadd.f32 %v3423, %v3424
        %v3426 = vadd.f32 %v2710, %v2726
        %v3427 = vrot.slane %v3426, 4
        %v3428 = vadd.f32 %v3426, %v3427
        %v3429 = vrot.slane %v3428, 2
        %v3430 = vadd.f32 %v3428, %v3429
        %v3431 = vrot.slane %v3430, 1
        %v3432 = vadd.f32 %v3430, %v3431
        %v3433 = vadd.f32 %v2711, %v2727
        %v3434 = vrot.slane %v3433, 4
        %v3435 = vadd.f32 %v3433, %v3434
        %v3436 = vrot.slane %v3435, 2
        %v3437 = vadd.f32 %v3435, %v3436
        %v3438 = vrot.slane %v3437, 1
        %v3439 = vadd.f32 %v3437, %v3438
        %v3440 = vadd.f32 %v2712, %v2728
        %v3441 = vrot.slane %v3440, 4
        %v3442 = vadd.f32 %v3440, %v3441
        %v3443 = vrot.slane %v3442, 2
        %v3444 = vadd.f32 %v3442, %v3443
        %v3445 = vrot.slane %v3444, 1
        %v3446 = vadd.f32 %v3444, %v3445
        %v3447 = vadd.f32 %v2713, %v2729
        %v3448 = vrot.slane %v3447, 4
        %v3449 = vadd.f32 %v3447, %v3448
        %v3450 = vrot.slane %v3449, 2
        %v3451 = vadd.f32 %v3449, %v3450
        %v3452 = vrot.slane %v3451, 1
        %v3453 = vadd.f32 %v3451, %v3452
        %v3454 = vadd.f32 %v2714, %v2730
        %v3455 = vrot.slane %v3454, 4
        %v3456 = vadd.f32 %v3454, %v3455
        %v3457 = vrot.slane %v3456, 2
        %v3458 = vadd.f32 %v3456, %v3457
        %v3459 = vrot.slane %v3458, 1
        %v3460 = vadd.f32 %v3458, %v3459
        %v3461 = vadd.f32 %v2715, %v2731
        %v3462 = vrot.slane %v3461, 4
        %v3463 = vadd.f32 %v3461, %v3462
        %v3464 = vrot.slane %v3463, 2
        %v3465 = vadd.f32 %v3463, %v3464
        %v3466 = vrot.slane %v3465, 1
        %v3467 = vadd.f32 %v3465, %v3466
        %v3468 = vadd.f32 %v2732, %v2748
        %v3469 = vrot.slane %v3468, 4
        %v3470 = vadd.f32 %v3468, %v3469
        %v3471 = vrot.slane %v3470, 2
        %v3472 = vadd.f32 %v3470, %v3471
        %v3473 = vrot.slane %v3472, 1
        %v3474 = vadd.f32 %v3472, %v3473
        %v3475 = vadd.f32 %v2733, %v2749
        %v3476 = vrot.slane %v3475, 4
        %v3477 = vadd.f32 %v3475, %v3476
        %v3478 = vrot.slane %v3477, 2
        %v3479 = vadd.f32 %v3477, %v3478
        %v3480 = vrot.slane %v3479, 1
        %v3481 = vadd.f32 %v3479, %v3480
        %v3482 = vadd.f32 %v2734, %v2750
        %v3483 = vrot.slane %v3482, 4
        %v3484 = vadd.f32 %v3482, %v3483
        %v3485 = vrot.slane %v3484, 2
        %v3486 = vadd.f32 %v3484, %v3485
        %v3487 = vrot.slane %v3486, 1
        %v3488 = vadd.f32 %v3486, %v3487
        %v3489 = vadd.f32 %v2735, %v2751
        %v3490 = vrot.slane %v3489, 4
        %v3491 = vadd.f32 %v3489, %v3490
        %v3492 = vrot.slane %v3491, 2
        %v3493 = vadd.f32 %v3491, %v3492
        %v3494 = vrot.slane %v3493, 1
        %v3495 = vadd.f32 %v3493, %v3494
        %v3496 = vadd.f32 %v2736, %v2752
        %v3497 = vrot.slane %v3496, 4
        %v3498 = vadd.f32 %v3496, %v3497
        %v3499 = vrot.slane %v3498, 2
        %v3500 = vadd.f32 %v3498, %v3499
        %v3501 = vrot.slane %v3500, 1
        %v3502 = vadd.f32 %v3500, %v3501
        %v3503 = vadd.f32 %v2737, %v2753
        %v3504 = vrot.slane %v3503, 4
        %v3505 = vadd.f32 %v3503, %v3504
        %v3506 = vrot.slane %v3505, 2
        %v3507 = vadd.f32 %v3505, %v3506
        %v3508 = vrot.slane %v3507, 1
        %v3509 = vadd.f32 %v3507, %v3508
        %v3510 = vadd.f32 %v2738, %v2754
        %v3511 = vrot.slane %v3510, 4
        %v3512 = vadd.f32 %v3510, %v3511
        %v3513 = vrot.slane %v3512, 2
        %v3514 = vadd.f32 %v3512, %v3513
        %v3515 = vrot.slane %v3514, 1
        %v3516 = vadd.f32 %v3514, %v3515
        %v3517 = vadd.f32 %v2739, %v2755
        %v3518 = vrot.slane %v3517, 4
        %v3519 = vadd.f32 %v3517, %v3518
        %v3520 = vrot.slane %v3519, 2
        %v3521 = vadd.f32 %v3519, %v3520
        %v3522 = vrot.slane %v3521, 1
        %v3523 = vadd.f32 %v3521, %v3522
        %v3524 = vadd.f32 %v2740, %v2756
        %v3525 = vrot.slane %v3524, 4
        %v3526 = vadd.f32 %v3524, %v3525
        %v3527 = vrot.slane %v3526, 2
        %v3528 = vadd.f32 %v3526, %v3527
        %v3529 = vrot.slane %v3528, 1
        %v3530 = vadd.f32 %v3528, %v3529
        %v3531 = vadd.f32 %v2741, %v2757
        %v3532 = vrot.slane %v3531, 4
        %v3533 = vadd.f32 %v3531, %v3532
        %v3534 = vrot.slane %v3533, 2
        %v3535 = vadd.f32 %v3533, %v3534
        %v3536 = vrot.slane %v3535, 1
        %v3537 = vadd.f32 %v3535, %v3536
        %v3538 = vadd.f32 %v2742, %v2758
        %v3539 = vrot.slane %v3538, 4
        %v3540 = vadd.f32 %v3538, %v3539
        %v3541 = vrot.slane %v3540, 2
        %v3542 = vadd.f32 %v3540, %v3541
        %v3543 = vrot.slane %v3542, 1
        %v3544 = vadd.f32 %v3542, %v3543
        %v3545 = vadd.f32 %v2743, %v2759
        %v3546 = vrot.slane %v3545, 4
        %v3547 = vadd.f32 %v3545, %v3546
        %v3548 = vrot.slane %v3547, 2
        %v3549 = vadd.f32 %v3547, %v3548
        %v3550 = vrot.slane %v3549, 1
        %v3551 = vadd.f32 %v3549, %v3550
        %v3552 = vadd.f32 %v2744, %v2760
        %v3553 = vrot.slane %v3552, 4
        %v3554 = vadd.f32 %v3552, %v3553
        %v3555 = vrot.slane %v3554, 2
        %v3556 = vadd.f32 %v3554, %v3555
        %v3557 = vrot.slane %v3556, 1
        %v3558 = vadd.f32 %v3556, %v3557
        %v3559 = vadd.f32 %v2745, %v2761
        %v3560 = vrot.slane %v3559, 4
        %v3561 = vadd.f32 %v3559, %v3560
        %v3562 = vrot.slane %v3561, 2
        %v3563 = vadd.f32 %v3561, %v3562
        %v3564 = vrot.slane %v3563, 1
        %v3565 = vadd.f32 %v3563, %v3564
        %v3566 = vadd.f32 %v2746, %v2762
        %v3567 = vrot.slane %v3566, 4
        %v3568 = vadd.f32 %v3566, %v3567
        %v3569 = vrot.slane %v3568, 2
        %v3570 = vadd.f32 %v3568, %v3569
        %v3571 = vrot.slane %v3570, 1
        %v3572 = vadd.f32 %v3570, %v3571
        %v3573 = vadd.f32 %v2747, %v2763
        %v3574 = vrot.slane %v3573, 4
        %v3575 = vadd.f32 %v3573, %v3574
        %v3576 = vrot.slane %v3575, 2
        %v3577 = vadd.f32 %v3575, %v3576
        %v3578 = vrot.slane %v3577, 1
        %v3579 = vadd.f32 %v3577, %v3578
        %v3580 = vadd.f32 %v2764, %v2780
        %v3581 = vrot.slane %v3580, 4
        %v3582 = vadd.f32 %v3580, %v3581
        %v3583 = vrot.slane %v3582, 2
        %v3584 = vadd.f32 %v3582, %v3583
        %v3585 = vrot.slane %v3584, 1
        %v3586 = vadd.f32 %v3584, %v3585
        %v3587 = vadd.f32 %v2765, %v2781
        %v3588 = vrot.slane %v3587, 4
        %v3589 = vadd.f32 %v3587, %v3588
        %v3590 = vrot.slane %v3589, 2
        %v3591 = vadd.f32 %v3589, %v3590
        %v3592 = vrot.slane %v3591, 1
        %v3593 = vadd.f32 %v3591, %v3592
        %v3594 = vadd.f32 %v2766, %v2782
        %v3595 = vrot.slane %v3594, 4
        %v3596 = vadd.f32 %v3594, %v3595
        %v3597 = vrot.slane %v3596, 2
        %v3598 = vadd.f32 %v3596, %v3597
        %v3599 = vrot.slane %v3598, 1
        %v3600 = vadd.f32 %v3598, %v3599
        %v3601 = vadd.f32 %v2767, %v2783
        %v3602 = vrot.slane %v3601, 4
        %v3603 = vadd.f32 %v3601, %v3602
        %v3604 = vrot.slane %v3603, 2
        %v3605 = vadd.f32 %v3603, %v3604
        %v3606 = vrot.slane %v3605, 1
        %v3607 = vadd.f32 %v3605, %v3606
        %v3608 = vadd.f32 %v2768, %v2784
        %v3609 = vrot.slane %v3608, 4
        %v3610 = vadd.f32 %v3608, %v3609
        %v3611 = vrot.slane %v3610, 2
        %v3612 = vadd.f32 %v3610, %v3611
        %v3613 = vrot.slane %v3612, 1
        %v3614 = vadd.f32 %v3612, %v3613
        %v3615 = vadd.f32 %v2769, %v2785
        %v3616 = vrot.slane %v3615, 4
        %v3617 = vadd.f32 %v3615, %v3616
        %v3618 = vrot.slane %v3617, 2
        %v3619 = vadd.f32 %v3617, %v3618
        %v3620 = vrot.slane %v3619, 1
        %v3621 = vadd.f32 %v3619, %v3620
        %v3622 = vadd.f32 %v2770, %v2786
        %v3623 = vrot.slane %v3622, 4
        %v3624 = vadd.f32 %v3622, %v3623
        %v3625 = vrot.slane %v3624, 2
        %v3626 = vadd.f32 %v3624, %v3625
        %v3627 = vrot.slane %v3626, 1
        %v3628 = vadd.f32 %v3626, %v3627
        %v3629 = vadd.f32 %v2771, %v2787
        %v3630 = vrot.slane %v3629, 4
        %v3631 = vadd.f32 %v3629, %v3630
        %v3632 = vrot.slane %v3631, 2
        %v3633 = vadd.f32 %v3631, %v3632
        %v3634 = vrot.slane %v3633, 1
        %v3635 = vadd.f32 %v3633, %v3634
        %v3636 = vadd.f32 %v2772, %v2788
        %v3637 = vrot.slane %v3636, 4
        %v3638 = vadd.f32 %v3636, %v3637
        %v3639 = vrot.slane %v3638, 2
        %v3640 = vadd.f32 %v3638, %v3639
        %v3641 = vrot.slane %v3640, 1
        %v3642 = vadd.f32 %v3640, %v3641
        %v3643 = vadd.f32 %v2773, %v2789
        %v3644 = vrot.slane %v3643, 4
        %v3645 = vadd.f32 %v3643, %v3644
        %v3646 = vrot.slane %v3645, 2
        %v3647 = vadd.f32 %v3645, %v3646
        %v3648 = vrot.slane %v3647, 1
        %v3649 = vadd.f32 %v3647, %v3648
        %v3650 = vadd.f32 %v2774, %v2790
        %v3651 = vrot.slane %v3650, 4
        %v3652 = vadd.f32 %v3650, %v3651
        %v3653 = vrot.slane %v3652, 2
        %v3654 = vadd.f32 %v3652, %v3653
        %v3655 = vrot.slane %v3654, 1
        %v3656 = vadd.f32 %v3654, %v3655
        %v3657 = vadd.f32 %v2775, %v2791
        %v3658 = vrot.slane %v3657, 4
        %v3659 = vadd.f32 %v3657, %v3658
        %v3660 = vrot.slane %v3659, 2
        %v3661 = vadd.f32 %v3659, %v3660
        %v3662 = vrot.slane %v3661, 1
        %v3663 = vadd.f32 %v3661, %v3662
        %v3664 = vadd.f32 %v2776, %v2792
        %v3665 = vrot.slane %v3664, 4
        %v3666 = vadd.f32 %v3664, %v3665
        %v3667 = vrot.slane %v3666, 2
        %v3668 = vadd.f32 %v3666, %v3667
        %v3669 = vrot.slane %v3668, 1
        %v3670 = vadd.f32 %v3668, %v3669
        %v3671 = vadd.f32 %v2777, %v2793
        %v3672 = vrot.slane %v3671, 4
        %v3673 = vadd.f32 %v3671, %v3672
        %v3674 = vrot.slane %v3673, 2
        %v3675 = vadd.f32 %v3673, %v3674
        %v3676 = vrot.slane %v3675, 1
        %v3677 = vadd.f32 %v3675, %v3676
        %v3678 = vadd.f32 %v2778, %v2794
        %v3679 = vrot.slane %v3678, 4
        %v3680 = vadd.f32 %v3678, %v3679
        %v3681 = vrot.slane %v3680, 2
        %v3682 = vadd.f32 %v3680, %v3681
        %v3683 = vrot.slane %v3682, 1
        %v3684 = vadd.f32 %v3682, %v3683
        %v3685 = vadd.f32 %v2779, %v2795
        %v3686 = vrot.slane %v3685, 4
        %v3687 = vadd.f32 %v3685, %v3686
        %v3688 = vrot.slane %v3687, 2
        %v3689 = vadd.f32 %v3687, %v3688
        %v3690 = vrot.slane %v3689, 1
        %v3691 = vadd.f32 %v3689, %v3690
        %v3708 = vrot.slane %v1419, 1
        %v3709 = vrot.slane %v1420, 1
        %v3710 = vrot.slane %v1421, 1
        %v3711 = vrot.slane %v1422, 1
        %v3712 = vrot.slane %v1423, 1
        %v3713 = vrot.slane %v1424, 1
        %v3714 = vrot.slane %v1425, 1
        %v3715 = vrot.slane %v1426, 1
        %v3716 = vrot.slane %v1427, 1
        %v3717 = vrot.slane %v1428, 1
        %v3718 = vrot.slane %v1429, 1
        %v3719 = vrot.slane %v1430, 1
        %v3720 = vrot.slane %v1431, 1
        %v3721 = vrot.slane %v1432, 1
        %v3722 = vrot.slane %v1433, 1
        %v3723 = vrot.slane %v1434, 1
        %v3724 = vrot.slane %v1419, 2
        %v3725 = vrot.slane %v1420, 2
        %v3726 = vrot.slane %v1421, 2
        %v3727 = vrot.slane %v1422, 2
        %v3728 = vrot.slane %v1423, 2
        %v3729 = vrot.slane %v1424, 2
        %v3730 = vrot.slane %v1425, 2
        %v3731 = vrot.slane %v1426, 2
        %v3732 = vrot.slane %v1427, 2
        %v3733 = vrot.slane %v1428, 2
        %v3734 = vrot.slane %v1429, 2
        %v3735 = vrot.slane %v1430, 2
        %v3736 = vrot.slane %v1431, 2
        %v3737 = vrot.slane %v1432, 2
        %v3738 = vrot.slane %v1433, 2
        %v3739 = vrot.slane %v1434, 2
        %v3740 = vrot.slane %v1419, 3
        %v3741 = vrot.slane %v1420, 3
        %v3742 = vrot.slane %v1421, 3
        %v3743 = vrot.slane %v1422, 3
        %v3744 = vrot.slane %v1423, 3
        %v3745 = vrot.slane %v1424, 3
        %v3746 = vrot.slane %v1425, 3
        %v3747 = vrot.slane %v1426, 3
        %v3748 = vrot.slane %v1427, 3
        %v3749 = vrot.slane %v1428, 3
        %v3750 = vrot.slane %v1429, 3
        %v3751 = vrot.slane %v1430, 3
        %v3752 = vrot.slane %v1431, 3
        %v3753 = vrot.slane %v1432, 3
        %v3754 = vrot.slane %v1433, 3
        %v3755 = vrot.slane %v1434, 3
        %v3756 = vrot.slane %v1419, 4
        %v3757 = vrot.slane %v1420, 4
        %v3758 = vrot.slane %v1421, 4
        %v3759 = vrot.slane %v1422, 4
        %v3760 = vrot.slane %v1423, 4
        %v3761 = vrot.slane %v1424, 4
        %v3762 = vrot.slane %v1425, 4
        %v3763 = vrot.slane %v1426, 4
        %v3764 = vrot.slane %v1427, 4
        %v3765 = vrot.slane %v1428, 4
        %v3766 = vrot.slane %v1429, 4
        %v3767 = vrot.slane %v1430, 4
        %v3768 = vrot.slane %v1431, 4
        %v3769 = vrot.slane %v1432, 4
        %v3770 = vrot.slane %v1433, 4
        %v3771 = vrot.slane %v1434, 4
        %v3772 = vrot.slane %v1419, 5
        %v3773 = vrot.slane %v1420, 5
        %v3774 = vrot.slane %v1421, 5
        %v3775 = vrot.slane %v1422, 5
        %v3776 = vrot.slane %v1423, 5
        %v3777 = vrot.slane %v1424, 5
        %v3778 = vrot.slane %v1425, 5
        %v3779 = vrot.slane %v1426, 5
        %v3780 = vrot.slane %v1427, 5
        %v3781 = vrot.slane %v1428, 5
        %v3782 = vrot.slane %v1429, 5
        %v3783 = vrot.slane %v1430, 5
        %v3784 = vrot.slane %v1431, 5
        %v3785 = vrot.slane %v1432, 5
        %v3786 = vrot.slane %v1433, 5
        %v3787 = vrot.slane %v1434, 5
        %v3788 = vrot.slane %v1419, 6
        %v3789 = vrot.slane %v1420, 6
        %v3790 = vrot.slane %v1421, 6
        %v3791 = vrot.slane %v1422, 6
        %v3792 = vrot.slane %v1423, 6
        %v3793 = vrot.slane %v1424, 6
        %v3794 = vrot.slane %v1425, 6
        %v3795 = vrot.slane %v1426, 6
        %v3796 = vrot.slane %v1427, 6
        %v3797 = vrot.slane %v1428, 6
        %v3798 = vrot.slane %v1429, 6
        %v3799 = vrot.slane %v1430, 6
        %v3800 = vrot.slane %v1431, 6
        %v3801 = vrot.slane %v1432, 6
        %v3802 = vrot.slane %v1433, 6
        %v3803 = vrot.slane %v1434, 6
        %v3804 = vrot.slane %v1419, 7
        %v3805 = vrot.slane %v1420, 7
        %v3806 = vrot.slane %v1421, 7
        %v3807 = vrot.slane %v1422, 7
        %v3808 = vrot.slane %v1423, 7
        %v3809 = vrot.slane %v1424, 7
        %v3810 = vrot.slane %v1425, 7
        %v3811 = vrot.slane %v1426, 7
        %v3812 = vrot.slane %v1427, 7
        %v3813 = vrot.slane %v1428, 7
        %v3814 = vrot.slane %v1429, 7
        %v3815 = vrot.slane %v1430, 7
        %v3816 = vrot.slane %v1431, 7
        %v3817 = vrot.slane %v1432, 7
        %v3818 = vrot.slane %v1433, 7
        %v3819 = vrot.slane %v1434, 7
        %v3948 = vmul.f32 %v2802, %v1419
        %v3949 = vmul.f32 %v2809, %v1420
        %v3950 = vmul.f32 %v2816, %v1421
        %v3951 = vmul.f32 %v2823, %v1422
        %v3952 = vmul.f32 %v2830, %v1423
        %v3953 = vmul.f32 %v2837, %v1424
        %v3954 = vmul.f32 %v2844, %v1425
        %v3955 = vmul.f32 %v2851, %v1426
        %v3956 = vmul.f32 %v2858, %v1427
        %v3957 = vmul.f32 %v2865, %v1428
        %v3958 = vmul.f32 %v2872, %v1429
        %v3959 = vmul.f32 %v2879, %v1430
        %v3960 = vmul.f32 %v2886, %v1431
        %v3961 = vmul.f32 %v2893, %v1432
        %v3962 = vmul.f32 %v2900, %v1433
        %v3963 = vmul.f32 %v2907, %v1434
        %v3964 = vmul.f32 %v2914, %v3708
        %v3965 = vmul.f32 %v2921, %v3709
        %v3966 = vmul.f32 %v2928, %v3710
        %v3967 = vmul.f32 %v2935, %v3711
        %v3968 = vmul.f32 %v2942, %v3712
        %v3969 = vmul.f32 %v2949, %v3713
        %v3970 = vmul.f32 %v2956, %v3714
        %v3971 = vmul.f32 %v2963, %v3715
        %v3972 = vmul.f32 %v2970, %v3716
        %v3973 = vmul.f32 %v2977, %v3717
        %v3974 = vmul.f32 %v2984, %v3718
        %v3975 = vmul.f32 %v2991, %v3719
        %v3976 = vmul.f32 %v2998, %v3720
        %v3977 = vmul.f32 %v3005, %v3721
        %v3978 = vmul.f32 %v3012, %v3722
        %v3979 = vmul.f32 %v3019, %v3723
        %v3980 = vmul.f32 %v3026, %v3724
        %v3981 = vmul.f32 %v3033, %v3725
        %v3982 = vmul.f32 %v3040, %v3726
        %v3983 = vmul.f32 %v3047, %v3727
        %v3984 = vmul.f32 %v3054, %v3728
        %v3985 = vmul.f32 %v3061, %v3729
        %v3986 = vmul.f32 %v3068, %v3730
        %v3987 = vmul.f32 %v3075, %v3731
        %v3988 = vmul.f32 %v3082, %v3732
        %v3989 = vmul.f32 %v3089, %v3733
        %v3990 = vmul.f32 %v3096, %v3734
        %v3991 = vmul.f32 %v3103, %v3735
        %v3992 = vmul.f32 %v3110, %v3736
        %v3993 = vmul.f32 %v3117, %v3737
        %v3994 = vmul.f32 %v3124, %v3738
        %v3995 = vmul.f32 %v3131, %v3739
        %v3996 = vmul.f32 %v3138, %v3740
        %v3997 = vmul.f32 %v3145, %v3741
        %v3998 = vmul.f32 %v3152, %v3742
        %v3999 = vmul.f32 %v3159, %v3743
        %v4000 = vmul.f32 %v3166, %v3744
        %v4001 = vmul.f32 %v3173, %v3745
        %v4002 = vmul.f32 %v3180, %v3746
        %v4003 = vmul.f32 %v3187, %v3747
        %v4004 = vmul.f32 %v3194, %v3748
        %v4005 = vmul.f32 %v3201, %v3749
        %v4006 = vmul.f32 %v3208, %v3750
        %v4007 = vmul.f32 %v3215, %v3751
        %v4008 = vmul.f32 %v3222, %v3752
        %v4009 = vmul.f32 %v3229, %v3753
        %v4010 = vmul.f32 %v3236, %v3754
        %v4011 = vmul.f32 %v3243, %v3755
        %v4012 = vmul.f32 %v3250, %v3756
        %v4013 = vmul.f32 %v3257, %v3757
        %v4014 = vmul.f32 %v3264, %v3758
        %v4015 = vmul.f32 %v3271, %v3759
        %v4016 = vmul.f32 %v3278, %v3760
        %v4017 = vmul.f32 %v3285, %v3761
        %v4018 = vmul.f32 %v3292, %v3762
        %v4019 = vmul.f32 %v3299, %v3763
        %v4020 = vmul.f32 %v3306, %v3764
        %v4021 = vmul.f32 %v3313, %v3765
        %v4022 = vmul.f32 %v3320, %v3766
        %v4023 = vmul.f32 %v3327, %v3767
        %v4024 = vmul.f32 %v3334, %v3768
        %v4025 = vmul.f32 %v3341, %v3769
        %v4026 = vmul.f32 %v3348, %v3770
        %v4027 = vmul.f32 %v3355, %v3771
        %v4028 = vmul.f32 %v3362, %v3772
        %v4029 = vmul.f32 %v3369, %v3773
        %v4030 = vmul.f32 %v3376, %v3774
        %v4031 = vmul.f32 %v3383, %v3775
        %v4032 = vmul.f32 %v3390, %v3776
        %v4033 = vmul.f32 %v3397, %v3777
        %v4034 = vmul.f32 %v3404, %v3778
        %v4035 = vmul.f32 %v3411, %v3779
        %v4036 = vmul.f32 %v3418, %v3780
        %v4037 = vmul.f32 %v3425, %v3781
        %v4038 = vmul.f32 %v3432, %v3782
        %v4039 = vmul.f32 %v3439, %v3783
        %v4040 = vmul.f32 %v3446, %v3784
        %v4041 = vmul.f32 %v3453, %v3785
        %v4042 = vmul.f32 %v3460, %v3786
        %v4043 = vmul.f32 %v3467, %v3787
        %v4044 = vmul.f32 %v3474, %v3788
        %v4045 = vmul.f32 %v3481, %v3789
        %v4046 = vmul.f32 %v3488, %v3790
        %v4047 = vmul.f32 %v3495, %v3791
        %v4048 = vmul.f32 %v3502, %v3792
        %v4049 = vmul.f32 %v3509, %v3793
        %v4050 = vmul.f32 %v3516, %v3794
        %v4051 = vmul.f32 %v3523, %v3795
        %v4052 = vmul.f32 %v3530, %v3796
        %v4053 = vmul.f32 %v3537, %v3797
        %v4054 = vmul.f32 %v3544, %v3798
        %v4055 = vmul.f32 %v3551, %v3799
        %v4056 = vmul.f32 %v3558, %v3800
        %v4057 = vmul.f32 %v3565, %v3801
        %v4058 = vmul.f32 %v3572, %v3802
        %v4059 = vmul.f32 %v3579, %v3803
        %v4060 = vmul.f32 %v3586, %v3804
        %v4061 = vmul.f32 %v3593, %v3805
        %v4062 = vmul.f32 %v3600, %v3806
        %v4063 = vmul.f32 %v3607, %v3807
        %v4064 = vmul.f32 %v3614, %v3808
        %v4065 = vmul.f32 %v3621, %v3809
        %v4066 = vmul.f32 %v3628, %v3810
        %v4067 = vmul.f32 %v3635, %v3811
        %v4068 = vmul.f32 %v3642, %v3812
        %v4069 = vmul.f32 %v3649, %v3813
        %v4070 = vmul.f32 %v3656, %v3814
        %v4071 = vmul.f32 %v3663, %v3815
        %v4072 = vmul.f32 %v3670, %v3816
        %v4073 = vmul.f32 %v3677, %v3817
        %v4074 = vmul.f32 %v3684, %v3818
        %v4075 = vmul.f32 %v3691, %v3819
        %v4204 = vrot.slane %v3964, 7
        %vm4205 = vcmask 1041409
        %v4206 = vsel %vm4205, %v4204, %v3948
        %v4207 = vrot.slane %v3980, 6
        %vm4208 = vcmask 1042434
        %v4209 = vsel %vm4208, %v4207, %v4206
        %v4210 = vrot.slane %v3996, 5
        %vm4211 = vcmask 1043459
        %v4212 = vsel %vm4211, %v4210, %v4209
        %v4213 = vrot.slane %v4012, 4
        %vm4214 = vcmask 1044484
        %v4215 = vsel %vm4214, %v4213, %v4212
        %v4216 = vrot.slane %v4028, 3
        %vm4217 = vcmask 1045509
        %v4218 = vsel %vm4217, %v4216, %v4215
        %v4219 = vrot.slane %v4044, 2
        %vm4220 = vcmask 1046534
        %v4221 = vsel %vm4220, %v4219, %v4218
        %v4222 = vrot.slane %v4060, 1
        %vm4223 = vcmask 1047559
        %v4224 = vsel %vm4223, %v4222, %v4221
        %v4225 = vrot.slane %v3965, 7
        %v4226 = vsel %vm4205, %v4225, %v3949
        %v4227 = vrot.slane %v3981, 6
        %v4228 = vsel %vm4208, %v4227, %v4226
        %v4229 = vrot.slane %v3997, 5
        %v4230 = vsel %vm4211, %v4229, %v4228
        %v4231 = vrot.slane %v4013, 4
        %v4232 = vsel %vm4214, %v4231, %v4230
        %v4233 = vrot.slane %v4029, 3
        %v4234 = vsel %vm4217, %v4233, %v4232
        %v4235 = vrot.slane %v4045, 2
        %v4236 = vsel %vm4220, %v4235, %v4234
        %v4237 = vrot.slane %v4061, 1
        %v4238 = vsel %vm4223, %v4237, %v4236
        %v4239 = vrot.slane %v3966, 7
        %v4240 = vsel %vm4205, %v4239, %v3950
        %v4241 = vrot.slane %v3982, 6
        %v4242 = vsel %vm4208, %v4241, %v4240
        %v4243 = vrot.slane %v3998, 5
        %v4244 = vsel %vm4211, %v4243, %v4242
        %v4245 = vrot.slane %v4014, 4
        %v4246 = vsel %vm4214, %v4245, %v4244
        %v4247 = vrot.slane %v4030, 3
        %v4248 = vsel %vm4217, %v4247, %v4246
        %v4249 = vrot.slane %v4046, 2
        %v4250 = vsel %vm4220, %v4249, %v4248
        %v4251 = vrot.slane %v4062, 1
        %v4252 = vsel %vm4223, %v4251, %v4250
        %v4253 = vrot.slane %v3967, 7
        %v4254 = vsel %vm4205, %v4253, %v3951
        %v4255 = vrot.slane %v3983, 6
        %v4256 = vsel %vm4208, %v4255, %v4254
        %v4257 = vrot.slane %v3999, 5
        %v4258 = vsel %vm4211, %v4257, %v4256
        %v4259 = vrot.slane %v4015, 4
        %v4260 = vsel %vm4214, %v4259, %v4258
        %v4261 = vrot.slane %v4031, 3
        %v4262 = vsel %vm4217, %v4261, %v4260
        %v4263 = vrot.slane %v4047, 2
        %v4264 = vsel %vm4220, %v4263, %v4262
        %v4265 = vrot.slane %v4063, 1
        %v4266 = vsel %vm4223, %v4265, %v4264
        %v4267 = vrot.slane %v3968, 7
        %v4268 = vsel %vm4205, %v4267, %v3952
        %v4269 = vrot.slane %v3984, 6
        %v4270 = vsel %vm4208, %v4269, %v4268
        %v4271 = vrot.slane %v4000, 5
        %v4272 = vsel %vm4211, %v4271, %v4270
        %v4273 = vrot.slane %v4016, 4
        %v4274 = vsel %vm4214, %v4273, %v4272
        %v4275 = vrot.slane %v4032, 3
        %v4276 = vsel %vm4217, %v4275, %v4274
        %v4277 = vrot.slane %v4048, 2
        %v4278 = vsel %vm4220, %v4277, %v4276
        %v4279 = vrot.slane %v4064, 1
        %v4280 = vsel %vm4223, %v4279, %v4278
        %v4281 = vrot.slane %v3969, 7
        %v4282 = vsel %vm4205, %v4281, %v3953
        %v4283 = vrot.slane %v3985, 6
        %v4284 = vsel %vm4208, %v4283, %v4282
        %v4285 = vrot.slane %v4001, 5
        %v4286 = vsel %vm4211, %v4285, %v4284
        %v4287 = vrot.slane %v4017, 4
        %v4288 = vsel %vm4214, %v4287, %v4286
        %v4289 = vrot.slane %v4033, 3
        %v4290 = vsel %vm4217, %v4289, %v4288
        %v4291 = vrot.slane %v4049, 2
        %v4292 = vsel %vm4220, %v4291, %v4290
        %v4293 = vrot.slane %v4065, 1
        %v4294 = vsel %vm4223, %v4293, %v4292
        %v4295 = vrot.slane %v3970, 7
        %v4296 = vsel %vm4205, %v4295, %v3954
        %v4297 = vrot.slane %v3986, 6
        %v4298 = vsel %vm4208, %v4297, %v4296
        %v4299 = vrot.slane %v4002, 5
        %v4300 = vsel %vm4211, %v4299, %v4298
        %v4301 = vrot.slane %v4018, 4
        %v4302 = vsel %vm4214, %v4301, %v4300
        %v4303 = vrot.slane %v4034, 3
        %v4304 = vsel %vm4217, %v4303, %v4302
        %v4305 = vrot.slane %v4050, 2
        %v4306 = vsel %vm4220, %v4305, %v4304
        %v4307 = vrot.slane %v4066, 1
        %v4308 = vsel %vm4223, %v4307, %v4306
        %v4309 = vrot.slane %v3971, 7
        %v4310 = vsel %vm4205, %v4309, %v3955
        %v4311 = vrot.slane %v3987, 6
        %v4312 = vsel %vm4208, %v4311, %v4310
        %v4313 = vrot.slane %v4003, 5
        %v4314 = vsel %vm4211, %v4313, %v4312
        %v4315 = vrot.slane %v4019, 4
        %v4316 = vsel %vm4214, %v4315, %v4314
        %v4317 = vrot.slane %v4035, 3
        %v4318 = vsel %vm4217, %v4317, %v4316
        %v4319 = vrot.slane %v4051, 2
        %v4320 = vsel %vm4220, %v4319, %v4318
        %v4321 = vrot.slane %v4067, 1
        %v4322 = vsel %vm4223, %v4321, %v4320
        %v4323 = vrot.slane %v3972, 7
        %v4324 = vsel %vm4205, %v4323, %v3956
        %v4325 = vrot.slane %v3988, 6
        %v4326 = vsel %vm4208, %v4325, %v4324
        %v4327 = vrot.slane %v4004, 5
        %v4328 = vsel %vm4211, %v4327, %v4326
        %v4329 = vrot.slane %v4020, 4
        %v4330 = vsel %vm4214, %v4329, %v4328
        %v4331 = vrot.slane %v4036, 3
        %v4332 = vsel %vm4217, %v4331, %v4330
        %v4333 = vrot.slane %v4052, 2
        %v4334 = vsel %vm4220, %v4333, %v4332
        %v4335 = vrot.slane %v4068, 1
        %v4336 = vsel %vm4223, %v4335, %v4334
        %v4337 = vrot.slane %v3973, 7
        %v4338 = vsel %vm4205, %v4337, %v3957
        %v4339 = vrot.slane %v3989, 6
        %v4340 = vsel %vm4208, %v4339, %v4338
        %v4341 = vrot.slane %v4005, 5
        %v4342 = vsel %vm4211, %v4341, %v4340
        %v4343 = vrot.slane %v4021, 4
        %v4344 = vsel %vm4214, %v4343, %v4342
        %v4345 = vrot.slane %v4037, 3
        %v4346 = vsel %vm4217, %v4345, %v4344
        %v4347 = vrot.slane %v4053, 2
        %v4348 = vsel %vm4220, %v4347, %v4346
        %v4349 = vrot.slane %v4069, 1
        %v4350 = vsel %vm4223, %v4349, %v4348
        %v4351 = vrot.slane %v3974, 7
        %v4352 = vsel %vm4205, %v4351, %v3958
        %v4353 = vrot.slane %v3990, 6
        %v4354 = vsel %vm4208, %v4353, %v4352
        %v4355 = vrot.slane %v4006, 5
        %v4356 = vsel %vm4211, %v4355, %v4354
        %v4357 = vrot.slane %v4022, 4
        %v4358 = vsel %vm4214, %v4357, %v4356
        %v4359 = vrot.slane %v4038, 3
        %v4360 = vsel %vm4217, %v4359, %v4358
        %v4361 = vrot.slane %v4054, 2
        %v4362 = vsel %vm4220, %v4361, %v4360
        %v4363 = vrot.slane %v4070, 1
        %v4364 = vsel %vm4223, %v4363, %v4362
        %v4365 = vrot.slane %v3975, 7
        %v4366 = vsel %vm4205, %v4365, %v3959
        %v4367 = vrot.slane %v3991, 6
        %v4368 = vsel %vm4208, %v4367, %v4366
        %v4369 = vrot.slane %v4007, 5
        %v4370 = vsel %vm4211, %v4369, %v4368
        %v4371 = vrot.slane %v4023, 4
        %v4372 = vsel %vm4214, %v4371, %v4370
        %v4373 = vrot.slane %v4039, 3
        %v4374 = vsel %vm4217, %v4373, %v4372
        %v4375 = vrot.slane %v4055, 2
        %v4376 = vsel %vm4220, %v4375, %v4374
        %v4377 = vrot.slane %v4071, 1
        %v4378 = vsel %vm4223, %v4377, %v4376
        %v4379 = vrot.slane %v3976, 7
        %v4380 = vsel %vm4205, %v4379, %v3960
        %v4381 = vrot.slane %v3992, 6
        %v4382 = vsel %vm4208, %v4381, %v4380
        %v4383 = vrot.slane %v4008, 5
        %v4384 = vsel %vm4211, %v4383, %v4382
        %v4385 = vrot.slane %v4024, 4
        %v4386 = vsel %vm4214, %v4385, %v4384
        %v4387 = vrot.slane %v4040, 3
        %v4388 = vsel %vm4217, %v4387, %v4386
        %v4389 = vrot.slane %v4056, 2
        %v4390 = vsel %vm4220, %v4389, %v4388
        %v4391 = vrot.slane %v4072, 1
        %v4392 = vsel %vm4223, %v4391, %v4390
        %v4393 = vrot.slane %v3977, 7
        %v4394 = vsel %vm4205, %v4393, %v3961
        %v4395 = vrot.slane %v3993, 6
        %v4396 = vsel %vm4208, %v4395, %v4394
        %v4397 = vrot.slane %v4009, 5
        %v4398 = vsel %vm4211, %v4397, %v4396
        %v4399 = vrot.slane %v4025, 4
        %v4400 = vsel %vm4214, %v4399, %v4398
        %v4401 = vrot.slane %v4041, 3
        %v4402 = vsel %vm4217, %v4401, %v4400
        %v4403 = vrot.slane %v4057, 2
        %v4404 = vsel %vm4220, %v4403, %v4402
        %v4405 = vrot.slane %v4073, 1
        %v4406 = vsel %vm4223, %v4405, %v4404
        %v4407 = vrot.slane %v3978, 7
        %v4408 = vsel %vm4205, %v4407, %v3962
        %v4409 = vrot.slane %v3994, 6
        %v4410 = vsel %vm4208, %v4409, %v4408
        %v4411 = vrot.slane %v4010, 5
        %v4412 = vsel %vm4211, %v4411, %v4410
        %v4413 = vrot.slane %v4026, 4
        %v4414 = vsel %vm4214, %v4413, %v4412
        %v4415 = vrot.slane %v4042, 3
        %v4416 = vsel %vm4217, %v4415, %v4414
        %v4417 = vrot.slane %v4058, 2
        %v4418 = vsel %vm4220, %v4417, %v4416
        %v4419 = vrot.slane %v4074, 1
        %v4420 = vsel %vm4223, %v4419, %v4418
        %v4421 = vrot.slane %v3979, 7
        %v4422 = vsel %vm4205, %v4421, %v3963
        %v4423 = vrot.slane %v3995, 6
        %v4424 = vsel %vm4208, %v4423, %v4422
        %v4425 = vrot.slane %v4011, 5
        %v4426 = vsel %vm4211, %v4425, %v4424
        %v4427 = vrot.slane %v4027, 4
        %v4428 = vsel %vm4214, %v4427, %v4426
        %v4429 = vrot.slane %v4043, 3
        %v4430 = vsel %vm4217, %v4429, %v4428
        %v4431 = vrot.slane %v4059, 2
        %v4432 = vsel %vm4220, %v4431, %v4430
        %v4433 = vrot.slane %v4075, 1
        %v4434 = vsel %vm4223, %v4433, %v4432
        %v4451 = vrot.slane %v4224, 4
        %v4452 = vadd.f32 %v4224, %v4451
        %v4453 = vrot.slane %v4452, 2
        %v4454 = vadd.f32 %v4452, %v4453
        %v4455 = vrot.slane %v4454, 1
        %v4456 = vadd.f32 %v4454, %v4455
        %v4457 = vrot.slane %v4238, 4
        %v4458 = vadd.f32 %v4238, %v4457
        %v4459 = vrot.slane %v4458, 2
        %v4460 = vadd.f32 %v4458, %v4459
        %v4461 = vrot.slane %v4460, 1
        %v4462 = vadd.f32 %v4460, %v4461
        %v4463 = vrot.slane %v4252, 4
        %v4464 = vadd.f32 %v4252, %v4463
        %v4465 = vrot.slane %v4464, 2
        %v4466 = vadd.f32 %v4464, %v4465
        %v4467 = vrot.slane %v4466, 1
        %v4468 = vadd.f32 %v4466, %v4467
        %v4469 = vrot.slane %v4266, 4
        %v4470 = vadd.f32 %v4266, %v4469
        %v4471 = vrot.slane %v4470, 2
        %v4472 = vadd.f32 %v4470, %v4471
        %v4473 = vrot.slane %v4472, 1
        %v4474 = vadd.f32 %v4472, %v4473
        %v4475 = vrot.slane %v4280, 4
        %v4476 = vadd.f32 %v4280, %v4475
        %v4477 = vrot.slane %v4476, 2
        %v4478 = vadd.f32 %v4476, %v4477
        %v4479 = vrot.slane %v4478, 1
        %v4480 = vadd.f32 %v4478, %v4479
        %v4481 = vrot.slane %v4294, 4
        %v4482 = vadd.f32 %v4294, %v4481
        %v4483 = vrot.slane %v4482, 2
        %v4484 = vadd.f32 %v4482, %v4483
        %v4485 = vrot.slane %v4484, 1
        %v4486 = vadd.f32 %v4484, %v4485
        %v4487 = vrot.slane %v4308, 4
        %v4488 = vadd.f32 %v4308, %v4487
        %v4489 = vrot.slane %v4488, 2
        %v4490 = vadd.f32 %v4488, %v4489
        %v4491 = vrot.slane %v4490, 1
        %v4492 = vadd.f32 %v4490, %v4491
        %v4493 = vrot.slane %v4322, 4
        %v4494 = vadd.f32 %v4322, %v4493
        %v4495 = vrot.slane %v4494, 2
        %v4496 = vadd.f32 %v4494, %v4495
        %v4497 = vrot.slane %v4496, 1
        %v4498 = vadd.f32 %v4496, %v4497
        %v4499 = vrot.slane %v4336, 4
        %v4500 = vadd.f32 %v4336, %v4499
        %v4501 = vrot.slane %v4500, 2
        %v4502 = vadd.f32 %v4500, %v4501
        %v4503 = vrot.slane %v4502, 1
        %v4504 = vadd.f32 %v4502, %v4503
        %v4505 = vrot.slane %v4350, 4
        %v4506 = vadd.f32 %v4350, %v4505
        %v4507 = vrot.slane %v4506, 2
        %v4508 = vadd.f32 %v4506, %v4507
        %v4509 = vrot.slane %v4508, 1
        %v4510 = vadd.f32 %v4508, %v4509
        %v4511 = vrot.slane %v4364, 4
        %v4512 = vadd.f32 %v4364, %v4511
        %v4513 = vrot.slane %v4512, 2
        %v4514 = vadd.f32 %v4512, %v4513
        %v4515 = vrot.slane %v4514, 1
        %v4516 = vadd.f32 %v4514, %v4515
        %v4517 = vrot.slane %v4378, 4
        %v4518 = vadd.f32 %v4378, %v4517
        %v4519 = vrot.slane %v4518, 2
        %v4520 = vadd.f32 %v4518, %v4519
        %v4521 = vrot.slane %v4520, 1
        %v4522 = vadd.f32 %v4520, %v4521
        %v4523 = vrot.slane %v4392, 4
        %v4524 = vadd.f32 %v4392, %v4523
        %v4525 = vrot.slane %v4524, 2
        %v4526 = vadd.f32 %v4524, %v4525
        %v4527 = vrot.slane %v4526, 1
        %v4528 = vadd.f32 %v4526, %v4527
        %v4529 = vrot.slane %v4406, 4
        %v4530 = vadd.f32 %v4406, %v4529
        %v4531 = vrot.slane %v4530, 2
        %v4532 = vadd.f32 %v4530, %v4531
        %v4533 = vrot.slane %v4532, 1
        %v4534 = vadd.f32 %v4532, %v4533
        %v4535 = vrot.slane %v4420, 4
        %v4536 = vadd.f32 %v4420, %v4535
        %v4537 = vrot.slane %v4536, 2
        %v4538 = vadd.f32 %v4536, %v4537
        %v4539 = vrot.slane %v4538, 1
        %v4540 = vadd.f32 %v4538, %v4539
        %v4541 = vrot.slane %v4434, 4
        %v4542 = vadd.f32 %v4434, %v4541
        %v4543 = vrot.slane %v4542, 2
        %v4544 = vadd.f32 %v4542, %v4543
        %v4545 = vrot.slane %v4544, 1
        %v4546 = vadd.f32 %v4544, %v4545
        %s4547 = sshra.s32 %s25, 2
        %s4548 = sand.u32 %s25, 3
        %s4549 = sshra.s32 %s25, 2
        %s4550 = sand.u32 %s25, 3
        %s4551 = smul.u32 %s4547, 16
        %s4552 = smul.u32 %s4551, 4
        %s4553 = sadd.s32 %s4552, %s4550
        %s4554 = scalar_lea.vmem [#allocation2], %s4553
        %v4555 = vld [vmem:[%s4554] ss:$4 sm:$0xff]
        %s4556 = sadd.s32 %s4551, 8
        %s4557 = smul.u32 %s4556, 4
        %s4558 = sadd.s32 %s4557, %s4550
        %s4559 = scalar_lea.vmem [#allocation2], %s4558
        %v4560 = vld [vmem:[%s4559] ss:$4 sm:$0xff]
        %v4577 = vrot.slane %v4462, 7
        %v4578 = vrot.slane %v4468, 6
        %v4579 = vrot.slane %v4474, 5
        %v4580 = vrot.slane %v4480, 4
        %v4581 = vrot.slane %v4486, 3
        %v4582 = vrot.slane %v4492, 2
        %v4583 = vrot.slane %v4498, 1
        %v4584 = vrot.slane %v4510, 7
        %v4585 = vrot.slane %v4516, 6
        %v4586 = vrot.slane %v4522, 5
        %v4587 = vrot.slane %v4528, 4
        %v4588 = vrot.slane %v4534, 3
        %v4589 = vrot.slane %v4540, 2
        %v4590 = vrot.slane %v4546, 1
        %vm4591 = vcmask 1040384
        %v4592 = vsel %vm4591, %v4456, %v4577
        %v4593 = vsel %vm4208, %v4578, %v4579
        %vm4594 = vcmask 1041408
        %v4595 = vsel %vm4594, %v4592, %v4593
        %v4596 = vsel %vm4214, %v4580, %v4581
        %v4597 = vsel %vm4220, %v4582, %v4583
        %vm4598 = vcmask 1045508
        %v4599 = vsel %vm4598, %v4596, %v4597
        %vm4600 = vcmask 1043456
        %v4601 = vsel %vm4600, %v4595, %v4599
        %v4602 = vsel %vm4591, %v4504, %v4584
        %v4603 = vsel %vm4208, %v4585, %v4586
        %v4604 = vsel %vm4594, %v4602, %v4603
        %v4605 = vsel %vm4214, %v4587, %v4588
        %v4606 = vsel %vm4220, %v4589, %v4590
        %v4607 = vsel %vm4598, %v4605, %v4606
        %v4608 = vsel %vm4600, %v4604, %v4607
        %v4611 = vadd.f32 %v4555, %v4601
        %v4612 = vadd.f32 %v4560, %v4608
        %s4613 = scalar_lea.vmem [#allocation3], %s4553
        %v4614 = vld [vmem:[%s4613] ss:$4 sm:$0xff]
        %s4615 = scalar_lea.vmem [#allocation3], %s4558
        %v4616 = vld [vmem:[%s4615] ss:$4 sm:$0xff]
        %vm4617 = vcmp.ne.f32.partialorder %v4456, 0.0
        %vm4618 = vcmp.ne.f32.partialorder %v4462, 0.0
        %vm4619 = vcmp.ne.f32.partialorder %v4468, 0.0
        %vm4620 = vcmp.ne.f32.partialorder %v4474, 0.0
        %vm4621 = vcmp.ne.f32.partialorder %v4480, 0.0
        %vm4622 = vcmp.ne.f32.partialorder %v4486, 0.0
        %vm4623 = vcmp.ne.f32.partialorder %v4492, 0.0
        %vm4624 = vcmp.ne.f32.partialorder %v4498, 0.0
        %vm4625 = vcmp.ne.f32.partialorder %v4504, 0.0
        %vm4626 = vcmp.ne.f32.partialorder %v4510, 0.0
        %vm4627 = vcmp.ne.f32.partialorder %v4516, 0.0
        %vm4628 = vcmp.ne.f32.partialorder %v4522, 0.0
        %vm4629 = vcmp.ne.f32.partialorder %v4528, 0.0
        %vm4630 = vcmp.ne.f32.partialorder %v4534, 0.0
        %vm4631 = vcmp.ne.f32.partialorder %v4540, 0.0
        %vm4632 = vcmp.ne.f32.partialorder %v4546, 0.0
        %v4633 = vsel %vm4617, 1, 0
        %v4634 = vsel %vm4618, 1, 0
        %v4635 = vsel %vm4619, 1, 0
        %v4636 = vsel %vm4620, 1, 0
        %v4637 = vsel %vm4621, 1, 0
        %v4638 = vsel %vm4622, 1, 0
        %v4639 = vsel %vm4623, 1, 0
        %v4640 = vsel %vm4624, 1, 0
        %v4641 = vsel %vm4625, 1, 0
        %v4642 = vsel %vm4626, 1, 0
        %v4643 = vsel %vm4627, 1, 0
        %v4644 = vsel %vm4628, 1, 0
        %v4645 = vsel %vm4629, 1, 0
        %v4646 = vsel %vm4630, 1, 0
        %v4647 = vsel %vm4631, 1, 0
        %v4648 = vsel %vm4632, 1, 0
        %v4649 = vcvt.s32.f32 %v4633
        %v4650 = vcvt.s32.f32 %v4634
        %v4651 = vcvt.s32.f32 %v4635
        %v4652 = vcvt.s32.f32 %v4636
        %v4653 = vcvt.s32.f32 %v4637
        %v4654 = vcvt.s32.f32 %v4638
        %v4655 = vcvt.s32.f32 %v4639
        %v4656 = vcvt.s32.f32 %v4640
        %v4657 = vcvt.s32.f32 %v4641
        %v4658 = vcvt.s32.f32 %v4642
        %v4659 = vcvt.s32.f32 %v4643
        %v4660 = vcvt.s32.f32 %v4644
        %v4661 = vcvt.s32.f32 %v4645
        %v4662 = vcvt.s32.f32 %v4646
        %v4663 = vcvt.s32.f32 %v4647
        %v4664 = vcvt.s32.f32 %v4648
        %v4681 = vrot.slane %v4650, 7
        %v4682 = vrot.slane %v4651, 6
        %v4683 = vrot.slane %v4652, 5
        %v4684 = vrot.slane %v4653, 4
        %v4685 = vrot.slane %v4654, 3
        %v4686 = vrot.slane %v4655, 2
        %v4687 = vrot.slane %v4656, 1
        %v4688 = vrot.slane %v4658, 7
        %v4689 = vrot.slane %v4659, 6
        %v4690 = vrot.slane %v4660, 5
        %v4691 = vrot.slane %v4661, 4
        %v4692 = vrot.slane %v4662, 3
        %v4693 = vrot.slane %v4663, 2
        %v4694 = vrot.slane %v4664, 1
        %v4695 = vsel %vm4591, %v4649, %v4681
        %v4696 = vsel %vm4208, %v4682, %v4683
        %v4697 = vsel %vm4594, %v4695, %v4696
        %v4698 = vsel %vm4214, %v4684, %v4685
        %v4699 = vsel %vm4220, %v4686, %v4687
        %v4700 = vsel %vm4598, %v4698, %v4699
        %v4701 = vsel %vm4600, %v4697, %v4700
        %v4702 = vsel %vm4591, %v4657, %v4688
        %v4703 = vsel %vm4208, %v4689, %v4690
        %v4704 = vsel %vm4594, %v4702, %v4703
        %v4705 = vsel %vm4214, %v4691, %v4692
        %v4706 = vsel %vm4220, %v4693, %v4694
        %v4707 = vsel %vm4598, %v4705, %v4706
        %v4708 = vsel %vm4600, %v4704, %v4707
        %v4711 = vadd.f32 %v4614, %v4701
        %v4712 = vadd.f32 %v4616, %v4708
        %4713 = vst [vmem:[%s4554] ss:$4 sm:$0xff] %v4611
        %4714 = vst [vmem:[%s4559] ss:$4 sm:$0xff] %v4612
        %4715 = vst [vmem:[%s4613] ss:$4 sm:$0xff] %v4711
        %4716 = vst [vmem:[%s4615] ss:$4 sm:$0xff] %v4712
        %p4717 = scmp.eq.s32.totalorder %s24, 1
        %p4718 = scmp.ne.s32.totalorder %s24, 1
        // Predicated region
        $region41: #{tpu_custom_call.1} parent=31 // pred_check
          %p4719 = pneg %p4718
        $region42: #{tpu_custom_call.1} parent=31 // pred_check_branch
          %4721 = sbr.rel (%p4719) target = $region44
        $region43: #{tpu_custom_call.1} parent=31 // pred_region
          %4722 = vst [vmem:[%s224] sm:$0xff] %v4611
          %4723 = vst [vmem:[%s224 + $0x8] sm:$0xff] %v4612
        $region44: #{tpu_custom_call.1} parent=31 // pred_fallthru
          _
        // Predicated region
        $region45: #{tpu_custom_call.1} parent=31 // pred_check
          %p4724 = pneg %p4717
        $region46: #{tpu_custom_call.1} parent=31 // pred_check_branch
          %4726 = sbr.rel (%p4724) target = $region48
        $region47: #{tpu_custom_call.1} parent=31 // pred_region
          %vm4727 = vcmp.gt.f32.partialorder %v4711, 0.0
          %vm4728 = vcmp.gt.f32.partialorder %v4712, 0.0
          %v4729 = vmax.f32 %v4711, 1.0
          %v4730 = vmax.f32 %v4712, 1.0
          %v4731 = vrcp.pop %v4729
          %v4732 = vmul.f32 %v4729, %v4731
          %v4733 = vsub.f32 1.0, %v4732
          %v4734 = vmul.f32 %v4731, %v4733
          %v4735 = vadd.f32 %v4731, %v4734
          %vm4736 = vweird.f32 %v4729
          %vm4737 = vweird.f32 %v4731
          %vm4738 = vmor %vm4736, %vm4737
          %v4739 = vsel %vm4738, %v4731, %v4735
          %v4740 = vand.u32 2147483647, %v4729
          %vm4741 = vcmp.eq.f32.partialorder %v4740, 8.507059e+37
          %v4742 = vand.u32 %v4729, 2147483648
          %v4743 = vor.u32 1.1754944e-38, %v4742
          %v4744 = vsel %vm4741, %v4743, %v4739
          %v4745 = vmul.f32 %v4611, %v4744
          %v4746 = vrcp.pop %v4730
          %v4747 = vmul.f32 %v4730, %v4746
          %v4748 = vsub.f32 1.0, %v4747
          %v4749 = vmul.f32 %v4746, %v4748
          %v4750 = vadd.f32 %v4746, %v4749
          %vm4751 = vweird.f32 %v4730
          %vm4752 = vweird.f32 %v4746
          %vm4753 = vmor %vm4751, %vm4752
          %v4754 = vsel %vm4753, %v4746, %v4750
          %v4755 = vand.u32 2147483647, %v4730
          %vm4756 = vcmp.eq.f32.partialorder %v4755, 8.507059e+37
          %v4757 = vand.u32 %v4730, 2147483648
          %v4758 = vor.u32 1.1754944e-38, %v4757
          %v4759 = vsel %vm4756, %v4758, %v4754
          %v4760 = vmul.f32 %v4612, %v4759
          %v4761 = vsel %vm4727, %v4745, 0.0
          %v4762 = vsel %vm4728, %v4760, 0.0
          %vm4763 = vcmp.ne.f32.partialorder %v4761, %v4761
          %vm4764 = vcmp.ne.f32.partialorder %v4762, %v4762
          %v4765 = vsel %vm4763, 0.0, %v4761
          %v4766 = vsel %vm4764, 0.0, %v4762
          %vm4767 = vcmp.eq.f32.partialorder %v4765, inf
          %vm4768 = vcmp.eq.f32.partialorder %v4766, inf
          %v4769 = vsel %vm4767, 3.4028235e+38, %v4765
          %v4770 = vsel %vm4768, 3.4028235e+38, %v4766
          %vm4771 = vcmp.eq.f32.partialorder %v4769, -inf
          %vm4772 = vcmp.eq.f32.partialorder %v4770, -inf
          %v4773 = vsel %vm4771, -3.4028235e+38, %v4769
          %v4774 = vsel %vm4772, -3.4028235e+38, %v4770
          %4775 = vst [vmem:[%s224] sm:$0xff] %v4773
          %4776 = vst [vmem:[%s224 + $0x8] sm:$0xff] %v4774
        $region48: #{tpu_custom_call.1} parent=31 // pred_fallthru
          _
        %s4777 = sand.u32 %s122, 1
        %s4778 = scalar_lea.sflag [#allocation5], %s4777
        %s4779 = sand.u32 %s122, 1
        %s4780 = smul.addr %s4779, 16
        %s4781 = scalar_lea.vmem [#allocation7], %s4780
        // Predicated region
        $region49: #{tpu_custom_call.1} parent=31 // pred_check
          %p4782 = pneg %p132
        $region50: #{tpu_custom_call.1} parent=31 // pred_check_branch
          %4784 = sbr.rel (%p4782) target = $region52
        $region51: #{tpu_custom_call.1} parent=31 // pred_region
          %s4785 = smul.u32 16, %s25
          %4787 = vsyncadd %s4778, 0
          %s4788 = smul.addr %s23, 64
          %s4789 = sadd.s32 %s4785, %s4788
          %s4790 = scalar_lea.hbm %s3, %s4789
          %s4792 = sshll.u32 %s4781, 4
          %s4793 = int_to_ptr.vmem [resolvable:$true] %s4792
          %s4794 = sshll.u32 %s4790, 4
          %s4795 = int_to_ptr.hbm [resolvable:$true] %s4794
          %4797 = dma.vmem_to_hbm [thread:$0]  %s4793, 256, %s4795, %s4778
        $region52: #{tpu_custom_call.1} parent=31 // pred_fallthru
          _
      $region32: #{tpu_custom_call.1} parent=5 // pred_fallthru
        _
      %p4798 = scmp.le.s32.totalorder 2, %s13
      // Predicated region
      $region53: #{tpu_custom_call.1} parent=5 // pred_check
        %p4799 = pneg %p4798
      $region54: #{tpu_custom_call.1} parent=5 // pred_check_branch
        %4801 = sbr.rel (%p4799) target = $region56
      $region55: #{tpu_custom_call.1} parent=5 // pred_region
        %s4802 = ssub.s32 %s13, 2
        // Predicated region
        $region57: #{tpu_custom_call.1} parent=55 // pred_check
          %p4803 = pneg %p138
        $region58: #{tpu_custom_call.1} parent=55 // pred_check_branch
          %4805 = sbr.rel (%p4803) target = $region60
        $region59: #{tpu_custom_call.1} parent=55 // pred_region
          %s4806 = sand.u32 %s123, 1
          %s4807 = scalar_lea.sflag [#allocation5], %s4806
          %s4808 = sand.u32 %s123, 1
          %s4809 = smul.addr %s4808, 16
          %s4810 = scalar_lea.vmem [#allocation7], %s4809
          %4812 = dma.done %s4807, 256
        $region60: #{tpu_custom_call.1} parent=55 // pred_fallthru
          _
      $region56: #{tpu_custom_call.1} parent=5 // pred_fallthru
        _
    $region6: #{tpu_custom_call.1} parent=1 // loop_footer
      %s17 = sadd.s32 1, %s13
    $region7: #{tpu_custom_call.1} parent=1 // loop_footer_branch
      %12 = sbr.rel target = $region3
    $region8: #{tpu_custom_call.1} parent=1 // loop_exit
      _
    %4813 = vsyncpa [#allocation5], 1
    %s4814 = scalar_lea.sflag [#allocation5], 1
    %4815 = vsyncpa %s4814, 1
    %4816 = vsyncpa [#allocation6], 1
    %s4817 = scalar_lea.sflag [#allocation6], 1
    %4818 = vsyncpa %s4817, 1

</llo_original>
